<compile_context>
chip_gen: v7x
topology: tpu7x:2x2x1
jax: 0.10.0
libtpu: 0.0.40
codegen_flags: <defaults>
</compile_context>

<pallas_src>
import functools

import jax
import jax.numpy as jnp
from jax import lax
from jax.experimental import pallas as pl
from jax.experimental.pallas import tpu as pltpu


HID = 500           # hidden width from the PyTorch module
HPAD = 512          # hidden width padded to a multiple of 128 (lane-dense)
NUM_HIDDEN = 22     # number of Conv2d(500, 500, 1) + ReLU layers in the spec
NOUT_PAD = 128      # lane-dense pad for the final output channels


def _round_up(x, m):
    return (x + m - 1) // m * m


def _pick_tm(m_rows):
    """Largest row tile that still leaves >= 2 tiles (v7x megacore)."""
    for tm in (1024, 512, 256):
        if m_rows >= 2 * tm:
            return tm
    return 256


# ----------------------------- Pallas kernel -----------------------------

def _fused_mlp_kernel(x_ref, w0_ref, wh_ref, wl_ref, b0_ref, bh_ref, bl_ref,
                      o_ref, act_ref):
    """Entire 24-layer per-pixel MLP for one row tile.

    x_ref:   (TM, CIN_PAD)            bf16  padded input pixels
    w0_ref:  (CIN_PAD, HPAD)          bf16  first-layer weight  (VMEM-resident)
    wh_ref:  (NUM_HIDDEN, HPAD, HPAD) bf16  hidden weights      (VMEM-resident)
    wl_ref:  (HPAD, NOUT_PAD)         bf16  last-layer weight   (VMEM-resident)
    b0_ref:  (1, HPAD)                f32
    bh_ref:  (NUM_HIDDEN, 1, HPAD)    f32
    bl_ref:  (1, NOUT_PAD)            f32
    o_ref:   (TM, NOUT_PAD)           f32   output block (lane-dense store)
    act_ref: (TM, HPAD)               bf16  activations carried across layers
    """
    # Layer 0: (TM, CIN_PAD) @ (CIN_PAD, HPAD) on the MXU, f32 accumulate.
    h = jnp.dot(x_ref[...], w0_ref[...], preferred_element_type=jnp.float32)
    act_ref[...] = jnp.maximum(h + b0_ref[...], 0.0).astype(jnp.bfloat16)

    # 22 hidden layers; weights indexed out of the resident VMEM stack.
    def layer(l, carry):
        hh = jnp.dot(act_ref[...], wh_ref[l],
                     preferred_element_type=jnp.float32)
        act_ref[...] = jnp.maximum(hh + bh_ref[l], 0.0).astype(jnp.bfloat16)
        return carry

    lax.fori_loop(0, NUM_HIDDEN, layer, 0)

    # Last layer: (TM, HPAD) @ (HPAD, NOUT_PAD), no ReLU.
    h = jnp.dot(act_ref[...], wl_ref[...], preferred_element_type=jnp.float32)
    o_ref[...] = h + bl_ref[...]


# ----------------------------- parameters -----------------------------

def init_fully_connected7_params(key, num_in, num_out=3, num_hidden=NUM_HIDDEN,
                                 scale=0.05):
    """Random params packed directly into the padded device layout.

    Zero padding everywhere keeps padded lanes mathematically inert.
    """
    cin_pad = _round_up(num_in, 128)
    keys = jax.random.split(key, num_hidden + 2)

    def make_layer(k, cin, cout):
        kw, kb = jax.random.split(k)
        w = jax.random.normal(kw, (cin, cout), jnp.float32) * scale
        b = jax.random.normal(kb, (cout,), jnp.float32) * scale
        return w, b

    # First layer: num_in -> HID, padded to (cin_pad, HPAD).
    w, b = make_layer(keys[0], num_in, HID)
    W0 = jnp.zeros((cin_pad, HPAD), jnp.float32).at[:num_in, :HID].set(w)
    B0 = jnp.zeros((1, HPAD), jnp.float32).at[0, :HID].set(b)

    # Hidden layers: HID -> HID, padded to (HPAD, HPAD).
    Wh = jnp.zeros((num_hidden, HPAD, HPAD), jnp.float32)
    Bh = jnp.zeros((num_hidden, 1, HPAD), jnp.float32)
    for i in range(num_hidden):
        w, b = make_layer(keys[1 + i], HID, HID)
        Wh = Wh.at[i, :HID, :HID].set(w)
        Bh = Bh.at[i, 0, :HID].set(b)

    # Last layer: HID -> num_out, padded to (HPAD, NOUT_PAD).
    w, b = make_layer(keys[-1], HID, num_out)
    Wl = jnp.zeros((HPAD, NOUT_PAD), jnp.float32).at[:HID, :num_out].set(w)
    Bl = jnp.zeros((1, NOUT_PAD), jnp.float32).at[0, :num_out].set(b)

    return {
        "W0": W0.astype(jnp.bfloat16), "B0": B0,
        "Wh": Wh.astype(jnp.bfloat16), "Bh": Bh,
        "Wl": Wl.astype(jnp.bfloat16), "Bl": Bl,
    }


# ----------------------------- forward -----------------------------

def fully_connected7_forward(params, x_nchw, *, num_out=3):
    """x_nchw: (N, num_in, H, W) f32 -> (N, num_out, H, W) f32."""
    W0, Wh, Wl = params["W0"], params["Wh"], params["Wl"]
    B0, Bh, Bl = params["B0"], params["Bh"], params["Bl"]
    cin_pad = W0.shape[0]
    num_hidden = Wh.shape[0]

    N, cin, H, Wd = x_nchw.shape
    M = N * H * Wd
    TM = _pick_tm(M)
    Mp = _round_up(max(M, TM), TM)

    # NCHW -> (M, cin) pixel rows; channels zero-padded to cin_pad lanes; bf16.
    x = jnp.transpose(x_nchw, (0, 2, 3, 1)).reshape(M, cin)
    x = jnp.pad(x, ((0, Mp - M), (0, cin_pad - cin))).astype(jnp.bfloat16)

    out = pl.pallas_call(
        _fused_mlp_kernel,
        out_shape=jax.ShapeDtypeStruct((Mp, NOUT_PAD), jnp.float32),
        grid=(Mp // TM,),
        in_specs=[
            pl.BlockSpec((TM, cin_pad), lambda m: (m, 0)),                # x tile
            pl.BlockSpec((cin_pad, HPAD), lambda m: (0, 0)),              # W0
            pl.BlockSpec((num_hidden, HPAD, HPAD), lambda m: (0, 0, 0)),  # Wh
            pl.BlockSpec((HPAD, NOUT_PAD), lambda m: (0, 0)),             # Wl
            pl.BlockSpec((1, HPAD), lambda m: (0, 0)),                    # B0
            pl.BlockSpec((num_hidden, 1, HPAD), lambda m: (0, 0, 0)),     # Bh
            pl.BlockSpec((1, NOUT_PAD), lambda m: (0, 0)),                # Bl
        ],
        out_specs=pl.BlockSpec((TM, NOUT_PAD), lambda m: (m, 0)),
        scratch_shapes=[pltpu.VMEM((TM, HPAD), jnp.bfloat16)],  # resident acts
        compiler_params=pltpu.CompilerParams(
            dimension_semantics=("parallel",),
            vmem_limit_bytes=32 * 1024 * 1024),
    )(x, W0, Wh, Wl, B0, Bh, Bl)

    y = out[:M, :num_out].reshape(N, H, Wd, num_out)
    return jnp.transpose(y, (0, 3, 1, 2))                       # NHWC -> NCHW


# Pure-JAX reference using the same bf16 operands (for a correctness check).
def fully_connected7_reference(params, x_nchw, *, num_out=3):
    N, cin, H, Wd = x_nchw.shape
    cin_pad = params["W0"].shape[0]
    a = jnp.transpose(x_nchw, (0, 2, 3, 1)).reshape(-1, cin)
    a = jnp.pad(a, ((0, 0), (0, cin_pad - cin)))
    a = a.astype(jnp.bfloat16).astype(jnp.float32)
    a = jnp.maximum(a @ params["W0"].astype(jnp.float32) + params["B0"], 0.0)
    for i in range(params["Wh"].shape[0]):
        a = a.astype(jnp.bfloat16).astype(jnp.float32)
        a = jnp.maximum(a @ params["Wh"][i].astype(jnp.float32)
                        + params["Bh"][i], 0.0)
    a = a.astype(jnp.bfloat16).astype(jnp.float32)
    y = a @ params["Wl"].astype(jnp.float32) + params["Bl"]
    y = y[:, :num_out].reshape(N, H, Wd, num_out)
    return jnp.transpose(y, (0, 3, 1, 2))


# ----------------------------- main -----------------------------

if __name__ == "__main__":
    key = jax.random.PRNGKey(0)
    k_params, k_x = jax.random.split(key)

    N, num_in, H, W = 2, 4, 16, 16
    num_out = 3

    params = init_fully_connected7_params(k_params, num_in, num_out)
    x = jax.random.normal(k_x, (N, num_in, H, W), jnp.float32)

    fwd = jax.jit(functools.partial(fully_connected7_forward, num_out=num_out))
    y = fwd(params, x)
    jax.block_until_ready(y)

    assert y.shape == (N, num_out, H, W), y.shape
    assert bool(jnp.all(jnp.isfinite(y)))

    # Sanity check against the pure-JAX reference (same bf16 weights/acts; the
    # only difference is MXU accumulation order, so a loose tolerance is ample).
    y_ref = fully_connected7_reference(params, x, num_out=num_out)
    assert bool(jnp.allclose(y, y_ref, rtol=1e-2, atol=1e-2)), (
        "max abs err = %f" % float(jnp.max(jnp.abs(y - y_ref))))

    print("KERNEL_OK")
</pallas_src>

<mosaic_0001>
module attributes {stable_mosaic.version = 11 : i64} {
  func.func @_fused_mlp_kernel(%arg0: i32, %arg1: memref<256x128xbf16, #tpu.memory_space<vmem>>, %arg2: memref<128x512xbf16, #tpu.memory_space<vmem>>, %arg3: memref<22x512x512xbf16, #tpu.memory_space<vmem>>, %arg4: memref<512x128xbf16, #tpu.memory_space<vmem>>, %arg5: memref<1x512xf32, #tpu.memory_space<vmem>>, %arg6: memref<22x1x512xf32, #tpu.memory_space<vmem>>, %arg7: memref<1x128xf32, #tpu.memory_space<vmem>>, %arg8: memref<256x128xf32, #tpu.memory_space<vmem>>, %arg9: memref<256x512xbf16, #tpu.memory_space<vmem>>) attributes {dimension_semantics = [#tpu.dimension_semantics<parallel>], iteration_bounds = array<i64: 2>, scalar_prefetch = 0 : i64, scratch_operands = 1 : i64, tpu.core_type = #tpu.core_type<tc>, window_params = [{transform_indices = @transform_0, window_bounds = array<i64: 256, 128>}, {pipeline_mode = #tpu.pipeline_mode<synchronous>, transform_indices = @transform_1, window_bounds = array<i64: 128, 512>}, {pipeline_mode = #tpu.pipeline_mode<synchronous>, transform_indices = @transform_2, window_bounds = array<i64: 22, 512, 512>}, {pipeline_mode = #tpu.pipeline_mode<synchronous>, transform_indices = @transform_3, window_bounds = array<i64: 512, 128>}, {pipeline_mode = #tpu.pipeline_mode<synchronous>, transform_indices = @transform_4, window_bounds = array<i64: 1, 512>}, {pipeline_mode = #tpu.pipeline_mode<synchronous>, transform_indices = @transform_5, window_bounds = array<i64: 22, 1, 512>}, {pipeline_mode = #tpu.pipeline_mode<synchronous>, transform_indices = @transform_6, window_bounds = array<i64: 1, 128>}, {transform_indices = @transform_7, window_bounds = array<i64: 256, 128>}]} {
    %c0 = arith.constant 0 : index
    %c0_0 = arith.constant 0 : index
    %0 = vector.load %arg1[%c0, %c0_0] : memref<256x128xbf16, #tpu.memory_space<vmem>>, vector<256x128xbf16>
    %c0_1 = arith.constant 0 : index
    %c0_2 = arith.constant 0 : index
    %1 = vector.load %arg2[%c0_1, %c0_2] : memref<128x512xbf16, #tpu.memory_space<vmem>>, vector<128x512xbf16>
    %cst = arith.constant dense<0.000000e+00> : vector<256x512xf32>
    %2 = tpu.matmul %0, %1, %cst {dimension_numbers = #tpu.dot_dimension_numbers<[1], [0], [0], [1], [0, 0, 1, 1], [], []>} : vector<256x128xbf16>, vector<128x512xbf16>, vector<256x512xf32> -> vector<256x512xf32>
    %c0_3 = arith.constant 0 : index
    %c0_4 = arith.constant 0 : index
    %3 = vector.load %arg5[%c0_3, %c0_4] : memref<1x512xf32, #tpu.memory_space<vmem>>, vector<1x512xf32>
    %4 = vector.broadcast %3 : vector<1x512xf32> to vector<256x512xf32>
    %5 = arith.addf %2, %4 : vector<256x512xf32>
    %cst_5 = arith.constant 0.000000e+00 : f32
    %6 = vector.broadcast %cst_5 : f32 to vector<256x512xf32>
    %7 = arith.maximumf %5, %6 : vector<256x512xf32>
    %8 = arith.truncf %7 : vector<256x512xf32> to vector<256x512xbf16>
    %c0_6 = arith.constant 0 : index
    %c0_7 = arith.constant 0 : index
    %9 = vector.load %arg9[%c0_6, %c0_7] : memref<256x512xbf16, #tpu.memory_space<vmem>>, vector<256x512xbf16>
    tpu.vector_store %arg9[%c0_6, %c0_7], %8 {strides = array<i32>} : memref<256x512xbf16, #tpu.memory_space<vmem>>, vector<256x512xbf16>,
    %c0_i32 = arith.constant 0 : i32
    %c22_i32 = arith.constant 22 : i32
    %10 = arith.addi %c0_i32, %c22_i32 : i32
    %c1_i32 = arith.constant 1 : i32
    scf.for %arg10 = %c0_i32 to %10 step %c1_i32  : i32 {
      %c0_18 = arith.constant 0 : index
      %c0_19 = arith.constant 0 : index
      %18 = vector.load %arg9[%c0_18, %c0_19] : memref<256x512xbf16, #tpu.memory_space<vmem>>, vector<256x512xbf16>
      %19 = arith.index_cast %arg10 : i32 to index
      %c0_20 = arith.constant 0 : index
      %c0_21 = arith.constant 0 : index
      %20 = vector.load %arg3[%19, %c0_20, %c0_21] : memref<22x512x512xbf16, #tpu.memory_space<vmem>>, vector<1x512x512xbf16>
      %21 = vector.shape_cast %20 : vector<1x512x512xbf16> to vector<512x512xbf16>
      %cst_22 = arith.constant dense<0.000000e+00> : vector<256x512xf32>
      %22 = tpu.matmul %18, %21, %cst_22 {dimension_numbers = #tpu.dot_dimension_numbers<[1], [0], [0], [1], [0, 0, 1, 1], [], []>} : vector<256x512xbf16>, vector<512x512xbf16>, vector<256x512xf32> -> vector<256x512xf32>
      %23 = arith.index_cast %arg10 : i32 to index
      %c0_23 = arith.constant 0 : index
      %c0_24 = arith.constant 0 : index
      %24 = vector.load %arg6[%23, %c0_23, %c0_24] : memref<22x1x512xf32, #tpu.memory_space<vmem>>, vector<1x1x512xf32>
      %25 = vector.shape_cast %24 : vector<1x1x512xf32> to vector<1x512xf32>
      %26 = vector.broadcast %25 : vector<1x512xf32> to vector<256x512xf32>
      %27 = arith.addf %22, %26 : vector<256x512xf32>
      %cst_25 = arith.constant 0.000000e+00 : f32
      %28 = vector.broadcast %cst_25 : f32 to vector<256x512xf32>
      %29 = arith.maximumf %27, %28 : vector<256x512xf32>
      %30 = arith.truncf %29 : vector<256x512xf32> to vector<256x512xbf16>
      %c0_26 = arith.constant 0 : index
      %c0_27 = arith.constant 0 : index
      %31 = vector.load %arg9[%c0_26, %c0_27] : memref<256x512xbf16, #tpu.memory_space<vmem>>, vector<256x512xbf16>
      tpu.vector_store %arg9[%c0_26, %c0_27], %30 {strides = array<i32>} : memref<256x512xbf16, #tpu.memory_space<vmem>>, vector<256x512xbf16>,
    }
    %c22_i32_8 = arith.constant 22 : i32
    %c0_9 = arith.constant 0 : index
    %c0_10 = arith.constant 0 : index
    %11 = vector.load %arg9[%c0_9, %c0_10] : memref<256x512xbf16, #tpu.memory_space<vmem>>, vector<256x512xbf16>
    %c0_11 = arith.constant 0 : index
    %c0_12 = arith.constant 0 : index
    %12 = vector.load %arg4[%c0_11, %c0_12] : memref<512x128xbf16, #tpu.memory_space<vmem>>, vector<512x128xbf16>
    %cst_13 = arith.constant dense<0.000000e+00> : vector<256x128xf32>
    %13 = tpu.matmul %11, %12, %cst_13 {dimension_numbers = #tpu.dot_dimension_numbers<[1], [0], [0], [1], [0, 0, 1, 1], [], []>} : vector<256x512xbf16>, vector<512x128xbf16>, vector<256x128xf32> -> vector<256x128xf32>
    %c0_14 = arith.constant 0 : index
    %c0_15 = arith.constant 0 : index
    %14 = vector.load %arg7[%c0_14, %c0_15] : memref<1x128xf32, #tpu.memory_space<vmem>>, vector<1x128xf32>
    %15 = vector.broadcast %14 : vector<1x128xf32> to vector<256x128xf32>
    %16 = arith.addf %13, %15 : vector<256x128xf32>
    %c0_16 = arith.constant 0 : index
    %c0_17 = arith.constant 0 : index
    %17 = vector.load %arg8[%c0_16, %c0_17] : memref<256x128xf32, #tpu.memory_space<vmem>>, vector<256x128xf32>
    tpu.vector_store %arg8[%c0_16, %c0_17], %16 {strides = array<i32>} : memref<256x128xf32, #tpu.memory_space<vmem>>, vector<256x128xf32>,
    return
  }
  func.func @transform_0(%arg0: i32) -> (i32, i32) {
    %c0_i32 = arith.constant 0 : i32
    %c0_i32_0 = arith.constant 0 : i32
    return %arg0, %c0_i32 : i32, i32
  }
  func.func @transform_1(%arg0: i32) -> (i32, i32) {
    %c0_i32 = arith.constant 0 : i32
    %c0_i32_0 = arith.constant 0 : i32
    %c0_i32_1 = arith.constant 0 : i32
    return %c0_i32, %c0_i32_0 : i32, i32
  }
  func.func @transform_2(%arg0: i32) -> (i32, i32, i32) {
    %c0_i32 = arith.constant 0 : i32
    %c0_i32_0 = arith.constant 0 : i32
    %c0_i32_1 = arith.constant 0 : i32
    %c0_i32_2 = arith.constant 0 : i32
    return %c0_i32, %c0_i32_0, %c0_i32_1 : i32, i32, i32
  }
  func.func @transform_3(%arg0: i32) -> (i32, i32) {
    %c0_i32 = arith.constant 0 : i32
    %c0_i32_0 = arith.constant 0 : i32
    %c0_i32_1 = arith.constant 0 : i32
    return %c0_i32, %c0_i32_0 : i32, i32
  }
  func.func @transform_4(%arg0: i32) -> (i32, i32) {
    %c0_i32 = arith.constant 0 : i32
    %c0_i32_0 = arith.constant 0 : i32
    %c0_i32_1 = arith.constant 0 : i32
    return %c0_i32, %c0_i32_0 : i32, i32
  }
  func.func @transform_5(%arg0: i32) -> (i32, i32, i32) {
    %c0_i32 = arith.constant 0 : i32
    %c0_i32_0 = arith.constant 0 : i32
    %c0_i32_1 = arith.constant 0 : i32
    %c0_i32_2 = arith.constant 0 : i32
    return %c0_i32, %c0_i32_0, %c0_i32_1 : i32, i32, i32
  }
  func.func @transform_6(%arg0: i32) -> (i32, i32) {
    %c0_i32 = arith.constant 0 : i32
    %c0_i32_0 = arith.constant 0 : i32
    %c0_i32_1 = arith.constant 0 : i32
    return %c0_i32, %c0_i32_0 : i32, i32
  }
  func.func @transform_7(%arg0: i32) -> (i32, i32) {
    %c0_i32 = arith.constant 0 : i32
    %c0_i32_0 = arith.constant 0 : i32
    return %arg0, %c0_i32 : i32, i32
  }
}

</mosaic_0001>

<llo_original>
// kernel: fully_connected7_forward.1
$region0: #{fully_connected7_forward.1}
  #allocation0 [shape = 'u32[]', space=smem, size = 0x4, offset = 0x4, fixed_abs, tag = 'smem constant byte address 0x4 - core index']
  #allocation1 [shape = 'u32[144,128]{1,0:T(1,128)}', space=vmem, size = 0x12000, scoped, tag = 'internal scratch']
  #allocation2 [shape = 'bf16[256,512]{1,0:T(16,128)(2,1)}', space=vmem, size = 0x40000, scoped, tag = 'scratch operand']
  %s0 = inlined_call_operand.vmem [shape: bf16[512,128], index: 0, kind: input, shape index: {}]
  %s1 = inlined_call_operand.hbm [shape: bf16[128,512], index: 1, kind: input, shape index: {}]
  %s2 = inlined_call_operand.hbm [shape: bf16[22,512,512], index: 2, kind: input, shape index: {}]
  %s3 = inlined_call_operand.hbm [shape: bf16[512,128], index: 3, kind: input, shape index: {}]
  %s4 = inlined_call_operand.hbm [shape: f32[1,512], index: 4, kind: input, shape index: {}]
  %s5 = inlined_call_operand.hbm [shape: f32[22,1,512], index: 5, kind: input, shape index: {}]
  %s6 = inlined_call_operand.hbm [shape: f32[1,128], index: 6, kind: input, shape index: {}]
  %s7 = inlined_call_operand.vmem [shape: f32[512,128], index: 7, kind: output, shape index: {}]
  %s8 = sld [smem:[#allocation0]]
  $region92: #{fully_connected7_forward.1} parent=0
    _
  %s10 = ssub.s32 1, %s8
  %s11 = scalar_select 0, %s10, %s8
  $region1: #{fully_connected7_forward.1} parent=0
    #allocation3 [shape = 'u8[131072]{0}', space=vmem, size = 0x20000, scoped, tag = 'input window, operand 1, single buffered']
    #allocation4 [shape = 's32[2]{0}', space=sflag, size = 0x8, scoped, tag = 'scoped memory for fully_connected7_forward.1']
    #allocation5 [shape = 'u8[11534336]{0}', space=vmem, size = 0xb00000, scoped, tag = 'input window, operand 2, single buffered']
    #allocation6 [shape = 's32[1]{0}', space=sflag, size = 0x4, scoped, tag = 'scoped memory for fully_connected7_forward.1']
    #allocation7 [shape = 'u8[131072]{0}', space=vmem, size = 0x20000, scoped, tag = 'input window, operand 3, single buffered']
    #allocation8 [shape = 'u8[2048]{0}', space=vmem, size = 0x800, scoped, tag = 'input window, operand 4, single buffered']
    #allocation9 [shape = 's32[1]{0}', space=sflag, size = 0x4, scoped, tag = 'scoped memory for fully_connected7_forward.1']
    #allocation10 [shape = 'u8[45056]{0}', space=vmem, size = 0xb000, scoped, tag = 'input window, operand 5, single buffered']
    #allocation11 [shape = 'u8[512]{0}', space=vmem, size = 0x400, scoped, tag = 'input window, operand 6, single buffered']
    #allocation12 [shape = 's32[1]{0}', space=sflag, size = 0x4, scoped, tag = 'scoped memory for fully_connected7_forward.1']
    %12 = vsyncpa [#allocation4], 0
    %13 = vsyncpa [#allocation6], 0
    %14 = vsyncpa [#allocation9], 0
    %15 = vsyncpa [#allocation12], 0
    loop: start=0, step=1, limit=4
    $region2: #{fully_connected7_forward.1} parent=1 // loop_pre_header
      _
    $region3: #{fully_connected7_forward.1} parent=1 // loop_header
      %s17 = sphi 0, %s21
      %p18 = scmp.ge.s32.totalorder %s17, 4
      %s27 = sphi 0, %s29
      %s30 = sphi 0, %s27
      %s31 = sphi 0, %s30
      %s47 = sphi 0, %s31
      %s51 = sphi 0, %s51
      %s53 = sphi 0, %s51
      %s54 = sphi 0, %s53
      %s68 = sphi 0, %s54
      %s72 = sphi 0, %s72
      %s74 = sphi 0, %s72
      %s75 = sphi 0, %s74
      %s89 = sphi 0, %s75
      %s93 = sphi 0, %s93
      %s95 = sphi 0, %s93
      %s96 = sphi 0, %s95
      %s110 = sphi 0, %s96
      %s114 = sphi 0, %s114
      %s116 = sphi 0, %s114
      %s117 = sphi 0, %s116
      %s131 = sphi 0, %s117
      %s135 = sphi 0, %s135
      %s137 = sphi 0, %s135
      %s138 = sphi 0, %s137
      %s152 = sphi 0, %s138
      %s156 = sphi 0, %s156
      %s158 = sphi 0, %s156
      %s159 = sphi 0, %s158
      %s173 = sphi 0, %s159
      %s179 = sphi 0, %s181
      %s182 = sphi 0, %s179
      %s183 = sphi 0, %s182
      %s199 = sphi 0, %s183
    $region4: #{fully_connected7_forward.1} parent=1 // loop_header_branch
      %20 = sbr.rel (%p18) target = $region8
    $region5: #{fully_connected7_forward.1} parent=1 // loop_body
      %s22 = ssub.s32 %s17, 1
      %s23 = ssub.s32 %s17, 2
      %s24 = sadd.s32 %s17, 1
      %s25 = ssub.s32 %s17, %s24
      %p26 = scmp.eq.s32.totalorder %s25, 0
      %s28 = sadd.s32 %s27, 1
      %s29 = scalar_select %p26, %s27, %s28
      %p32 = pneg %p26
      %p33 = scmp.eq.s32.totalorder %s17, 1
      %p34 = por %p32, %p33
      %p35 = scmp.ne.s32.totalorder %s27, %s30
      %p36 = scmp.eq.s32.totalorder %s17, 0
      %p37 = por %p35, %p36
      %p38 = scmp.ne.s32.totalorder %s27, %s30
      %p39 = scmp.eq.s32.totalorder %s22, 1
      %p40 = por %p38, %p39
      %p41 = scmp.ne.s32.totalorder %s30, %s31
      %p42 = scmp.eq.s32.totalorder %s22, 0
      %p43 = por %p41, %p42
      %p44 = scmp.ne.s32.totalorder %s30, %s31
      %p45 = scmp.eq.s32.totalorder %s23, 1
      %p46 = por %p44, %p45
      %p48 = scmp.ne.s32.totalorder %s31, %s47
      %p49 = scmp.eq.s32.totalorder %s23, 0
      %p50 = por %p48, %p49
      %s52 = sadd.s32 %s51, 1
      %p55 = scmp.eq.s32.totalorder %s17, 1
      %p56 = scmp.ne.s32.totalorder %s51, %s53
      %p57 = scmp.eq.s32.totalorder %s17, 0
      %p58 = por %p56, %p57
      %p59 = scmp.ne.s32.totalorder %s51, %s53
      %p60 = scmp.eq.s32.totalorder %s22, 1
      %p61 = por %p59, %p60
      %p62 = scmp.ne.s32.totalorder %s53, %s54
      %p63 = scmp.eq.s32.totalorder %s22, 0
      %p64 = por %p62, %p63
      %p65 = scmp.ne.s32.totalorder %s53, %s54
      %p66 = scmp.eq.s32.totalorder %s23, 1
      %p67 = por %p65, %p66
      %p69 = scmp.ne.s32.totalorder %s54, %s68
      %p70 = scmp.eq.s32.totalorder %s23, 0
      %p71 = por %p69, %p70
      %s73 = sadd.s32 %s72, 1
      %p76 = scmp.eq.s32.totalorder %s17, 1
      %p77 = scmp.ne.s32.totalorder %s72, %s74
      %p78 = scmp.eq.s32.totalorder %s17, 0
      %p79 = por %p77, %p78
      %p80 = scmp.ne.s32.totalorder %s72, %s74
      %p81 = scmp.eq.s32.totalorder %s22, 1
      %p82 = por %p80, %p81
      %p83 = scmp.ne.s32.totalorder %s74, %s75
      %p84 = scmp.eq.s32.totalorder %s22, 0
      %p85 = por %p83, %p84
      %p86 = scmp.ne.s32.totalorder %s74, %s75
      %p87 = scmp.eq.s32.totalorder %s23, 1
      %p88 = por %p86, %p87
      %p90 = scmp.ne.s32.totalorder %s75, %s89
      %p91 = scmp.eq.s32.totalorder %s23, 0
      %p92 = por %p90, %p91
      %s94 = sadd.s32 %s93, 1
      %p97 = scmp.eq.s32.totalorder %s17, 1
      %p98 = scmp.ne.s32.totalorder %s93, %s95
      %p99 = scmp.eq.s32.totalorder %s17, 0
      %p100 = por %p98, %p99
      %p101 = scmp.ne.s32.totalorder %s93, %s95
      %p102 = scmp.eq.s32.totalorder %s22, 1
      %p103 = por %p101, %p102
      %p104 = scmp.ne.s32.totalorder %s95, %s96
      %p105 = scmp.eq.s32.totalorder %s22, 0
      %p106 = por %p104, %p105
      %p107 = scmp.ne.s32.totalorder %s95, %s96
      %p108 = scmp.eq.s32.totalorder %s23, 1
      %p109 = por %p107, %p108
      %p111 = scmp.ne.s32.totalorder %s96, %s110
      %p112 = scmp.eq.s32.totalorder %s23, 0
      %p113 = por %p111, %p112
      %s115 = sadd.s32 %s114, 1
      %p118 = scmp.eq.s32.totalorder %s17, 1
      %p119 = scmp.ne.s32.totalorder %s114, %s116
      %p120 = scmp.eq.s32.totalorder %s17, 0
      %p121 = por %p119, %p120
      %p122 = scmp.ne.s32.totalorder %s114, %s116
      %p123 = scmp.eq.s32.totalorder %s22, 1
      %p124 = por %p122, %p123
      %p125 = scmp.ne.s32.totalorder %s116, %s117
      %p126 = scmp.eq.s32.totalorder %s22, 0
      %p127 = por %p125, %p126
      %p128 = scmp.ne.s32.totalorder %s116, %s117
      %p129 = scmp.eq.s32.totalorder %s23, 1
      %p130 = por %p128, %p129
      %p132 = scmp.ne.s32.totalorder %s117, %s131
      %p133 = scmp.eq.s32.totalorder %s23, 0
      %p134 = por %p132, %p133
      %s136 = sadd.s32 %s135, 1
      %p139 = scmp.eq.s32.totalorder %s17, 1
      %p140 = scmp.ne.s32.totalorder %s135, %s137
      %p141 = scmp.eq.s32.totalorder %s17, 0
      %p142 = por %p140, %p141
      %p143 = scmp.ne.s32.totalorder %s135, %s137
      %p144 = scmp.eq.s32.totalorder %s22, 1
      %p145 = por %p143, %p144
      %p146 = scmp.ne.s32.totalorder %s137, %s138
      %p147 = scmp.eq.s32.totalorder %s22, 0
      %p148 = por %p146, %p147
      %p149 = scmp.ne.s32.totalorder %s137, %s138
      %p150 = scmp.eq.s32.totalorder %s23, 1
      %p151 = por %p149, %p150
      %p153 = scmp.ne.s32.totalorder %s138, %s152
      %p154 = scmp.eq.s32.totalorder %s23, 0
      %p155 = por %p153, %p154
      %s157 = sadd.s32 %s156, 1
      %p160 = scmp.eq.s32.totalorder %s17, 1
      %p161 = scmp.ne.s32.totalorder %s156, %s158
      %p162 = scmp.eq.s32.totalorder %s17, 0
      %p163 = por %p161, %p162
      %p164 = scmp.ne.s32.totalorder %s156, %s158
      %p165 = scmp.eq.s32.totalorder %s22, 1
      %p166 = por %p164, %p165
      %p167 = scmp.ne.s32.totalorder %s158, %s159
      %p168 = scmp.eq.s32.totalorder %s22, 0
      %p169 = por %p167, %p168
      %p170 = scmp.ne.s32.totalorder %s158, %s159
      %p171 = scmp.eq.s32.totalorder %s23, 1
      %p172 = por %p170, %p171
      %p174 = scmp.ne.s32.totalorder %s159, %s173
      %p175 = scmp.eq.s32.totalorder %s23, 0
      %p176 = por %p174, %p175
      %s177 = ssub.s32 %s17, %s24
      %p178 = scmp.eq.s32.totalorder %s177, 0
      %s180 = sadd.s32 %s179, 1
      %s181 = scalar_select %p178, %s179, %s180
      %p184 = pneg %p178
      %p185 = scmp.eq.s32.totalorder %s17, 1
      %p186 = por %p184, %p185
      %p187 = scmp.ne.s32.totalorder %s179, %s182
      %p188 = scmp.eq.s32.totalorder %s17, 0
      %p189 = por %p187, %p188
      %p190 = scmp.ne.s32.totalorder %s179, %s182
      %p191 = scmp.eq.s32.totalorder %s22, 1
      %p192 = por %p190, %p191
      %p193 = scmp.ne.s32.totalorder %s182, %s183
      %p194 = scmp.eq.s32.totalorder %s22, 0
      %p195 = por %p193, %p194
      %p196 = scmp.ne.s32.totalorder %s182, %s183
      %p197 = scmp.eq.s32.totalorder %s23, 1
      %p198 = por %p196, %p197
      %p200 = scmp.ne.s32.totalorder %s183, %s199
      %p201 = scmp.eq.s32.totalorder %s23, 0
      %p202 = por %p200, %p201
      %p203 = scmp.le.s32.totalorder 1, %s17
      %p204 = scmp.lt.s32.totalorder %s17, 3
      %p205 = pnand %p203, %p204
      %p206 = pneg %p205
      // Predicated region
      $region9: #{fully_connected7_forward.1} parent=5 // pred_check
        _
      $region10: #{fully_connected7_forward.1} parent=5 // pred_check_branch
        %208 = sbr.rel (%p205) target = $region12
      $region11: #{fully_connected7_forward.1} parent=5 // pred_region
        %s209 = ssub.s32 %s17, 1
        // Predicated region
        $region13: #{fully_connected7_forward.1} parent=11 // pred_check
          %p210 = pneg %p64
        $region14: #{fully_connected7_forward.1} parent=11 // pred_check_branch
          %212 = sbr.rel (%p210) target = $region16
        $region15: #{fully_connected7_forward.1} parent=11 // pred_region
          %s214 = ssub.s32 4096, 4096
          %215 = vsyncadd [#allocation4], %s214
          %s216 = sshll.u32 [#allocation3], 4
          %s217 = int_to_ptr.vmem [resolvable:$true] %s216
          %222 = dma.hbm_to_vmem [thread:$0]  %s1, 4096, %s217, [#allocation4], 256, 256, 16
        $region16: #{fully_connected7_forward.1} parent=11 // pred_fallthru
          _
        // Predicated region
        $region17: #{fully_connected7_forward.1} parent=11 // pred_check
          %p223 = pneg %p85
        $region18: #{fully_connected7_forward.1} parent=11 // pred_check_branch
          %225 = sbr.rel (%p223) target = $region20
        $region19: #{fully_connected7_forward.1} parent=11 // pred_region
          %s227 = ssub.s32 360448, 360448
          %228 = vsyncadd [#allocation6], %s227
          %s229 = sshll.u32 [#allocation5], 4
          %s230 = int_to_ptr.vmem [resolvable:$true] %s229
          %235 = dma.hbm_to_vmem [thread:$0]  %s2, 360448, %s230, [#allocation6], 256, 256, 16
        $region20: #{fully_connected7_forward.1} parent=11 // pred_fallthru
          _
        // Predicated region
        $region21: #{fully_connected7_forward.1} parent=11 // pred_check
          %p236 = pneg %p106
        $region22: #{fully_connected7_forward.1} parent=11 // pred_check_branch
          %238 = sbr.rel (%p236) target = $region24
        $region23: #{fully_connected7_forward.1} parent=11 // pred_region
          %s240 = ssub.s32 4096, 4096
          %241 = vsyncadd [#allocation6], %s240
          %s242 = sshll.u32 [#allocation7], 4
          %s243 = int_to_ptr.vmem [resolvable:$true] %s242
          %248 = dma.hbm_to_vmem [thread:$0]  %s3, 4096, %s243, [#allocation6], 64, 64, 4
        $region24: #{fully_connected7_forward.1} parent=11 // pred_fallthru
          _
        // Predicated region
        $region25: #{fully_connected7_forward.1} parent=11 // pred_check
          %p249 = pneg %p127
        $region26: #{fully_connected7_forward.1} parent=11 // pred_check_branch
          %251 = sbr.rel (%p249) target = $region28
        $region27: #{fully_connected7_forward.1} parent=11 // pred_region
          %s253 = ssub.s32 64, 64
          %254 = vsyncadd [#allocation9], %s253
          %s256 = sshll.u32 [#allocation8], 4
          %s257 = int_to_ptr.vmem [resolvable:$true] %s256
          %259 = dma.hbm_to_vmem [thread:$0]  %s4, 64, %s257, [#allocation9]
        $region28: #{fully_connected7_forward.1} parent=11 // pred_fallthru
          _
        // Predicated region
        $region29: #{fully_connected7_forward.1} parent=11 // pred_check
          %p260 = pneg %p148
        $region30: #{fully_connected7_forward.1} parent=11 // pred_check_branch
          %262 = sbr.rel (%p260) target = $region32
        $region31: #{fully_connected7_forward.1} parent=11 // pred_region
          %s264 = ssub.s32 1408, 1408
          %265 = vsyncadd [#allocation9], %s264
          %s266 = sshll.u32 [#allocation10], 4
          %s267 = int_to_ptr.vmem [resolvable:$true] %s266
          %272 = dma.hbm_to_vmem [thread:$0]  %s5, 1408, %s267, [#allocation9], 64, 64, 4
        $region32: #{fully_connected7_forward.1} parent=11 // pred_fallthru
          _
        // Predicated region
        $region33: #{fully_connected7_forward.1} parent=11 // pred_check
          %p273 = pneg %p169
        $region34: #{fully_connected7_forward.1} parent=11 // pred_check_branch
          %275 = sbr.rel (%p273) target = $region36
        $region35: #{fully_connected7_forward.1} parent=11 // pred_region
          %s277 = ssub.s32 16, 16
          %278 = vsyncadd [#allocation12], %s277
          %s280 = sshll.u32 [#allocation11], 4
          %s281 = int_to_ptr.vmem [resolvable:$true] %s280
          %283 = dma.hbm_to_vmem [thread:$0]  %s6, 16, %s281, [#allocation12]
        $region36: #{fully_connected7_forward.1} parent=11 // pred_fallthru
          _
      $region12: #{fully_connected7_forward.1} parent=5 // pred_fallthru
        _
      %p284 = scmp.lt.s32.totalorder %s17, 2
      // Predicated region
      $region37: #{fully_connected7_forward.1} parent=5 // pred_check
        %p285 = pneg %p284
      $region38: #{fully_connected7_forward.1} parent=5 // pred_check_branch
        %287 = sbr.rel (%p285) target = $region40
      $region39: #{fully_connected7_forward.1} parent=5 // pred_region
        // Predicated region
        $region41: #{fully_connected7_forward.1} parent=39 // pred_check
          %p288 = pneg %p37
        $region42: #{fully_connected7_forward.1} parent=39 // pred_check_branch
          %290 = sbr.rel (%p288) target = $region44
        $region43: #{fully_connected7_forward.1} parent=39 // pred_region
          %s291 = smul.u32 32, %s17
          %p292 = scmp.lt.s32.totalorder %s291, 63
          %s293 = scalar_select %p292, %s291, 63
          %s294 = smul.addr %s293, 4
          %s295 = scalar_lea.vmem %s0, %s294
          %s296 = smul.u32 32, %s17
        $region44: #{fully_connected7_forward.1} parent=39 // pred_fallthru
          _
      $region40: #{fully_connected7_forward.1} parent=5 // pred_fallthru
        _
      %p297 = scmp.le.s32.totalorder 1, %s17
      %p298 = scmp.lt.s32.totalorder %s17, 3
      %p299 = pnand %p297, %p298
      %p300 = pneg %p299
      // Predicated region
      $region45: #{fully_connected7_forward.1} parent=5 // pred_check
        _
      $region46: #{fully_connected7_forward.1} parent=5 // pred_check_branch
        %302 = sbr.rel (%p299) target = $region48
      $region47: #{fully_connected7_forward.1} parent=5 // pred_region
        %s303 = ssub.s32 %s17, 1
        // Predicated region
        $region49: #{fully_connected7_forward.1} parent=47 // pred_check
          %p304 = pneg %p64
        $region50: #{fully_connected7_forward.1} parent=47 // pred_check_branch
          %306 = sbr.rel (%p304) target = $region52
        $region51: #{fully_connected7_forward.1} parent=47 // pred_region
          %307 = dma.done [#allocation4], 4096
        $region52: #{fully_connected7_forward.1} parent=47 // pred_fallthru
          _
        // Predicated region
        $region53: #{fully_connected7_forward.1} parent=47 // pred_check
          %p308 = pneg %p85
        $region54: #{fully_connected7_forward.1} parent=47 // pred_check_branch
          %310 = sbr.rel (%p308) target = $region56
        $region55: #{fully_connected7_forward.1} parent=47 // pred_region
          %311 = dma.done [#allocation6], 360448
        $region56: #{fully_connected7_forward.1} parent=47 // pred_fallthru
          _
        // Predicated region
        $region57: #{fully_connected7_forward.1} parent=47 // pred_check
          %p312 = pneg %p106
        $region58: #{fully_connected7_forward.1} parent=47 // pred_check_branch
          %314 = sbr.rel (%p312) target = $region60
        $region59: #{fully_connected7_forward.1} parent=47 // pred_region
          %315 = dma.done [#allocation6], 4096
        $region60: #{fully_connected7_forward.1} parent=47 // pred_fallthru
          _
        // Predicated region
        $region61: #{fully_connected7_forward.1} parent=47 // pred_check
          %p316 = pneg %p127
        $region62: #{fully_connected7_forward.1} parent=47 // pred_check_branch
          %318 = sbr.rel (%p316) target = $region64
        $region63: #{fully_connected7_forward.1} parent=47 // pred_region
          %319 = dma.done [#allocation9], 64
        $region64: #{fully_connected7_forward.1} parent=47 // pred_fallthru
          _
        // Predicated region
        $region65: #{fully_connected7_forward.1} parent=47 // pred_check
          %p320 = pneg %p148
        $region66: #{fully_connected7_forward.1} parent=47 // pred_check_branch
          %322 = sbr.rel (%p320) target = $region68
        $region67: #{fully_connected7_forward.1} parent=47 // pred_region
          %323 = dma.done [#allocation9], 1408
        $region68: #{fully_connected7_forward.1} parent=47 // pred_fallthru
          _
        // Predicated region
        $region69: #{fully_connected7_forward.1} parent=47 // pred_check
          %p324 = pneg %p169
        $region70: #{fully_connected7_forward.1} parent=47 // pred_check_branch
          %326 = sbr.rel (%p324) target = $region72
        $region71: #{fully_connected7_forward.1} parent=47 // pred_region
          %327 = dma.done [#allocation12], 16
        $region72: #{fully_connected7_forward.1} parent=47 // pred_fallthru
          _
        %s328 = smul.u32 32, %s22
        %p329 = scmp.lt.s32.totalorder %s328, 63
        %s330 = scalar_select %p329, %s328, 63
        %s331 = smul.addr %s330, 4
        %s332 = scalar_lea.vmem %s0, %s331
        %p333 = pneg %p43
        %p334 = pneg %p40
        %p335 = pneg %p64
        %p336 = pneg %p61
        %p337 = pneg %p85
        %p338 = pneg %p82
        %p339 = pneg %p106
        %p340 = pneg %p103
        %p341 = pneg %p127
        %p342 = pneg %p124
        %p343 = pneg %p148
        %p344 = pneg %p145
        %p345 = pneg %p169
        %p346 = pneg %p166
        %p347 = pneg %p195
        %p348 = pneg %p192
        %s349 = smul.u32 32, %s22
        %p350 = scmp.lt.s32.totalorder %s349, 63
        %s351 = scalar_select %p350, %s349, 63
        %s352 = smul.addr %s351, 8
        %s353 = scalar_lea.vmem %s7, %s352
        %s354 = smul.u32 32, %s22
        %p355 = scmp.lt.s32.totalorder %s354, 63
        %s356 = scalar_select %p355, %s354, 63
        %s357 = smul.addr %s356, 4
        %s358 = scalar_lea.vmem %s0, %s357
        %s359 = smul.u32 32, %s22
        %s360 = smul.u32 32, %s22
        %p361 = scmp.lt.s32.totalorder %s360, 63
        %s362 = scalar_select %p361, %s360, 63
        %s363 = smul.addr %s362, 8
        %s364 = scalar_lea.vmem %s7, %s363
        %s365 = smul.u32 32, %s22
        %v367 = vld [vmem:[%s358] sm:$0xf]
        %v368 = vld [vmem:[%s358 + $0x4] sm:$0xf]
        %v369 = vld [vmem:[%s358 + $0x8] sm:$0xf]
        %v370 = vld [vmem:[%s358 + $0xc] sm:$0xf]
        %v371 = vld [vmem:[%s358 + $0x10] sm:$0xf]
        %v372 = vld [vmem:[%s358 + $0x14] sm:$0xf]
        %v373 = vld [vmem:[%s358 + $0x18] sm:$0xf]
        %v374 = vld [vmem:[%s358 + $0x1c] sm:$0xf]
        %v375 = vld [vmem:[%s358 + $0x20] sm:$0xf]
        %v376 = vld [vmem:[%s358 + $0x24] sm:$0xf]
        %v377 = vld [vmem:[%s358 + $0x28] sm:$0xf]
        %v378 = vld [vmem:[%s358 + $0x2c] sm:$0xf]
        %v379 = vld [vmem:[%s358 + $0x30] sm:$0xf]
        %v380 = vld [vmem:[%s358 + $0x34] sm:$0xf]
        %v381 = vld [vmem:[%s358 + $0x38] sm:$0xf]
        %v382 = vld [vmem:[%s358 + $0x3c] sm:$0xf]
        %v383 = vld [vmem:[%s358 + $0x40] sm:$0xf]
        %v384 = vld [vmem:[%s358 + $0x44] sm:$0xf]
        %v385 = vld [vmem:[%s358 + $0x48] sm:$0xf]
        %v386 = vld [vmem:[%s358 + $0x4c] sm:$0xf]
        %v387 = vld [vmem:[%s358 + $0x50] sm:$0xf]
        %v388 = vld [vmem:[%s358 + $0x54] sm:$0xf]
        %v389 = vld [vmem:[%s358 + $0x58] sm:$0xf]
        %v390 = vld [vmem:[%s358 + $0x5c] sm:$0xf]
        %v391 = vld [vmem:[%s358 + $0x60] sm:$0xf]
        %v392 = vld [vmem:[%s358 + $0x64] sm:$0xf]
        %v393 = vld [vmem:[%s358 + $0x68] sm:$0xf]
        %v394 = vld [vmem:[%s358 + $0x6c] sm:$0xf]
        %v395 = vld [vmem:[%s358 + $0x70] sm:$0xf]
        %v396 = vld [vmem:[%s358 + $0x74] sm:$0xf]
        %v397 = vld [vmem:[%s358 + $0x78] sm:$0xf]
        %v398 = vld [vmem:[%s358 + $0x7c] sm:$0xf]
        %v399 = vld [vmem:[#allocation3] sm:$0xff]
        %v400 = vld [vmem:[#allocation3 + $0x8] sm:$0xff]
        %v401 = vld [vmem:[#allocation3 + $0x10] sm:$0xff]
        %v402 = vld [vmem:[#allocation3 + $0x18] sm:$0xff]
        %v403 = vld [vmem:[#allocation3 + $0x20] sm:$0xff]
        %v404 = vld [vmem:[#allocation3 + $0x28] sm:$0xff]
        %v405 = vld [vmem:[#allocation3 + $0x30] sm:$0xff]
        %v406 = vld [vmem:[#allocation3 + $0x38] sm:$0xff]
        %v407 = vld [vmem:[#allocation3 + $0x40] sm:$0xff]
        %v408 = vld [vmem:[#allocation3 + $0x48] sm:$0xff]
        %v409 = vld [vmem:[#allocation3 + $0x50] sm:$0xff]
        %v410 = vld [vmem:[#allocation3 + $0x58] sm:$0xff]
        %v411 = vld [vmem:[#allocation3 + $0x60] sm:$0xff]
        %v412 = vld [vmem:[#allocation3 + $0x68] sm:$0xff]
        %v413 = vld [vmem:[#allocation3 + $0x70] sm:$0xff]
        %v414 = vld [vmem:[#allocation3 + $0x78] sm:$0xff]
        %v415 = vld [vmem:[#allocation3 + $0x80] sm:$0xff]
        %v416 = vld [vmem:[#allocation3 + $0x88] sm:$0xff]
        %v417 = vld [vmem:[#allocation3 + $0x90] sm:$0xff]
        %v418 = vld [vmem:[#allocation3 + $0x98] sm:$0xff]
        %v419 = vld [vmem:[#allocation3 + $0xa0] sm:$0xff]
        %v420 = vld [vmem:[#allocation3 + $0xa8] sm:$0xff]
        %v421 = vld [vmem:[#allocation3 + $0xb0] sm:$0xff]
        %v422 = vld [vmem:[#allocation3 + $0xb8] sm:$0xff]
        %v423 = vld [vmem:[#allocation3 + $0xc0] sm:$0xff]
        %v424 = vld [vmem:[#allocation3 + $0xc8] sm:$0xff]
        %v425 = vld [vmem:[#allocation3 + $0xd0] sm:$0xff]
        %v426 = vld [vmem:[#allocation3 + $0xd8] sm:$0xff]
        %v427 = vld [vmem:[#allocation3 + $0xe0] sm:$0xff]
        %v428 = vld [vmem:[#allocation3 + $0xe8] sm:$0xff]
        %v429 = vld [vmem:[#allocation3 + $0xf0] sm:$0xff]
        %v430 = vld [vmem:[#allocation3 + $0xf8] sm:$0xff]
        %v431 = vld [vmem:[#allocation8] sm:$0xf]
        %v433 = vlaneseq
        %v434 = vshrl.u32 %v433, 7
        %v435 = vsub.s32 0, %v434
        %v436 = vrot.slane %v431, %v435
        %v437 = vlaneseq
        %v438 = vshrl.u32 %v437, 7
        %v439 = vsub.s32 1, %v438
        %v440 = vrot.slane %v431, %v439
        %v441 = vlaneseq
        %v442 = vshrl.u32 %v441, 7
        %v443 = vsub.s32 2, %v442
        %v444 = vrot.slane %v431, %v443
        %v445 = vlaneseq
        %v446 = vshrl.u32 %v445, 7
        %v447 = vsub.s32 3, %v446
        %v448 = vrot.slane %v431, %v447
        %v485 = vunpack.c.l.b16 %v367
        %v486 = vunpack.c.l.b16 %v368
        %v487 = vunpack.c.l.b16 %v369
        %v488 = vunpack.c.l.b16 %v370
        %v489 = vunpack.c.l.b16 %v371
        %v490 = vunpack.c.l.b16 %v372
        %v491 = vunpack.c.l.b16 %v373
        %v492 = vunpack.c.l.b16 %v374
        %v493 = vunpack.c.l.b16 %v375
        %v494 = vunpack.c.l.b16 %v376
        %v495 = vunpack.c.l.b16 %v377
        %v496 = vunpack.c.l.b16 %v378
        %v497 = vunpack.c.l.b16 %v379
        %v498 = vunpack.c.l.b16 %v380
        %v499 = vunpack.c.l.b16 %v381
        %v500 = vunpack.c.l.b16 %v382
        %v501 = vunpack.c.l.b16 %v383
        %v502 = vunpack.c.l.b16 %v384
        %v503 = vunpack.c.l.b16 %v385
        %v504 = vunpack.c.l.b16 %v386
        %v505 = vunpack.c.l.b16 %v387
        %v506 = vunpack.c.l.b16 %v388
        %v507 = vunpack.c.l.b16 %v389
        %v508 = vunpack.c.l.b16 %v390
        %v509 = vunpack.c.l.b16 %v391
        %v510 = vunpack.c.l.b16 %v392
        %v511 = vunpack.c.l.b16 %v393
        %v512 = vunpack.c.l.b16 %v394
        %v513 = vunpack.c.l.b16 %v395
        %v514 = vunpack.c.l.b16 %v396
        %v515 = vunpack.c.l.b16 %v397
        %v516 = vunpack.c.l.b16 %v398
        %v517 = vpack.c.b16 %v486, %v485
        %v518 = vpack.c.b16 %v488, %v487
        %v519 = vpack.c.b16 %v490, %v489
        %v520 = vpack.c.b16 %v492, %v491
        %v521 = vpack.c.b16 %v494, %v493
        %v522 = vpack.c.b16 %v496, %v495
        %v523 = vpack.c.b16 %v498, %v497
        %v524 = vpack.c.b16 %v500, %v499
        %v525 = vpack.c.b16 %v502, %v501
        %v526 = vpack.c.b16 %v504, %v503
        %v527 = vpack.c.b16 %v506, %v505
        %v528 = vpack.c.b16 %v508, %v507
        %v529 = vpack.c.b16 %v510, %v509
        %v530 = vpack.c.b16 %v512, %v511
        %v531 = vpack.c.b16 %v514, %v513
        %v532 = vpack.c.b16 %v516, %v515
        %v581 = vunpack.c.l.b16 %v399
        %v582 = vunpack.c.h.b16 %v399
        %v583 = vunpack.c.l.b16 %v400
        %v584 = vunpack.c.h.b16 %v400
        %v585 = vunpack.c.l.b16 %v401
        %v586 = vunpack.c.h.b16 %v401
        %v587 = vunpack.c.l.b16 %v402
        %v588 = vunpack.c.h.b16 %v402
        %v589 = vunpack.c.l.b16 %v403
        %v590 = vunpack.c.h.b16 %v403
        %v591 = vunpack.c.l.b16 %v404
        %v592 = vunpack.c.h.b16 %v404
        %v593 = vunpack.c.l.b16 %v405
        %v594 = vunpack.c.h.b16 %v405
        %v595 = vunpack.c.l.b16 %v406
        %v596 = vunpack.c.h.b16 %v406
        %v597 = vunpack.c.l.b16 %v407
        %v598 = vunpack.c.h.b16 %v407
        %v599 = vunpack.c.l.b16 %v408
        %v600 = vunpack.c.h.b16 %v408
        %v601 = vunpack.c.l.b16 %v409
        %v602 = vunpack.c.h.b16 %v409
        %v603 = vunpack.c.l.b16 %v410
        %v604 = vunpack.c.h.b16 %v410
        %v605 = vunpack.c.l.b16 %v411
        %v606 = vunpack.c.h.b16 %v411
        %v607 = vunpack.c.l.b16 %v412
        %v608 = vunpack.c.h.b16 %v412
        %v609 = vunpack.c.l.b16 %v413
        %v610 = vunpack.c.h.b16 %v413
        %v611 = vunpack.c.l.b16 %v414
        %v612 = vunpack.c.h.b16 %v414
        %v613 = vunpack.c.l.b16 %v415
        %v614 = vunpack.c.h.b16 %v415
        %v615 = vunpack.c.l.b16 %v416
        %v616 = vunpack.c.h.b16 %v416
        %v617 = vunpack.c.l.b16 %v417
        %v618 = vunpack.c.h.b16 %v417
        %v619 = vunpack.c.l.b16 %v418
        %v620 = vunpack.c.h.b16 %v418
        %v621 = vunpack.c.l.b16 %v419
        %v622 = vunpack.c.h.b16 %v419
        %v623 = vunpack.c.l.b16 %v420
        %v624 = vunpack.c.h.b16 %v420
        %v625 = vunpack.c.l.b16 %v421
        %v626 = vunpack.c.h.b16 %v421
        %v627 = vunpack.c.l.b16 %v422
        %v628 = vunpack.c.h.b16 %v422
        %v629 = vunpack.c.l.b16 %v423
        %v630 = vunpack.c.h.b16 %v423
        %v631 = vunpack.c.l.b16 %v424
        %v632 = vunpack.c.h.b16 %v424
        %v633 = vunpack.c.l.b16 %v425
        %v634 = vunpack.c.h.b16 %v425
        %v635 = vunpack.c.l.b16 %v426
        %v636 = vunpack.c.h.b16 %v426
        %v637 = vunpack.c.l.b16 %v427
        %v638 = vunpack.c.h.b16 %v427
        %v639 = vunpack.c.l.b16 %v428
        %v640 = vunpack.c.h.b16 %v428
        %v641 = vunpack.c.l.b16 %v429
        %v642 = vunpack.c.h.b16 %v429
        %v643 = vunpack.c.l.b16 %v430
        %v644 = vunpack.c.h.b16 %v430
        %v645 = vpack.c.b16 %v585, %v581
        %v646 = vpack.c.b16 %v586, %v582
        %v647 = vpack.c.b16 %v587, %v583
        %v648 = vpack.c.b16 %v588, %v584
        %v649 = vpack.c.b16 %v593, %v589
        %v650 = vpack.c.b16 %v594, %v590
        %v651 = vpack.c.b16 %v595, %v591
        %v652 = vpack.c.b16 %v596, %v592
        %v653 = vpack.c.b16 %v601, %v597
        %v654 = vpack.c.b16 %v602, %v598
        %v655 = vpack.c.b16 %v603, %v599
        %v656 = vpack.c.b16 %v604, %v600
        %v657 = vpack.c.b16 %v609, %v605
        %v658 = vpack.c.b16 %v610, %v606
        %v659 = vpack.c.b16 %v611, %v607
        %v660 = vpack.c.b16 %v612, %v608
        %v661 = vpack.c.b16 %v617, %v613
        %v662 = vpack.c.b16 %v618, %v614
        %v663 = vpack.c.b16 %v619, %v615
        %v664 = vpack.c.b16 %v620, %v616
        %v665 = vpack.c.b16 %v625, %v621
        %v666 = vpack.c.b16 %v626, %v622
        %v667 = vpack.c.b16 %v627, %v623
        %v668 = vpack.c.b16 %v628, %v624
        %v669 = vpack.c.b16 %v633, %v629
        %v670 = vpack.c.b16 %v634, %v630
        %v671 = vpack.c.b16 %v635, %v631
        %v672 = vpack.c.b16 %v636, %v632
        %v673 = vpack.c.b16 %v641, %v637
        %v674 = vpack.c.b16 %v642, %v638
        %v675 = vpack.c.b16 %v643, %v639
        %v676 = vpack.c.b16 %v644, %v640
        %709 = vmatprep.subr.bf16.mxu0 %v646
        %710 = vmatpush1.bf16.msra.mxu0 %v645
        %711 = vmatprep.subr.bf16.mxu0 %v650
        %712 = vmatpush1.bf16.msra.mxu0 %v649
        %713 = vmatprep.subr.bf16.mxu0 %v654
        %714 = vmatpush1.bf16.msra.mxu0 %v653
        %715 = vmatprep.subr.bf16.mxu0 %v658
        %716 = vmatpush1.bf16.msra.mxu0 %v657
        %717 = vmatprep.subr.bf16.mxu0 %v662
        %718 = vmatpush1.bf16.msra.mxu0 %v661
        %719 = vmatprep.subr.bf16.mxu0 %v666
        %720 = vmatpush1.bf16.msra.mxu0 %v665
        %721 = vmatprep.subr.bf16.mxu0 %v670
        %722 = vmatpush1.bf16.msra.mxu0 %v669
        %723 = vmatprep.subr.bf16.mxu0 %v674
        %724 = vmatpush1.bf16.msra.mxu0 %v673
        %725 = vmatprep.subr.bf16.mxu0 0
        %726 = vmatpush1.bf16.msra.mxu0 0
        %727 = vmatprep.subr.bf16.mxu0 0
        %728 = vmatpush1.bf16.msra.mxu0 0
        %729 = vmatprep.subr.bf16.mxu0 0
        %730 = vmatpush1.bf16.msra.mxu0 0
        %731 = vmatprep.subr.bf16.mxu0 0
        %732 = vmatpush1.bf16.msra.mxu0 0
        %733 = vmatprep.subr.bf16.mxu0 0
        %734 = vmatpush1.bf16.msra.mxu0 0
        %735 = vmatprep.subr.bf16.mxu0 0
        %736 = vmatpush1.bf16.msra.mxu0 0
        %737 = vmatprep.subr.bf16.mxu0 0
        %738 = vmatpush1.bf16.msra.mxu0 0
        %739 = vmatprep.subr.bf16.mxu0 0
        %740 = vmatpush1.bf16.msra.mxu0 0
        %741 = vmatprep.mubr.bf16.mxu0 0
        %742 = vmatmul.mubr.bf16.gmra.mrb[0].mxu0 %v517
        %v743 = vpop.f32.mrb[0].mxu0
        %v744 = vadd.f32 %v436, %v743
        %v745 = vpop.f32.mrb[0].mxu0
        %v746 = vadd.f32 %v440, %v745
        %v747 = vpop.f32.mrb[0].mxu0
        %v748 = vadd.f32 %v436, %v747
        %v749 = vpop.f32.mrb[0].mxu0
        %v750 = vadd.f32 %v440, %v749
        %751 = vmatprep.mubr.bf16.mxu0 0
        %752 = vmatmul.mubr.bf16.gmra.mrb[0].mxu0 %v518
        %v753 = vpop.f32.mrb[0].mxu0
        %v754 = vadd.f32 %v436, %v753
        %v755 = vpop.f32.mrb[0].mxu0
        %v756 = vadd.f32 %v440, %v755
        %v757 = vpop.f32.mrb[0].mxu0
        %v758 = vadd.f32 %v436, %v757
        %v759 = vpop.f32.mrb[0].mxu0
        %v760 = vadd.f32 %v440, %v759
        %761 = vmatprep.mubr.bf16.mxu0 0
        %762 = vmatmul.mubr.bf16.gmra.mrb[0].mxu0 %v519
        %v763 = vpop.f32.mrb[0].mxu0
        %v764 = vadd.f32 %v436, %v763
        %v765 = vpop.f32.mrb[0].mxu0
        %v766 = vadd.f32 %v440, %v765
        %v767 = vpop.f32.mrb[0].mxu0
        %v768 = vadd.f32 %v436, %v767
        %v769 = vpop.f32.mrb[0].mxu0
        %v770 = vadd.f32 %v440, %v769
        %771 = vmatprep.mubr.bf16.mxu0 0
        %772 = vmatmul.mubr.bf16.gmra.mrb[0].mxu0 %v520
        %v773 = vpop.f32.mrb[0].mxu0
        %v774 = vadd.f32 %v436, %v773
        %v775 = vpop.f32.mrb[0].mxu0
        %v776 = vadd.f32 %v440, %v775
        %v777 = vpop.f32.mrb[0].mxu0
        %v778 = vadd.f32 %v436, %v777
        %v779 = vpop.f32.mrb[0].mxu0
        %v780 = vadd.f32 %v440, %v779
        %781 = vmatprep.mubr.bf16.mxu0 0
        %782 = vmatmul.mubr.bf16.gmra.mrb[0].mxu0 %v521
        %v783 = vpop.f32.mrb[0].mxu0
        %v784 = vadd.f32 %v436, %v783
        %v785 = vpop.f32.mrb[0].mxu0
        %v786 = vadd.f32 %v440, %v785
        %v787 = vpop.f32.mrb[0].mxu0
        %v788 = vadd.f32 %v436, %v787
        %v789 = vpop.f32.mrb[0].mxu0
        %v790 = vadd.f32 %v440, %v789
        %791 = vmatprep.mubr.bf16.mxu0 0
        %792 = vmatmul.mubr.bf16.gmra.mrb[0].mxu0 %v522
        %v793 = vpop.f32.mrb[0].mxu0
        %v794 = vadd.f32 %v436, %v793
        %v795 = vpop.f32.mrb[0].mxu0
        %v796 = vadd.f32 %v440, %v795
        %v797 = vpop.f32.mrb[0].mxu0
        %v798 = vadd.f32 %v436, %v797
        %v799 = vpop.f32.mrb[0].mxu0
        %v800 = vadd.f32 %v440, %v799
        %801 = vmatprep.mubr.bf16.mxu0 0
        %802 = vmatmul.mubr.bf16.gmra.mrb[0].mxu0 %v523
        %v803 = vpop.f32.mrb[0].mxu0
        %v804 = vadd.f32 %v436, %v803
        %v805 = vpop.f32.mrb[0].mxu0
        %v806 = vadd.f32 %v440, %v805
        %v807 = vpop.f32.mrb[0].mxu0
        %v808 = vadd.f32 %v436, %v807
        %v809 = vpop.f32.mrb[0].mxu0
        %v810 = vadd.f32 %v440, %v809
        %811 = vmatprep.mubr.bf16.mxu0 0
        %812 = vmatmul.mubr.bf16.gmra.mrb[0].mxu0 %v524
        %v813 = vpop.f32.mrb[0].mxu0
        %v814 = vadd.f32 %v436, %v813
        %v815 = vpop.f32.mrb[0].mxu0
        %v816 = vadd.f32 %v440, %v815
        %v817 = vpop.f32.mrb[0].mxu0
        %v818 = vadd.f32 %v436, %v817
        %v819 = vpop.f32.mrb[0].mxu0
        %v820 = vadd.f32 %v440, %v819
        %821 = vmatprep.mubr.bf16.mxu0 0
        %822 = vmatmul.mubr.bf16.gmra.mrb[0].mxu0 %v525
        %v823 = vpop.f32.mrb[0].mxu0
        %v824 = vadd.f32 %v436, %v823
        %v825 = vpop.f32.mrb[0].mxu0
        %v826 = vadd.f32 %v440, %v825
        %v827 = vpop.f32.mrb[0].mxu0
        %v828 = vadd.f32 %v436, %v827
        %v829 = vpop.f32.mrb[0].mxu0
        %v830 = vadd.f32 %v440, %v829
        %831 = vmatprep.mubr.bf16.mxu0 0
        %832 = vmatmul.mubr.bf16.gmra.mrb[0].mxu0 %v526
        %v833 = vpop.f32.mrb[0].mxu0
        %v834 = vadd.f32 %v436, %v833
        %v835 = vpop.f32.mrb[0].mxu0
        %v836 = vadd.f32 %v440, %v835
        %v837 = vpop.f32.mrb[0].mxu0
        %v838 = vadd.f32 %v436, %v837
        %v839 = vpop.f32.mrb[0].mxu0
        %v840 = vadd.f32 %v440, %v839
        %841 = vmatprep.mubr.bf16.mxu0 0
        %842 = vmatmul.mubr.bf16.gmra.mrb[0].mxu0 %v527
        %v843 = vpop.f32.mrb[0].mxu0
        %v844 = vadd.f32 %v436, %v843
        %v845 = vpop.f32.mrb[0].mxu0
        %v846 = vadd.f32 %v440, %v845
        %v847 = vpop.f32.mrb[0].mxu0
        %v848 = vadd.f32 %v436, %v847
        %v849 = vpop.f32.mrb[0].mxu0
        %v850 = vadd.f32 %v440, %v849
        %851 = vmatprep.mubr.bf16.mxu0 0
        %852 = vmatmul.mubr.bf16.gmra.mrb[0].mxu0 %v528
        %v853 = vpop.f32.mrb[0].mxu0
        %v854 = vadd.f32 %v436, %v853
        %v855 = vpop.f32.mrb[0].mxu0
        %v856 = vadd.f32 %v440, %v855
        %v857 = vpop.f32.mrb[0].mxu0
        %v858 = vadd.f32 %v436, %v857
        %v859 = vpop.f32.mrb[0].mxu0
        %v860 = vadd.f32 %v440, %v859
        %861 = vmatprep.mubr.bf16.mxu0 0
        %862 = vmatmul.mubr.bf16.gmra.mrb[0].mxu0 %v529
        %v863 = vpop.f32.mrb[0].mxu0
        %v864 = vadd.f32 %v436, %v863
        %v865 = vpop.f32.mrb[0].mxu0
        %v866 = vadd.f32 %v440, %v865
        %v867 = vpop.f32.mrb[0].mxu0
        %v868 = vadd.f32 %v436, %v867
        %v869 = vpop.f32.mrb[0].mxu0
        %v870 = vadd.f32 %v440, %v869
        %871 = vmatprep.mubr.bf16.mxu0 0
        %872 = vmatmul.mubr.bf16.gmra.mrb[0].mxu0 %v530
        %v873 = vpop.f32.mrb[0].mxu0
        %v874 = vadd.f32 %v436, %v873
        %v875 = vpop.f32.mrb[0].mxu0
        %v876 = vadd.f32 %v440, %v875
        %v877 = vpop.f32.mrb[0].mxu0
        %v878 = vadd.f32 %v436, %v877
        %v879 = vpop.f32.mrb[0].mxu0
        %v880 = vadd.f32 %v440, %v879
        %881 = vmatprep.mubr.bf16.mxu0 0
        %882 = vmatmul.mubr.bf16.gmra.mrb[0].mxu0 %v531
        %v883 = vpop.f32.mrb[0].mxu0
        %v884 = vadd.f32 %v436, %v883
        %v885 = vpop.f32.mrb[0].mxu0
        %v886 = vadd.f32 %v440, %v885
        %v887 = vpop.f32.mrb[0].mxu0
        %v888 = vadd.f32 %v436, %v887
        %v889 = vpop.f32.mrb[0].mxu0
        %v890 = vadd.f32 %v440, %v889
        %891 = vmatprep.mubr.bf16.mxu0 0
        %892 = vmatmul.mubr.bf16.gmra.mrb[0].mxu0 %v532
        %v893 = vpop.f32.mrb[0].mxu0
        %v894 = vadd.f32 %v436, %v893
        %v895 = vpop.f32.mrb[0].mxu0
        %v896 = vadd.f32 %v440, %v895
        %v897 = vpop.f32.mrb[0].mxu0
        %v898 = vadd.f32 %v436, %v897
        %v899 = vpop.f32.mrb[0].mxu0
        %v900 = vadd.f32 %v440, %v899
        %901 = vdwg.mxu0
        %902 = vmatprep.subr.bf16.mxu0 %v648
        %903 = vmatpush1.bf16.msra.mxu0 %v647
        %904 = vmatprep.subr.bf16.mxu0 %v652
        %905 = vmatpush1.bf16.msra.mxu0 %v651
        %906 = vmatprep.subr.bf16.mxu0 %v656
        %907 = vmatpush1.bf16.msra.mxu0 %v655
        %908 = vmatprep.subr.bf16.mxu0 %v660
        %909 = vmatpush1.bf16.msra.mxu0 %v659
        %910 = vmatprep.subr.bf16.mxu0 %v664
        %911 = vmatpush1.bf16.msra.mxu0 %v663
        %912 = vmatprep.subr.bf16.mxu0 %v668
        %913 = vmatpush1.bf16.msra.mxu0 %v667
        %914 = vmatprep.subr.bf16.mxu0 %v672
        %915 = vmatpush1.bf16.msra.mxu0 %v671
        %916 = vmatprep.subr.bf16.mxu0 %v676
        %917 = vmatpush1.bf16.msra.mxu0 %v675
        %918 = vmatprep.subr.bf16.mxu0 0
        %919 = vmatpush1.bf16.msra.mxu0 0
        %920 = vmatprep.subr.bf16.mxu0 0
        %921 = vmatpush1.bf16.msra.mxu0 0
        %922 = vmatprep.subr.bf16.mxu0 0
        %923 = vmatpush1.bf16.msra.mxu0 0
        %924 = vmatprep.subr.bf16.mxu0 0
        %925 = vmatpush1.bf16.msra.mxu0 0
        %926 = vmatprep.subr.bf16.mxu0 0
        %927 = vmatpush1.bf16.msra.mxu0 0
        %928 = vmatprep.subr.bf16.mxu0 0
        %929 = vmatpush1.bf16.msra.mxu0 0
        %930 = vmatprep.subr.bf16.mxu0 0
        %931 = vmatpush1.bf16.msra.mxu0 0
        %932 = vmatprep.subr.bf16.mxu0 0
        %933 = vmatpush1.bf16.msra.mxu0 0
        %934 = vmatprep.mubr.bf16.mxu0 0
        %935 = vmatmul.mubr.bf16.gmra.mrb[0].mxu0 %v517
        %v936 = vpop.f32.mrb[0].mxu0
        %v937 = vadd.f32 %v444, %v936
        %v938 = vpop.f32.mrb[0].mxu0
        %v939 = vadd.f32 %v448, %v938
        %v940 = vpop.f32.mrb[0].mxu0
        %v941 = vadd.f32 %v444, %v940
        %v942 = vpop.f32.mrb[0].mxu0
        %v943 = vadd.f32 %v448, %v942
        %944 = vmatprep.mubr.bf16.mxu0 0
        %945 = vmatmul.mubr.bf16.gmra.mrb[0].mxu0 %v518
        %v946 = vpop.f32.mrb[0].mxu0
        %v947 = vadd.f32 %v444, %v946
        %v948 = vpop.f32.mrb[0].mxu0
        %v949 = vadd.f32 %v448, %v948
        %v950 = vpop.f32.mrb[0].mxu0
        %v951 = vadd.f32 %v444, %v950
        %v952 = vpop.f32.mrb[0].mxu0
        %v953 = vadd.f32 %v448, %v952
        %954 = vmatprep.mubr.bf16.mxu0 0
        %955 = vmatmul.mubr.bf16.gmra.mrb[0].mxu0 %v519
        %v956 = vpop.f32.mrb[0].mxu0
        %v957 = vadd.f32 %v444, %v956
        %v958 = vpop.f32.mrb[0].mxu0
        %v959 = vadd.f32 %v448, %v958
        %v960 = vpop.f32.mrb[0].mxu0
        %v961 = vadd.f32 %v444, %v960
        %v962 = vpop.f32.mrb[0].mxu0
        %v963 = vadd.f32 %v448, %v962
        %964 = vmatprep.mubr.bf16.mxu0 0
        %965 = vmatmul.mubr.bf16.gmra.mrb[0].mxu0 %v520
        %v966 = vpop.f32.mrb[0].mxu0
        %v967 = vadd.f32 %v444, %v966
        %v968 = vpop.f32.mrb[0].mxu0
        %v969 = vadd.f32 %v448, %v968
        %v970 = vpop.f32.mrb[0].mxu0
        %v971 = vadd.f32 %v444, %v970
        %v972 = vpop.f32.mrb[0].mxu0
        %v973 = vadd.f32 %v448, %v972
        %974 = vmatprep.mubr.bf16.mxu0 0
        %975 = vmatmul.mubr.bf16.gmra.mrb[0].mxu0 %v521
        %v976 = vpop.f32.mrb[0].mxu0
        %v977 = vadd.f32 %v444, %v976
        %v978 = vpop.f32.mrb[0].mxu0
        %v979 = vadd.f32 %v448, %v978
        %v980 = vpop.f32.mrb[0].mxu0
        %v981 = vadd.f32 %v444, %v980
        %v982 = vpop.f32.mrb[0].mxu0
        %v983 = vadd.f32 %v448, %v982
        %984 = vmatprep.mubr.bf16.mxu0 0
        %985 = vmatmul.mubr.bf16.gmra.mrb[0].mxu0 %v522
        %v986 = vpop.f32.mrb[0].mxu0
        %v987 = vadd.f32 %v444, %v986
        %v988 = vpop.f32.mrb[0].mxu0
        %v989 = vadd.f32 %v448, %v988
        %v990 = vpop.f32.mrb[0].mxu0
        %v991 = vadd.f32 %v444, %v990
        %v992 = vpop.f32.mrb[0].mxu0
        %v993 = vadd.f32 %v448, %v992
        %994 = vmatprep.mubr.bf16.mxu0 0
        %995 = vmatmul.mubr.bf16.gmra.mrb[0].mxu0 %v523
        %v996 = vpop.f32.mrb[0].mxu0
        %v997 = vadd.f32 %v444, %v996
        %v998 = vpop.f32.mrb[0].mxu0
        %v999 = vadd.f32 %v448, %v998
        %v1000 = vpop.f32.mrb[0].mxu0
        %v1001 = vadd.f32 %v444, %v1000
        %v1002 = vpop.f32.mrb[0].mxu0
        %v1003 = vadd.f32 %v448, %v1002
        %1004 = vmatprep.mubr.bf16.mxu0 0
        %1005 = vmatmul.mubr.bf16.gmra.mrb[0].mxu0 %v524
        %v1006 = vpop.f32.mrb[0].mxu0
        %v1007 = vadd.f32 %v444, %v1006
        %v1008 = vpop.f32.mrb[0].mxu0
        %v1009 = vadd.f32 %v448, %v1008
        %v1010 = vpop.f32.mrb[0].mxu0
        %v1011 = vadd.f32 %v444, %v1010
        %v1012 = vpop.f32.mrb[0].mxu0
        %v1013 = vadd.f32 %v448, %v1012
        %1014 = vmatprep.mubr.bf16.mxu0 0
        %1015 = vmatmul.mubr.bf16.gmra.mrb[0].mxu0 %v525
        %v1016 = vpop.f32.mrb[0].mxu0
        %v1017 = vadd.f32 %v444, %v1016
        %v1018 = vpop.f32.mrb[0].mxu0
        %v1019 = vadd.f32 %v448, %v1018
        %v1020 = vpop.f32.mrb[0].mxu0
        %v1021 = vadd.f32 %v444, %v1020
        %v1022 = vpop.f32.mrb[0].mxu0
        %v1023 = vadd.f32 %v448, %v1022
        %1024 = vmatprep.mubr.bf16.mxu0 0
        %1025 = vmatmul.mubr.bf16.gmra.mrb[0].mxu0 %v526
        %v1026 = vpop.f32.mrb[0].mxu0
        %v1027 = vadd.f32 %v444, %v1026
        %v1028 = vpop.f32.mrb[0].mxu0
        %v1029 = vadd.f32 %v448, %v1028
        %v1030 = vpop.f32.mrb[0].mxu0
        %v1031 = vadd.f32 %v444, %v1030
        %v1032 = vpop.f32.mrb[0].mxu0
        %v1033 = vadd.f32 %v448, %v1032
        %1034 = vmatprep.mubr.bf16.mxu0 0
        %1035 = vmatmul.mubr.bf16.gmra.mrb[0].mxu0 %v527
        %v1036 = vpop.f32.mrb[0].mxu0
        %v1037 = vadd.f32 %v444, %v1036
        %v1038 = vpop.f32.mrb[0].mxu0
        %v1039 = vadd.f32 %v448, %v1038
        %v1040 = vpop.f32.mrb[0].mxu0
        %v1041 = vadd.f32 %v444, %v1040
        %v1042 = vpop.f32.mrb[0].mxu0
        %v1043 = vadd.f32 %v448, %v1042
        %1044 = vmatprep.mubr.bf16.mxu0 0
        %1045 = vmatmul.mubr.bf16.gmra.mrb[0].mxu0 %v528
        %v1046 = vpop.f32.mrb[0].mxu0
        %v1047 = vadd.f32 %v444, %v1046
        %v1048 = vpop.f32.mrb[0].mxu0
        %v1049 = vadd.f32 %v448, %v1048
        %v1050 = vpop.f32.mrb[0].mxu0
        %v1051 = vadd.f32 %v444, %v1050
        %v1052 = vpop.f32.mrb[0].mxu0
        %v1053 = vadd.f32 %v448, %v1052
        %1054 = vmatprep.mubr.bf16.mxu0 0
        %1055 = vmatmul.mubr.bf16.gmra.mrb[0].mxu0 %v529
        %v1056 = vpop.f32.mrb[0].mxu0
        %v1057 = vadd.f32 %v444, %v1056
        %v1058 = vpop.f32.mrb[0].mxu0
        %v1059 = vadd.f32 %v448, %v1058
        %v1060 = vpop.f32.mrb[0].mxu0
        %v1061 = vadd.f32 %v444, %v1060
        %v1062 = vpop.f32.mrb[0].mxu0
        %v1063 = vadd.f32 %v448, %v1062
        %1064 = vmatprep.mubr.bf16.mxu0 0
        %1065 = vmatmul.mubr.bf16.gmra.mrb[0].mxu0 %v530
        %v1066 = vpop.f32.mrb[0].mxu0
        %v1067 = vadd.f32 %v444, %v1066
        %v1068 = vpop.f32.mrb[0].mxu0
        %v1069 = vadd.f32 %v448, %v1068
        %v1070 = vpop.f32.mrb[0].mxu0
        %v1071 = vadd.f32 %v444, %v1070
        %v1072 = vpop.f32.mrb[0].mxu0
        %v1073 = vadd.f32 %v448, %v1072
        %1074 = vmatprep.mubr.bf16.mxu0 0
        %1075 = vmatmul.mubr.bf16.gmra.mrb[0].mxu0 %v531
        %v1076 = vpop.f32.mrb[0].mxu0
        %v1077 = vadd.f32 %v444, %v1076
        %v1078 = vpop.f32.mrb[0].mxu0
        %v1079 = vadd.f32 %v448, %v1078
        %v1080 = vpop.f32.mrb[0].mxu0
        %v1081 = vadd.f32 %v444, %v1080
        %v1082 = vpop.f32.mrb[0].mxu0
        %v1083 = vadd.f32 %v448, %v1082
        %1084 = vmatprep.mubr.bf16.mxu0 0
        %1085 = vmatmul.mubr.bf16.gmra.mrb[0].mxu0 %v532
        %v1086 = vpop.f32.mrb[0].mxu0
        %v1087 = vadd.f32 %v444, %v1086
        %v1088 = vpop.f32.mrb[0].mxu0
        %v1089 = vadd.f32 %v448, %v1088
        %v1090 = vpop.f32.mrb[0].mxu0
        %v1091 = vadd.f32 %v444, %v1090
        %v1092 = vpop.f32.mrb[0].mxu0
        %v1093 = vadd.f32 %v448, %v1092
        %1094 = vdwg.mxu0
        %v1095 = vmax.f32 %v744, 0.0
        %v1096 = vmax.f32 %v746, 0.0
        %v1097 = vmax.f32 %v937, 0.0
        %v1098 = vmax.f32 %v939, 0.0
        %v1099 = vmax.f32 %v748, 0.0
        %v1100 = vmax.f32 %v750, 0.0
        %v1101 = vmax.f32 %v941, 0.0
        %v1102 = vmax.f32 %v943, 0.0
        %v1103 = vmax.f32 %v754, 0.0
        %v1104 = vmax.f32 %v756, 0.0
        %v1105 = vmax.f32 %v947, 0.0
        %v1106 = vmax.f32 %v949, 0.0
        %v1107 = vmax.f32 %v758, 0.0
        %v1108 = vmax.f32 %v760, 0.0
        %v1109 = vmax.f32 %v951, 0.0
        %v1110 = vmax.f32 %v953, 0.0
        %v1111 = vmax.f32 %v764, 0.0
        %v1112 = vmax.f32 %v766, 0.0
        %v1113 = vmax.f32 %v957, 0.0
        %v1114 = vmax.f32 %v959, 0.0
        %v1115 = vmax.f32 %v768, 0.0
        %v1116 = vmax.f32 %v770, 0.0
        %v1117 = vmax.f32 %v961, 0.0
        %v1118 = vmax.f32 %v963, 0.0
        %v1119 = vmax.f32 %v774, 0.0
        %v1120 = vmax.f32 %v776, 0.0
        %v1121 = vmax.f32 %v967, 0.0
        %v1122 = vmax.f32 %v969, 0.0
        %v1123 = vmax.f32 %v778, 0.0
        %v1124 = vmax.f32 %v780, 0.0
        %v1125 = vmax.f32 %v971, 0.0
        %v1126 = vmax.f32 %v973, 0.0
        %v1127 = vmax.f32 %v784, 0.0
        %v1128 = vmax.f32 %v786, 0.0
        %v1129 = vmax.f32 %v977, 0.0
        %v1130 = vmax.f32 %v979, 0.0
        %v1131 = vmax.f32 %v788, 0.0
        %v1132 = vmax.f32 %v790, 0.0
        %v1133 = vmax.f32 %v981, 0.0
        %v1134 = vmax.f32 %v983, 0.0
        %v1135 = vmax.f32 %v794, 0.0
        %v1136 = vmax.f32 %v796, 0.0
        %v1137 = vmax.f32 %v987, 0.0
        %v1138 = vmax.f32 %v989, 0.0
        %v1139 = vmax.f32 %v798, 0.0
        %v1140 = vmax.f32 %v800, 0.0
        %v1141 = vmax.f32 %v991, 0.0
        %v1142 = vmax.f32 %v993, 0.0
        %v1143 = vmax.f32 %v804, 0.0
        %v1144 = vmax.f32 %v806, 0.0
        %v1145 = vmax.f32 %v997, 0.0
        %v1146 = vmax.f32 %v999, 0.0
        %v1147 = vmax.f32 %v808, 0.0
        %v1148 = vmax.f32 %v810, 0.0
        %v1149 = vmax.f32 %v1001, 0.0
        %v1150 = vmax.f32 %v1003, 0.0
        %v1151 = vmax.f32 %v814, 0.0
        %v1152 = vmax.f32 %v816, 0.0
        %v1153 = vmax.f32 %v1007, 0.0
        %v1154 = vmax.f32 %v1009, 0.0
        %v1155 = vmax.f32 %v818, 0.0
        %v1156 = vmax.f32 %v820, 0.0
        %v1157 = vmax.f32 %v1011, 0.0
        %v1158 = vmax.f32 %v1013, 0.0
        %v1159 = vmax.f32 %v824, 0.0
        %v1160 = vmax.f32 %v826, 0.0
        %v1161 = vmax.f32 %v1017, 0.0
        %v1162 = vmax.f32 %v1019, 0.0
        %v1163 = vmax.f32 %v828, 0.0
        %v1164 = vmax.f32 %v830, 0.0
        %v1165 = vmax.f32 %v1021, 0.0
        %v1166 = vmax.f32 %v1023, 0.0
        %v1167 = vmax.f32 %v834, 0.0
        %v1168 = vmax.f32 %v836, 0.0
        %v1169 = vmax.f32 %v1027, 0.0
        %v1170 = vmax.f32 %v1029, 0.0
        %v1171 = vmax.f32 %v838, 0.0
        %v1172 = vmax.f32 %v840, 0.0
        %v1173 = vmax.f32 %v1031, 0.0
        %v1174 = vmax.f32 %v1033, 0.0
        %v1175 = vmax.f32 %v844, 0.0
        %v1176 = vmax.f32 %v846, 0.0
        %v1177 = vmax.f32 %v1037, 0.0
        %v1178 = vmax.f32 %v1039, 0.0
        %v1179 = vmax.f32 %v848, 0.0
        %v1180 = vmax.f32 %v850, 0.0
        %v1181 = vmax.f32 %v1041, 0.0
        %v1182 = vmax.f32 %v1043, 0.0
        %v1183 = vmax.f32 %v854, 0.0
        %v1184 = vmax.f32 %v856, 0.0
        %v1185 = vmax.f32 %v1047, 0.0
        %v1186 = vmax.f32 %v1049, 0.0
        %v1187 = vmax.f32 %v858, 0.0
        %v1188 = vmax.f32 %v860, 0.0
        %v1189 = vmax.f32 %v1051, 0.0
        %v1190 = vmax.f32 %v1053, 0.0
        %v1191 = vmax.f32 %v864, 0.0
        %v1192 = vmax.f32 %v866, 0.0
        %v1193 = vmax.f32 %v1057, 0.0
        %v1194 = vmax.f32 %v1059, 0.0
        %v1195 = vmax.f32 %v868, 0.0
        %v1196 = vmax.f32 %v870, 0.0
        %v1197 = vmax.f32 %v1061, 0.0
        %v1198 = vmax.f32 %v1063, 0.0
        %v1199 = vmax.f32 %v874, 0.0
        %v1200 = vmax.f32 %v876, 0.0
        %v1201 = vmax.f32 %v1067, 0.0
        %v1202 = vmax.f32 %v1069, 0.0
        %v1203 = vmax.f32 %v878, 0.0
        %v1204 = vmax.f32 %v880, 0.0
        %v1205 = vmax.f32 %v1071, 0.0
        %v1206 = vmax.f32 %v1073, 0.0
        %v1207 = vmax.f32 %v884, 0.0
        %v1208 = vmax.f32 %v886, 0.0
        %v1209 = vmax.f32 %v1077, 0.0
        %v1210 = vmax.f32 %v1079, 0.0
        %v1211 = vmax.f32 %v888, 0.0
        %v1212 = vmax.f32 %v890, 0.0
        %v1213 = vmax.f32 %v1081, 0.0
        %v1214 = vmax.f32 %v1083, 0.0
        %v1215 = vmax.f32 %v894, 0.0
        %v1216 = vmax.f32 %v896, 0.0
        %v1217 = vmax.f32 %v1087, 0.0
        %v1218 = vmax.f32 %v1089, 0.0
        %v1219 = vmax.f32 %v898, 0.0
        %v1220 = vmax.f32 %v900, 0.0
        %v1221 = vmax.f32 %v1091, 0.0
        %v1222 = vmax.f32 %v1093, 0.0
        %v1223 = vpack.c.bf16 %v1099, %v1095
        %v1224 = vpack.c.bf16 %v1100, %v1096
        %v1225 = vpack.c.bf16 %v1101, %v1097
        %v1226 = vpack.c.bf16 %v1102, %v1098
        %v1227 = vpack.c.bf16 %v1107, %v1103
        %v1228 = vpack.c.bf16 %v1108, %v1104
        %v1229 = vpack.c.bf16 %v1109, %v1105
        %v1230 = vpack.c.bf16 %v1110, %v1106
        %v1231 = vpack.c.bf16 %v1115, %v1111
        %v1232 = vpack.c.bf16 %v1116, %v1112
        %v1233 = vpack.c.bf16 %v1117, %v1113
        %v1234 = vpack.c.bf16 %v1118, %v1114
        %v1235 = vpack.c.bf16 %v1123, %v1119
        %v1236 = vpack.c.bf16 %v1124, %v1120
        %v1237 = vpack.c.bf16 %v1125, %v1121
        %v1238 = vpack.c.bf16 %v1126, %v1122
        %v1239 = vpack.c.bf16 %v1131, %v1127
        %v1240 = vpack.c.bf16 %v1132, %v1128
        %v1241 = vpack.c.bf16 %v1133, %v1129
        %v1242 = vpack.c.bf16 %v1134, %v1130
        %v1243 = vpack.c.bf16 %v1139, %v1135
        %v1244 = vpack.c.bf16 %v1140, %v1136
        %v1245 = vpack.c.bf16 %v1141, %v1137
        %v1246 = vpack.c.bf16 %v1142, %v1138
        %v1247 = vpack.c.bf16 %v1147, %v1143
        %v1248 = vpack.c.bf16 %v1148, %v1144
        %v1249 = vpack.c.bf16 %v1149, %v1145
        %v1250 = vpack.c.bf16 %v1150, %v1146
        %v1251 = vpack.c.bf16 %v1155, %v1151
        %v1252 = vpack.c.bf16 %v1156, %v1152
        %v1253 = vpack.c.bf16 %v1157, %v1153
        %v1254 = vpack.c.bf16 %v1158, %v1154
        %v1255 = vpack.c.bf16 %v1163, %v1159
        %v1256 = vpack.c.bf16 %v1164, %v1160
        %v1257 = vpack.c.bf16 %v1165, %v1161
        %v1258 = vpack.c.bf16 %v1166, %v1162
        %v1259 = vpack.c.bf16 %v1171, %v1167
        %v1260 = vpack.c.bf16 %v1172, %v1168
        %v1261 = vpack.c.bf16 %v1173, %v1169
        %v1262 = vpack.c.bf16 %v1174, %v1170
        %v1263 = vpack.c.bf16 %v1179, %v1175
        %v1264 = vpack.c.bf16 %v1180, %v1176
        %v1265 = vpack.c.bf16 %v1181, %v1177
        %v1266 = vpack.c.bf16 %v1182, %v1178
        %v1267 = vpack.c.bf16 %v1187, %v1183
        %v1268 = vpack.c.bf16 %v1188, %v1184
        %v1269 = vpack.c.bf16 %v1189, %v1185
        %v1270 = vpack.c.bf16 %v1190, %v1186
        %v1271 = vpack.c.bf16 %v1195, %v1191
        %v1272 = vpack.c.bf16 %v1196, %v1192
        %v1273 = vpack.c.bf16 %v1197, %v1193
        %v1274 = vpack.c.bf16 %v1198, %v1194
        %v1275 = vpack.c.bf16 %v1203, %v1199
        %v1276 = vpack.c.bf16 %v1204, %v1200
        %v1277 = vpack.c.bf16 %v1205, %v1201
        %v1278 = vpack.c.bf16 %v1206, %v1202
        %v1279 = vpack.c.bf16 %v1211, %v1207
        %v1280 = vpack.c.bf16 %v1212, %v1208
        %v1281 = vpack.c.bf16 %v1213, %v1209
        %v1282 = vpack.c.bf16 %v1214, %v1210
        %v1283 = vpack.c.bf16 %v1219, %v1215
        %v1284 = vpack.c.bf16 %v1220, %v1216
        %v1285 = vpack.c.bf16 %v1221, %v1217
        %v1286 = vpack.c.bf16 %v1222, %v1218
        %1287 = vst [vmem:[#allocation2] sm:$0xff] %v1223
        %1288 = vst [vmem:[#allocation2 + $0x8] sm:$0xff] %v1224
        %1289 = vst [vmem:[#allocation2 + $0x10] sm:$0xff] %v1225
        %1290 = vst [vmem:[#allocation2 + $0x18] sm:$0xff] %v1226
        %1291 = vst [vmem:[#allocation2 + $0x20] sm:$0xff] %v1227
        %1292 = vst [vmem:[#allocation2 + $0x28] sm:$0xff] %v1228
        %1293 = vst [vmem:[#allocation2 + $0x30] sm:$0xff] %v1229
        %1294 = vst [vmem:[#allocation2 + $0x38] sm:$0xff] %v1230
        %1295 = vst [vmem:[#allocation2 + $0x40] sm:$0xff] %v1231
        %1296 = vst [vmem:[#allocation2 + $0x48] sm:$0xff] %v1232
        %1297 = vst [vmem:[#allocation2 + $0x50] sm:$0xff] %v1233
        %1298 = vst [vmem:[#allocation2 + $0x58] sm:$0xff] %v1234
        %1299 = vst [vmem:[#allocation2 + $0x60] sm:$0xff] %v1235
        %1300 = vst [vmem:[#allocation2 + $0x68] sm:$0xff] %v1236
        %1301 = vst [vmem:[#allocation2 + $0x70] sm:$0xff] %v1237
        %1302 = vst [vmem:[#allocation2 + $0x78] sm:$0xff] %v1238
        %1303 = vst [vmem:[#allocation2 + $0x80] sm:$0xff] %v1239
        %1304 = vst [vmem:[#allocation2 + $0x88] sm:$0xff] %v1240
        %1305 = vst [vmem:[#allocation2 + $0x90] sm:$0xff] %v1241
        %1306 = vst [vmem:[#allocation2 + $0x98] sm:$0xff] %v1242
        %1307 = vst [vmem:[#allocation2 + $0xa0] sm:$0xff] %v1243
        %1308 = vst [vmem:[#allocation2 + $0xa8] sm:$0xff] %v1244
        %1309 = vst [vmem:[#allocation2 + $0xb0] sm:$0xff] %v1245
        %1310 = vst [vmem:[#allocation2 + $0xb8] sm:$0xff] %v1246
        %1311 = vst [vmem:[#allocation2 + $0xc0] sm:$0xff] %v1247
        %1312 = vst [vmem:[#allocation2 + $0xc8] sm:$0xff] %v1248
        %1313 = vst [vmem:[#allocation2 + $0xd0] sm:$0xff] %v1249
        %1314 = vst [vmem:[#allocation2 + $0xd8] sm:$0xff] %v1250
        %1315 = vst [vmem:[#allocation2 + $0xe0] sm:$0xff] %v1251
        %1316 = vst [vmem:[#allocation2 + $0xe8] sm:$0xff] %v1252
        %1317 = vst [vmem:[#allocation2 + $0xf0] sm:$0xff] %v1253
        %1318 = vst [vmem:[#allocation2 + $0xf8] sm:$0xff] %v1254
        %1319 = vst [vmem:[#allocation2 + $0x100] sm:$0xff] %v1255
        %1320 = vst [vmem:[#allocation2 + $0x108] sm:$0xff] %v1256
        %1321 = vst [vmem:[#allocation2 + $0x110] sm:$0xff] %v1257
        %1322 = vst [vmem:[#allocation2 + $0x118] sm:$0xff] %v1258
        %1323 = vst [vmem:[#allocation2 + $0x120] sm:$0xff] %v1259
        %1324 = vst [vmem:[#allocation2 + $0x128] sm:$0xff] %v1260
        %1325 = vst [vmem:[#allocation2 + $0x130] sm:$0xff] %v1261
        %1326 = vst [vmem:[#allocation2 + $0x138] sm:$0xff] %v1262
        %1327 = vst [vmem:[#allocation2 + $0x140] sm:$0xff] %v1263
        %1328 = vst [vmem:[#allocation2 + $0x148] sm:$0xff] %v1264
        %1329 = vst [vmem:[#allocation2 + $0x150] sm:$0xff] %v1265
        %1330 = vst [vmem:[#allocation2 + $0x158] sm:$0xff] %v1266
        %1331 = vst [vmem:[#allocation2 + $0x160] sm:$0xff] %v1267
        %1332 = vst [vmem:[#allocation2 + $0x168] sm:$0xff] %v1268
        %1333 = vst [vmem:[#allocation2 + $0x170] sm:$0xff] %v1269
        %1334 = vst [vmem:[#allocation2 + $0x178] sm:$0xff] %v1270
        %1335 = vst [vmem:[#allocation2 + $0x180] sm:$0xff] %v1271
        %1336 = vst [vmem:[#allocation2 + $0x188] sm:$0xff] %v1272
        %1337 = vst [vmem:[#allocation2 + $0x190] sm:$0xff] %v1273
        %1338 = vst [vmem:[#allocation2 + $0x198] sm:$0xff] %v1274
        %1339 = vst [vmem:[#allocation2 + $0x1a0] sm:$0xff] %v1275
        %1340 = vst [vmem:[#allocation2 + $0x1a8] sm:$0xff] %v1276
        %1341 = vst [vmem:[#allocation2 + $0x1b0] sm:$0xff] %v1277
        %1342 = vst [vmem:[#allocation2 + $0x1b8] sm:$0xff] %v1278
        %1343 = vst [vmem:[#allocation2 + $0x1c0] sm:$0xff] %v1279
        %1344 = vst [vmem:[#allocation2 + $0x1c8] sm:$0xff] %v1280
        %1345 = vst [vmem:[#allocation2 + $0x1d0] sm:$0xff] %v1281
        %1346 = vst [vmem:[#allocation2 + $0x1d8] sm:$0xff] %v1282
        %1347 = vst [vmem:[#allocation2 + $0x1e0] sm:$0xff] %v1283
        %1348 = vst [vmem:[#allocation2 + $0x1e8] sm:$0xff] %v1284
        %1349 = vst [vmem:[#allocation2 + $0x1f0] sm:$0xff] %v1285
        %1350 = vst [vmem:[#allocation2 + $0x1f8] sm:$0xff] %v1286
        loop: start=0, step=1, limit=22
        $region73: #{fully_connected7_forward.1} parent=47 // loop_pre_header
          _
        $region74: #{fully_connected7_forward.1} parent=47 // loop_header
          %s1352 = sphi 0, %s1356
          %p1353 = scmp.ge.s32.totalorder %s1352, 22
        $region75: #{fully_connected7_forward.1} parent=47 // loop_header_branch
          %1355 = sbr.rel (%p1353) target = $region79
        $region76: #{fully_connected7_forward.1} parent=47 // loop_body
          %v1357 = vld [vmem:[#allocation2] sm:$0xff]
          %v1358 = vld [vmem:[#allocation2 + $0x8] sm:$0xff]
          %v1359 = vld [vmem:[#allocation2 + $0x10] sm:$0xff]
          %v1360 = vld [vmem:[#allocation2 + $0x18] sm:$0xff]
          %v1361 = vld [vmem:[#allocation2 + $0x20] sm:$0xff]
          %v1362 = vld [vmem:[#allocation2 + $0x28] sm:$0xff]
          %v1363 = vld [vmem:[#allocation2 + $0x30] sm:$0xff]
          %v1364 = vld [vmem:[#allocation2 + $0x38] sm:$0xff]
          %v1365 = vld [vmem:[#allocation2 + $0x40] sm:$0xff]
          %v1366 = vld [vmem:[#allocation2 + $0x48] sm:$0xff]
          %v1367 = vld [vmem:[#allocation2 + $0x50] sm:$0xff]
          %v1368 = vld [vmem:[#allocation2 + $0x58] sm:$0xff]
          %v1369 = vld [vmem:[#allocation2 + $0x60] sm:$0xff]
          %v1370 = vld [vmem:[#allocation2 + $0x68] sm:$0xff]
          %v1371 = vld [vmem:[#allocation2 + $0x70] sm:$0xff]
          %v1372 = vld [vmem:[#allocation2 + $0x78] sm:$0xff]
          %v1373 = vld [vmem:[#allocation2 + $0x80] sm:$0xff]
          %v1374 = vld [vmem:[#allocation2 + $0x88] sm:$0xff]
          %v1375 = vld [vmem:[#allocation2 + $0x90] sm:$0xff]
          %v1376 = vld [vmem:[#allocation2 + $0x98] sm:$0xff]
          %v1377 = vld [vmem:[#allocation2 + $0xa0] sm:$0xff]
          %v1378 = vld [vmem:[#allocation2 + $0xa8] sm:$0xff]
          %v1379 = vld [vmem:[#allocation2 + $0xb0] sm:$0xff]
          %v1380 = vld [vmem:[#allocation2 + $0xb8] sm:$0xff]
          %v1381 = vld [vmem:[#allocation2 + $0xc0] sm:$0xff]
          %v1382 = vld [vmem:[#allocation2 + $0xc8] sm:$0xff]
          %v1383 = vld [vmem:[#allocation2 + $0xd0] sm:$0xff]
          %v1384 = vld [vmem:[#allocation2 + $0xd8] sm:$0xff]
          %v1385 = vld [vmem:[#allocation2 + $0xe0] sm:$0xff]
          %v1386 = vld [vmem:[#allocation2 + $0xe8] sm:$0xff]
          %v1387 = vld [vmem:[#allocation2 + $0xf0] sm:$0xff]
          %v1388 = vld [vmem:[#allocation2 + $0xf8] sm:$0xff]
          %v1389 = vld [vmem:[#allocation2 + $0x100] sm:$0xff]
          %v1390 = vld [vmem:[#allocation2 + $0x108] sm:$0xff]
          %v1391 = vld [vmem:[#allocation2 + $0x110] sm:$0xff]
          %v1392 = vld [vmem:[#allocation2 + $0x118] sm:$0xff]
          %v1393 = vld [vmem:[#allocation2 + $0x120] sm:$0xff]
          %v1394 = vld [vmem:[#allocation2 + $0x128] sm:$0xff]
          %v1395 = vld [vmem:[#allocation2 + $0x130] sm:$0xff]
          %v1396 = vld [vmem:[#allocation2 + $0x138] sm:$0xff]
          %v1397 = vld [vmem:[#allocation2 + $0x140] sm:$0xff]
          %v1398 = vld [vmem:[#allocation2 + $0x148] sm:$0xff]
          %v1399 = vld [vmem:[#allocation2 + $0x150] sm:$0xff]
          %v1400 = vld [vmem:[#allocation2 + $0x158] sm:$0xff]
          %v1401 = vld [vmem:[#allocation2 + $0x160] sm:$0xff]
          %v1402 = vld [vmem:[#allocation2 + $0x168] sm:$0xff]
          %v1403 = vld [vmem:[#allocation2 + $0x170] sm:$0xff]
          %v1404 = vld [vmem:[#allocation2 + $0x178] sm:$0xff]
          %v1405 = vld [vmem:[#allocation2 + $0x180] sm:$0xff]
          %v1406 = vld [vmem:[#allocation2 + $0x188] sm:$0xff]
          %v1407 = vld [vmem:[#allocation2 + $0x190] sm:$0xff]
          %v1408 = vld [vmem:[#allocation2 + $0x198] sm:$0xff]
          %v1409 = vld [vmem:[#allocation2 + $0x1a0] sm:$0xff]
          %v1410 = vld [vmem:[#allocation2 + $0x1a8] sm:$0xff]
          %v1411 = vld [vmem:[#allocation2 + $0x1b0] sm:$0xff]
          %v1412 = vld [vmem:[#allocation2 + $0x1b8] sm:$0xff]
          %v1413 = vld [vmem:[#allocation2 + $0x1c0] sm:$0xff]
          %v1414 = vld [vmem:[#allocation2 + $0x1c8] sm:$0xff]
          %v1415 = vld [vmem:[#allocation2 + $0x1d0] sm:$0xff]
          %v1416 = vld [vmem:[#allocation2 + $0x1d8] sm:$0xff]
          %v1417 = vld [vmem:[#allocation2 + $0x1e0] sm:$0xff]
          %v1418 = vld [vmem:[#allocation2 + $0x1e8] sm:$0xff]
          %v1419 = vld [vmem:[#allocation2 + $0x1f0] sm:$0xff]
          %v1420 = vld [vmem:[#allocation2 + $0x1f8] sm:$0xff]
          %s1421 = smul.u32 %s1352, 256
          %s1422 = smul.addr %s1421, 4
          %s1423 = scalar_lea.vmem [#allocation5], %s1422
          %v1424 = vld [vmem:[%s1423] sm:$0xff]
          %v1425 = vld [vmem:[%s1423 + $0x8] sm:$0xff]
          %v1426 = vld [vmem:[%s1423 + $0x10] sm:$0xff]
          %v1427 = vld [vmem:[%s1423 + $0x18] sm:$0xff]
          %v1428 = vld [vmem:[%s1423 + $0x20] sm:$0xff]
          %v1429 = vld [vmem:[%s1423 + $0x28] sm:$0xff]
          %v1430 = vld [vmem:[%s1423 + $0x30] sm:$0xff]
          %v1431 = vld [vmem:[%s1423 + $0x38] sm:$0xff]
          %v1432 = vld [vmem:[%s1423 + $0x40] sm:$0xff]
          %v1433 = vld [vmem:[%s1423 + $0x48] sm:$0xff]
          %v1434 = vld [vmem:[%s1423 + $0x50] sm:$0xff]
          %v1435 = vld [vmem:[%s1423 + $0x58] sm:$0xff]
          %v1436 = vld [vmem:[%s1423 + $0x60] sm:$0xff]
          %v1437 = vld [vmem:[%s1423 + $0x68] sm:$0xff]
          %v1438 = vld [vmem:[%s1423 + $0x70] sm:$0xff]
          %v1439 = vld [vmem:[%s1423 + $0x78] sm:$0xff]
          %v1440 = vld [vmem:[%s1423 + $0x80] sm:$0xff]
          %v1441 = vld [vmem:[%s1423 + $0x88] sm:$0xff]
          %v1442 = vld [vmem:[%s1423 + $0x90] sm:$0xff]
          %v1443 = vld [vmem:[%s1423 + $0x98] sm:$0xff]
          %v1444 = vld [vmem:[%s1423 + $0xa0] sm:$0xff]
          %v1445 = vld [vmem:[%s1423 + $0xa8] sm:$0xff]
          %v1446 = vld [vmem:[%s1423 + $0xb0] sm:$0xff]
          %v1447 = vld [vmem:[%s1423 + $0xb8] sm:$0xff]
          %v1448 = vld [vmem:[%s1423 + $0xc0] sm:$0xff]
          %v1449 = vld [vmem:[%s1423 + $0xc8] sm:$0xff]
          %v1450 = vld [vmem:[%s1423 + $0xd0] sm:$0xff]
          %v1451 = vld [vmem:[%s1423 + $0xd8] sm:$0xff]
          %v1452 = vld [vmem:[%s1423 + $0xe0] sm:$0xff]
          %v1453 = vld [vmem:[%s1423 + $0xe8] sm:$0xff]
          %v1454 = vld [vmem:[%s1423 + $0xf0] sm:$0xff]
          %v1455 = vld [vmem:[%s1423 + $0xf8] sm:$0xff]
          %v1456 = vld [vmem:[%s1423 + $0x100] sm:$0xff]
          %v1457 = vld [vmem:[%s1423 + $0x108] sm:$0xff]
          %v1458 = vld [vmem:[%s1423 + $0x110] sm:$0xff]
          %v1459 = vld [vmem:[%s1423 + $0x118] sm:$0xff]
          %v1460 = vld [vmem:[%s1423 + $0x120] sm:$0xff]
          %v1461 = vld [vmem:[%s1423 + $0x128] sm:$0xff]
          %v1462 = vld [vmem:[%s1423 + $0x130] sm:$0xff]
          %v1463 = vld [vmem:[%s1423 + $0x138] sm:$0xff]
          %v1464 = vld [vmem:[%s1423 + $0x140] sm:$0xff]
          %v1465 = vld [vmem:[%s1423 + $0x148] sm:$0xff]
          %v1466 = vld [vmem:[%s1423 + $0x150] sm:$0xff]
          %v1467 = vld [vmem:[%s1423 + $0x158] sm:$0xff]
          %v1468 = vld [vmem:[%s1423 + $0x160] sm:$0xff]
          %v1469 = vld [vmem:[%s1423 + $0x168] sm:$0xff]
          %v1470 = vld [vmem:[%s1423 + $0x170] sm:$0xff]
          %v1471 = vld [vmem:[%s1423 + $0x178] sm:$0xff]
          %v1472 = vld [vmem:[%s1423 + $0x180] sm:$0xff]
          %v1473 = vld [vmem:[%s1423 + $0x188] sm:$0xff]
          %v1474 = vld [vmem:[%s1423 + $0x190] sm:$0xff]
          %v1475 = vld [vmem:[%s1423 + $0x198] sm:$0xff]
          %v1476 = vld [vmem:[%s1423 + $0x1a0] sm:$0xff]
          %v1477 = vld [vmem:[%s1423 + $0x1a8] sm:$0xff]
          %v1478 = vld [vmem:[%s1423 + $0x1b0] sm:$0xff]
          %v1479 = vld [vmem:[%s1423 + $0x1b8] sm:$0xff]
          %v1480 = vld [vmem:[%s1423 + $0x1c0] sm:$0xff]
          %v1481 = vld [vmem:[%s1423 + $0x1c8] sm:$0xff]
          %v1482 = vld [vmem:[%s1423 + $0x1d0] sm:$0xff]
          %v1483 = vld [vmem:[%s1423 + $0x1d8] sm:$0xff]
          %v1484 = vld [vmem:[%s1423 + $0x1e0] sm:$0xff]
          %v1485 = vld [vmem:[%s1423 + $0x1e8] sm:$0xff]
          %v1486 = vld [vmem:[%s1423 + $0x1f0] sm:$0xff]
          %v1487 = vld [vmem:[%s1423 + $0x1f8] sm:$0xff]
          %v1488 = vld [vmem:[%s1423 + $0x200] sm:$0xff]
          %v1489 = vld [vmem:[%s1423 + $0x208] sm:$0xff]
          %v1490 = vld [vmem:[%s1423 + $0x210] sm:$0xff]
          %v1491 = vld [vmem:[%s1423 + $0x218] sm:$0xff]
          %v1492 = vld [vmem:[%s1423 + $0x220] sm:$0xff]
          %v1493 = vld [vmem:[%s1423 + $0x228] sm:$0xff]
          %v1494 = vld [vmem:[%s1423 + $0x230] sm:$0xff]
          %v1495 = vld [vmem:[%s1423 + $0x238] sm:$0xff]
          %v1496 = vld [vmem:[%s1423 + $0x240] sm:$0xff]
          %v1497 = vld [vmem:[%s1423 + $0x248] sm:$0xff]
          %v1498 = vld [vmem:[%s1423 + $0x250] sm:$0xff]
          %v1499 = vld [vmem:[%s1423 + $0x258] sm:$0xff]
          %v1500 = vld [vmem:[%s1423 + $0x260] sm:$0xff]
          %v1501 = vld [vmem:[%s1423 + $0x268] sm:$0xff]
          %v1502 = vld [vmem:[%s1423 + $0x270] sm:$0xff]
          %v1503 = vld [vmem:[%s1423 + $0x278] sm:$0xff]
          %v1504 = vld [vmem:[%s1423 + $0x280] sm:$0xff]
          %v1505 = vld [vmem:[%s1423 + $0x288] sm:$0xff]
          %v1506 = vld [vmem:[%s1423 + $0x290] sm:$0xff]
          %v1507 = vld [vmem:[%s1423 + $0x298] sm:$0xff]
          %v1508 = vld [vmem:[%s1423 + $0x2a0] sm:$0xff]
          %v1509 = vld [vmem:[%s1423 + $0x2a8] sm:$0xff]
          %v1510 = vld [vmem:[%s1423 + $0x2b0] sm:$0xff]
          %v1511 = vld [vmem:[%s1423 + $0x2b8] sm:$0xff]
          %v1512 = vld [vmem:[%s1423 + $0x2c0] sm:$0xff]
          %v1513 = vld [vmem:[%s1423 + $0x2c8] sm:$0xff]
          %v1514 = vld [vmem:[%s1423 + $0x2d0] sm:$0xff]
          %v1515 = vld [vmem:[%s1423 + $0x2d8] sm:$0xff]
          %v1516 = vld [vmem:[%s1423 + $0x2e0] sm:$0xff]
          %v1517 = vld [vmem:[%s1423 + $0x2e8] sm:$0xff]
          %v1518 = vld [vmem:[%s1423 + $0x2f0] sm:$0xff]
          %v1519 = vld [vmem:[%s1423 + $0x2f8] sm:$0xff]
          %v1520 = vld [vmem:[%s1423 + $0x300] sm:$0xff]
          %v1521 = vld [vmem:[%s1423 + $0x308] sm:$0xff]
          %v1522 = vld [vmem:[%s1423 + $0x310] sm:$0xff]
          %v1523 = vld [vmem:[%s1423 + $0x318] sm:$0xff]
          %v1524 = vld [vmem:[%s1423 + $0x320] sm:$0xff]
          %v1525 = vld [vmem:[%s1423 + $0x328] sm:$0xff]
          %v1526 = vld [vmem:[%s1423 + $0x330] sm:$0xff]
          %v1527 = vld [vmem:[%s1423 + $0x338] sm:$0xff]
          %v1528 = vld [vmem:[%s1423 + $0x340] sm:$0xff]
          %v1529 = vld [vmem:[%s1423 + $0x348] sm:$0xff]
          %v1530 = vld [vmem:[%s1423 + $0x350] sm:$0xff]
          %v1531 = vld [vmem:[%s1423 + $0x358] sm:$0xff]
          %v1532 = vld [vmem:[%s1423 + $0x360] sm:$0xff]
          %v1533 = vld [vmem:[%s1423 + $0x368] sm:$0xff]
          %v1534 = vld [vmem:[%s1423 + $0x370] sm:$0xff]
          %v1535 = vld [vmem:[%s1423 + $0x378] sm:$0xff]
          %v1536 = vld [vmem:[%s1423 + $0x380] sm:$0xff]
          %v1537 = vld [vmem:[%s1423 + $0x388] sm:$0xff]
          %v1538 = vld [vmem:[%s1423 + $0x390] sm:$0xff]
          %v1539 = vld [vmem:[%s1423 + $0x398] sm:$0xff]
          %v1540 = vld [vmem:[%s1423 + $0x3a0] sm:$0xff]
          %v1541 = vld [vmem:[%s1423 + $0x3a8] sm:$0xff]
          %v1542 = vld [vmem:[%s1423 + $0x3b0] sm:$0xff]
          %v1543 = vld [vmem:[%s1423 + $0x3b8] sm:$0xff]
          %v1544 = vld [vmem:[%s1423 + $0x3c0] sm:$0xff]
          %v1545 = vld [vmem:[%s1423 + $0x3c8] sm:$0xff]
          %v1546 = vld [vmem:[%s1423 + $0x3d0] sm:$0xff]
          %v1547 = vld [vmem:[%s1423 + $0x3d8] sm:$0xff]
          %v1548 = vld [vmem:[%s1423 + $0x3e0] sm:$0xff]
          %v1549 = vld [vmem:[%s1423 + $0x3e8] sm:$0xff]
          %v1550 = vld [vmem:[%s1423 + $0x3f0] sm:$0xff]
          %v1551 = vld [vmem:[%s1423 + $0x3f8] sm:$0xff]
          %s1552 = smul.u32 %s1352, 4
          %s1553 = scalar_lea.vmem [#allocation10], %s1552
          %v1554 = vld [vmem:[%s1553] sm:$0xf]
          %v1556 = vlaneseq
          %v1557 = vshrl.u32 %v1556, 7
          %v1558 = vsub.s32 0, %v1557
          %v1559 = vrot.slane %v1554, %v1558
          %v1560 = vlaneseq
          %v1561 = vshrl.u32 %v1560, 7
          %v1562 = vsub.s32 1, %v1561
          %v1563 = vrot.slane %v1554, %v1562
          %v1564 = vlaneseq
          %v1565 = vshrl.u32 %v1564, 7
          %v1566 = vsub.s32 2, %v1565
          %v1567 = vrot.slane %v1554, %v1566
          %v1568 = vlaneseq
          %v1569 = vshrl.u32 %v1568, 7
          %v1570 = vsub.s32 3, %v1569
          %v1571 = vrot.slane %v1554, %v1570
          %v1704 = vunpack.c.l.b16 %v1424
          %v1705 = vunpack.c.h.b16 %v1424
          %v1706 = vunpack.c.l.b16 %v1425
          %v1707 = vunpack.c.h.b16 %v1425
          %v1708 = vunpack.c.l.b16 %v1426
          %v1709 = vunpack.c.h.b16 %v1426
          %v1710 = vunpack.c.l.b16 %v1427
          %v1711 = vunpack.c.h.b16 %v1427
          %v1712 = vunpack.c.l.b16 %v1428
          %v1713 = vunpack.c.h.b16 %v1428
          %v1714 = vunpack.c.l.b16 %v1429
          %v1715 = vunpack.c.h.b16 %v1429
          %v1716 = vunpack.c.l.b16 %v1430
          %v1717 = vunpack.c.h.b16 %v1430
          %v1718 = vunpack.c.l.b16 %v1431
          %v1719 = vunpack.c.h.b16 %v1431
          %v1720 = vunpack.c.l.b16 %v1432
          %v1721 = vunpack.c.h.b16 %v1432
          %v1722 = vunpack.c.l.b16 %v1433
          %v1723 = vunpack.c.h.b16 %v1433
          %v1724 = vunpack.c.l.b16 %v1434
          %v1725 = vunpack.c.h.b16 %v1434
          %v1726 = vunpack.c.l.b16 %v1435
          %v1727 = vunpack.c.h.b16 %v1435
          %v1728 = vunpack.c.l.b16 %v1436
          %v1729 = vunpack.c.h.b16 %v1436
          %v1730 = vunpack.c.l.b16 %v1437
          %v1731 = vunpack.c.h.b16 %v1437
          %v1732 = vunpack.c.l.b16 %v1438
          %v1733 = vunpack.c.h.b16 %v1438
          %v1734 = vunpack.c.l.b16 %v1439
          %v1735 = vunpack.c.h.b16 %v1439
          %v1736 = vunpack.c.l.b16 %v1440
          %v1737 = vunpack.c.h.b16 %v1440
          %v1738 = vunpack.c.l.b16 %v1441
          %v1739 = vunpack.c.h.b16 %v1441
          %v1740 = vunpack.c.l.b16 %v1442
          %v1741 = vunpack.c.h.b16 %v1442
          %v1742 = vunpack.c.l.b16 %v1443
          %v1743 = vunpack.c.h.b16 %v1443
          %v1744 = vunpack.c.l.b16 %v1444
          %v1745 = vunpack.c.h.b16 %v1444
          %v1746 = vunpack.c.l.b16 %v1445
          %v1747 = vunpack.c.h.b16 %v1445
          %v1748 = vunpack.c.l.b16 %v1446
          %v1749 = vunpack.c.h.b16 %v1446
          %v1750 = vunpack.c.l.b16 %v1447
          %v1751 = vunpack.c.h.b16 %v1447
          %v1752 = vunpack.c.l.b16 %v1448
          %v1753 = vunpack.c.h.b16 %v1448
          %v1754 = vunpack.c.l.b16 %v1449
          %v1755 = vunpack.c.h.b16 %v1449
          %v1756 = vunpack.c.l.b16 %v1450
          %v1757 = vunpack.c.h.b16 %v1450
          %v1758 = vunpack.c.l.b16 %v1451
          %v1759 = vunpack.c.h.b16 %v1451
          %v1760 = vunpack.c.l.b16 %v1452
          %v1761 = vunpack.c.h.b16 %v1452
          %v1762 = vunpack.c.l.b16 %v1453
          %v1763 = vunpack.c.h.b16 %v1453
          %v1764 = vunpack.c.l.b16 %v1454
          %v1765 = vunpack.c.h.b16 %v1454
          %v1766 = vunpack.c.l.b16 %v1455
          %v1767 = vunpack.c.h.b16 %v1455
          %v1768 = vunpack.c.l.b16 %v1456
          %v1769 = vunpack.c.h.b16 %v1456
          %v1770 = vunpack.c.l.b16 %v1457
          %v1771 = vunpack.c.h.b16 %v1457
          %v1772 = vunpack.c.l.b16 %v1458
          %v1773 = vunpack.c.h.b16 %v1458
          %v1774 = vunpack.c.l.b16 %v1459
          %v1775 = vunpack.c.h.b16 %v1459
          %v1776 = vunpack.c.l.b16 %v1460
          %v1777 = vunpack.c.h.b16 %v1460
          %v1778 = vunpack.c.l.b16 %v1461
          %v1779 = vunpack.c.h.b16 %v1461
          %v1780 = vunpack.c.l.b16 %v1462
          %v1781 = vunpack.c.h.b16 %v1462
          %v1782 = vunpack.c.l.b16 %v1463
          %v1783 = vunpack.c.h.b16 %v1463
          %v1784 = vunpack.c.l.b16 %v1464
          %v1785 = vunpack.c.h.b16 %v1464
          %v1786 = vunpack.c.l.b16 %v1465
          %v1787 = vunpack.c.h.b16 %v1465
          %v1788 = vunpack.c.l.b16 %v1466
          %v1789 = vunpack.c.h.b16 %v1466
          %v1790 = vunpack.c.l.b16 %v1467
          %v1791 = vunpack.c.h.b16 %v1467
          %v1792 = vunpack.c.l.b16 %v1468
          %v1793 = vunpack.c.h.b16 %v1468
          %v1794 = vunpack.c.l.b16 %v1469
          %v1795 = vunpack.c.h.b16 %v1469
          %v1796 = vunpack.c.l.b16 %v1470
          %v1797 = vunpack.c.h.b16 %v1470
          %v1798 = vunpack.c.l.b16 %v1471
          %v1799 = vunpack.c.h.b16 %v1471
          %v1800 = vunpack.c.l.b16 %v1472
          %v1801 = vunpack.c.h.b16 %v1472
          %v1802 = vunpack.c.l.b16 %v1473
          %v1803 = vunpack.c.h.b16 %v1473
          %v1804 = vunpack.c.l.b16 %v1474
          %v1805 = vunpack.c.h.b16 %v1474
          %v1806 = vunpack.c.l.b16 %v1475
          %v1807 = vunpack.c.h.b16 %v1475
          %v1808 = vunpack.c.l.b16 %v1476
          %v1809 = vunpack.c.h.b16 %v1476
          %v1810 = vunpack.c.l.b16 %v1477
          %v1811 = vunpack.c.h.b16 %v1477
          %v1812 = vunpack.c.l.b16 %v1478
          %v1813 = vunpack.c.h.b16 %v1478
          %v1814 = vunpack.c.l.b16 %v1479
          %v1815 = vunpack.c.h.b16 %v1479
          %v1816 = vunpack.c.l.b16 %v1480
          %v1817 = vunpack.c.h.b16 %v1480
          %v1818 = vunpack.c.l.b16 %v1481
          %v1819 = vunpack.c.h.b16 %v1481
          %v1820 = vunpack.c.l.b16 %v1482
          %v1821 = vunpack.c.h.b16 %v1482
          %v1822 = vunpack.c.l.b16 %v1483
          %v1823 = vunpack.c.h.b16 %v1483
          %v1824 = vunpack.c.l.b16 %v1484
          %v1825 = vunpack.c.h.b16 %v1484
          %v1826 = vunpack.c.l.b16 %v1485
          %v1827 = vunpack.c.h.b16 %v1485
          %v1828 = vunpack.c.l.b16 %v1486
          %v1829 = vunpack.c.h.b16 %v1486
          %v1830 = vunpack.c.l.b16 %v1487
          %v1831 = vunpack.c.h.b16 %v1487
          %v1832 = vunpack.c.l.b16 %v1488
          %v1833 = vunpack.c.h.b16 %v1488
          %v1834 = vunpack.c.l.b16 %v1489
          %v1835 = vunpack.c.h.b16 %v1489
          %v1836 = vunpack.c.l.b16 %v1490
          %v1837 = vunpack.c.h.b16 %v1490
          %v1838 = vunpack.c.l.b16 %v1491
          %v1839 = vunpack.c.h.b16 %v1491
          %v1840 = vunpack.c.l.b16 %v1492
          %v1841 = vunpack.c.h.b16 %v1492
          %v1842 = vunpack.c.l.b16 %v1493
          %v1843 = vunpack.c.h.b16 %v1493
          %v1844 = vunpack.c.l.b16 %v1494
          %v1845 = vunpack.c.h.b16 %v1494
          %v1846 = vunpack.c.l.b16 %v1495
          %v1847 = vunpack.c.h.b16 %v1495
          %v1848 = vunpack.c.l.b16 %v1496
          %v1849 = vunpack.c.h.b16 %v1496
          %v1850 = vunpack.c.l.b16 %v1497
          %v1851 = vunpack.c.h.b16 %v1497
          %v1852 = vunpack.c.l.b16 %v1498
          %v1853 = vunpack.c.h.b16 %v1498
          %v1854 = vunpack.c.l.b16 %v1499
          %v1855 = vunpack.c.h.b16 %v1499
          %v1856 = vunpack.c.l.b16 %v1500
          %v1857 = vunpack.c.h.b16 %v1500
          %v1858 = vunpack.c.l.b16 %v1501
          %v1859 = vunpack.c.h.b16 %v1501
          %v1860 = vunpack.c.l.b16 %v1502
          %v1861 = vunpack.c.h.b16 %v1502
          %v1862 = vunpack.c.l.b16 %v1503
          %v1863 = vunpack.c.h.b16 %v1503
          %v1864 = vunpack.c.l.b16 %v1504
          %v1865 = vunpack.c.h.b16 %v1504
          %v1866 = vunpack.c.l.b16 %v1505
          %v1867 = vunpack.c.h.b16 %v1505
          %v1868 = vunpack.c.l.b16 %v1506
          %v1869 = vunpack.c.h.b16 %v1506
          %v1870 = vunpack.c.l.b16 %v1507
          %v1871 = vunpack.c.h.b16 %v1507
          %v1872 = vunpack.c.l.b16 %v1508
          %v1873 = vunpack.c.h.b16 %v1508
          %v1874 = vunpack.c.l.b16 %v1509
          %v1875 = vunpack.c.h.b16 %v1509
          %v1876 = vunpack.c.l.b16 %v1510
          %v1877 = vunpack.c.h.b16 %v1510
          %v1878 = vunpack.c.l.b16 %v1511
          %v1879 = vunpack.c.h.b16 %v1511
          %v1880 = vunpack.c.l.b16 %v1512
          %v1881 = vunpack.c.h.b16 %v1512
          %v1882 = vunpack.c.l.b16 %v1513
          %v1883 = vunpack.c.h.b16 %v1513
          %v1884 = vunpack.c.l.b16 %v1514
          %v1885 = vunpack.c.h.b16 %v1514
          %v1886 = vunpack.c.l.b16 %v1515
          %v1887 = vunpack.c.h.b16 %v1515
          %v1888 = vunpack.c.l.b16 %v1516
          %v1889 = vunpack.c.h.b16 %v1516
          %v1890 = vunpack.c.l.b16 %v1517
          %v1891 = vunpack.c.h.b16 %v1517
          %v1892 = vunpack.c.l.b16 %v1518
          %v1893 = vunpack.c.h.b16 %v1518
          %v1894 = vunpack.c.l.b16 %v1519
          %v1895 = vunpack.c.h.b16 %v1519
          %v1896 = vunpack.c.l.b16 %v1520
          %v1897 = vunpack.c.h.b16 %v1520
          %v1898 = vunpack.c.l.b16 %v1521
          %v1899 = vunpack.c.h.b16 %v1521
          %v1900 = vunpack.c.l.b16 %v1522
          %v1901 = vunpack.c.h.b16 %v1522
          %v1902 = vunpack.c.l.b16 %v1523
          %v1903 = vunpack.c.h.b16 %v1523
          %v1904 = vunpack.c.l.b16 %v1524
          %v1905 = vunpack.c.h.b16 %v1524
          %v1906 = vunpack.c.l.b16 %v1525
          %v1907 = vunpack.c.h.b16 %v1525
          %v1908 = vunpack.c.l.b16 %v1526
          %v1909 = vunpack.c.h.b16 %v1526
          %v1910 = vunpack.c.l.b16 %v1527
          %v1911 = vunpack.c.h.b16 %v1527
          %v1912 = vunpack.c.l.b16 %v1528
          %v1913 = vunpack.c.h.b16 %v1528
          %v1914 = vunpack.c.l.b16 %v1529
          %v1915 = vunpack.c.h.b16 %v1529
          %v1916 = vunpack.c.l.b16 %v1530
          %v1917 = vunpack.c.h.b16 %v1530
          %v1918 = vunpack.c.l.b16 %v1531
          %v1919 = vunpack.c.h.b16 %v1531
          %v1920 = vunpack.c.l.b16 %v1532
          %v1921 = vunpack.c.h.b16 %v1532
          %v1922 = vunpack.c.l.b16 %v1533
          %v1923 = vunpack.c.h.b16 %v1533
          %v1924 = vunpack.c.l.b16 %v1534
          %v1925 = vunpack.c.h.b16 %v1534
          %v1926 = vunpack.c.l.b16 %v1535
          %v1927 = vunpack.c.h.b16 %v1535
          %v1928 = vunpack.c.l.b16 %v1536
          %v1929 = vunpack.c.h.b16 %v1536
          %v1930 = vunpack.c.l.b16 %v1537
          %v1931 = vunpack.c.h.b16 %v1537
          %v1932 = vunpack.c.l.b16 %v1538
          %v1933 = vunpack.c.h.b16 %v1538
          %v1934 = vunpack.c.l.b16 %v1539
          %v1935 = vunpack.c.h.b16 %v1539
          %v1936 = vunpack.c.l.b16 %v1540
          %v1937 = vunpack.c.h.b16 %v1540
          %v1938 = vunpack.c.l.b16 %v1541
          %v1939 = vunpack.c.h.b16 %v1541
          %v1940 = vunpack.c.l.b16 %v1542
          %v1941 = vunpack.c.h.b16 %v1542
          %v1942 = vunpack.c.l.b16 %v1543
          %v1943 = vunpack.c.h.b16 %v1543
          %v1944 = vunpack.c.l.b16 %v1544
          %v1945 = vunpack.c.h.b16 %v1544
          %v1946 = vunpack.c.l.b16 %v1545
          %v1947 = vunpack.c.h.b16 %v1545
          %v1948 = vunpack.c.l.b16 %v1546
          %v1949 = vunpack.c.h.b16 %v1546
          %v1950 = vunpack.c.l.b16 %v1547
          %v1951 = vunpack.c.h.b16 %v1547
          %v1952 = vunpack.c.l.b16 %v1548
          %v1953 = vunpack.c.h.b16 %v1548
          %v1954 = vunpack.c.l.b16 %v1549
          %v1955 = vunpack.c.h.b16 %v1549
          %v1956 = vunpack.c.l.b16 %v1550
          %v1957 = vunpack.c.h.b16 %v1550
          %v1958 = vunpack.c.l.b16 %v1551
          %v1959 = vunpack.c.h.b16 %v1551
          %v1960 = vpack.c.b16 %v1708, %v1704
          %v1961 = vpack.c.b16 %v1709, %v1705
          %v1962 = vpack.c.b16 %v1710, %v1706
          %v1963 = vpack.c.b16 %v1711, %v1707
          %v1964 = vpack.c.b16 %v1716, %v1712
          %v1965 = vpack.c.b16 %v1717, %v1713
          %v1966 = vpack.c.b16 %v1718, %v1714
          %v1967 = vpack.c.b16 %v1719, %v1715
          %v1968 = vpack.c.b16 %v1724, %v1720
          %v1969 = vpack.c.b16 %v1725, %v1721
          %v1970 = vpack.c.b16 %v1726, %v1722
          %v1971 = vpack.c.b16 %v1727, %v1723
          %v1972 = vpack.c.b16 %v1732, %v1728
          %v1973 = vpack.c.b16 %v1733, %v1729
          %v1974 = vpack.c.b16 %v1734, %v1730
          %v1975 = vpack.c.b16 %v1735, %v1731
          %v1976 = vpack.c.b16 %v1740, %v1736
          %v1977 = vpack.c.b16 %v1741, %v1737
          %v1978 = vpack.c.b16 %v1742, %v1738
          %v1979 = vpack.c.b16 %v1743, %v1739
          %v1980 = vpack.c.b16 %v1748, %v1744
          %v1981 = vpack.c.b16 %v1749, %v1745
          %v1982 = vpack.c.b16 %v1750, %v1746
          %v1983 = vpack.c.b16 %v1751, %v1747
          %v1984 = vpack.c.b16 %v1756, %v1752
          %v1985 = vpack.c.b16 %v1757, %v1753
          %v1986 = vpack.c.b16 %v1758, %v1754
          %v1987 = vpack.c.b16 %v1759, %v1755
          %v1988 = vpack.c.b16 %v1764, %v1760
          %v1989 = vpack.c.b16 %v1765, %v1761
          %v1990 = vpack.c.b16 %v1766, %v1762
          %v1991 = vpack.c.b16 %v1767, %v1763
          %v1992 = vpack.c.b16 %v1772, %v1768
          %v1993 = vpack.c.b16 %v1773, %v1769
          %v1994 = vpack.c.b16 %v1774, %v1770
          %v1995 = vpack.c.b16 %v1775, %v1771
          %v1996 = vpack.c.b16 %v1780, %v1776
          %v1997 = vpack.c.b16 %v1781, %v1777
          %v1998 = vpack.c.b16 %v1782, %v1778
          %v1999 = vpack.c.b16 %v1783, %v1779
          %v2000 = vpack.c.b16 %v1788, %v1784
          %v2001 = vpack.c.b16 %v1789, %v1785
          %v2002 = vpack.c.b16 %v1790, %v1786
          %v2003 = vpack.c.b16 %v1791, %v1787
          %v2004 = vpack.c.b16 %v1796, %v1792
          %v2005 = vpack.c.b16 %v1797, %v1793
          %v2006 = vpack.c.b16 %v1798, %v1794
          %v2007 = vpack.c.b16 %v1799, %v1795
          %v2008 = vpack.c.b16 %v1804, %v1800
          %v2009 = vpack.c.b16 %v1805, %v1801
          %v2010 = vpack.c.b16 %v1806, %v1802
          %v2011 = vpack.c.b16 %v1807, %v1803
          %v2012 = vpack.c.b16 %v1812, %v1808
          %v2013 = vpack.c.b16 %v1813, %v1809
          %v2014 = vpack.c.b16 %v1814, %v1810
          %v2015 = vpack.c.b16 %v1815, %v1811
          %v2016 = vpack.c.b16 %v1820, %v1816
          %v2017 = vpack.c.b16 %v1821, %v1817
          %v2018 = vpack.c.b16 %v1822, %v1818
          %v2019 = vpack.c.b16 %v1823, %v1819
          %v2020 = vpack.c.b16 %v1828, %v1824
          %v2021 = vpack.c.b16 %v1829, %v1825
          %v2022 = vpack.c.b16 %v1830, %v1826
          %v2023 = vpack.c.b16 %v1831, %v1827
          %v2024 = vpack.c.b16 %v1836, %v1832
          %v2025 = vpack.c.b16 %v1837, %v1833
          %v2026 = vpack.c.b16 %v1838, %v1834
          %v2027 = vpack.c.b16 %v1839, %v1835
          %v2028 = vpack.c.b16 %v1844, %v1840
          %v2029 = vpack.c.b16 %v1845, %v1841
          %v2030 = vpack.c.b16 %v1846, %v1842
          %v2031 = vpack.c.b16 %v1847, %v1843
          %v2032 = vpack.c.b16 %v1852, %v1848
          %v2033 = vpack.c.b16 %v1853, %v1849
          %v2034 = vpack.c.b16 %v1854, %v1850
          %v2035 = vpack.c.b16 %v1855, %v1851
          %v2036 = vpack.c.b16 %v1860, %v1856
          %v2037 = vpack.c.b16 %v1861, %v1857
          %v2038 = vpack.c.b16 %v1862, %v1858
          %v2039 = vpack.c.b16 %v1863, %v1859
          %v2040 = vpack.c.b16 %v1868, %v1864
          %v2041 = vpack.c.b16 %v1869, %v1865
          %v2042 = vpack.c.b16 %v1870, %v1866
          %v2043 = vpack.c.b16 %v1871, %v1867
          %v2044 = vpack.c.b16 %v1876, %v1872
          %v2045 = vpack.c.b16 %v1877, %v1873
          %v2046 = vpack.c.b16 %v1878, %v1874
          %v2047 = vpack.c.b16 %v1879, %v1875
          %v2048 = vpack.c.b16 %v1884, %v1880
          %v2049 = vpack.c.b16 %v1885, %v1881
          %v2050 = vpack.c.b16 %v1886, %v1882
          %v2051 = vpack.c.b16 %v1887, %v1883
          %v2052 = vpack.c.b16 %v1892, %v1888
          %v2053 = vpack.c.b16 %v1893, %v1889
          %v2054 = vpack.c.b16 %v1894, %v1890
          %v2055 = vpack.c.b16 %v1895, %v1891
          %v2056 = vpack.c.b16 %v1900, %v1896
          %v2057 = vpack.c.b16 %v1901, %v1897
          %v2058 = vpack.c.b16 %v1902, %v1898
          %v2059 = vpack.c.b16 %v1903, %v1899
          %v2060 = vpack.c.b16 %v1908, %v1904
          %v2061 = vpack.c.b16 %v1909, %v1905
          %v2062 = vpack.c.b16 %v1910, %v1906
          %v2063 = vpack.c.b16 %v1911, %v1907
          %v2064 = vpack.c.b16 %v1916, %v1912
          %v2065 = vpack.c.b16 %v1917, %v1913
          %v2066 = vpack.c.b16 %v1918, %v1914
          %v2067 = vpack.c.b16 %v1919, %v1915
          %v2068 = vpack.c.b16 %v1924, %v1920
          %v2069 = vpack.c.b16 %v1925, %v1921
          %v2070 = vpack.c.b16 %v1926, %v1922
          %v2071 = vpack.c.b16 %v1927, %v1923
          %v2072 = vpack.c.b16 %v1932, %v1928
          %v2073 = vpack.c.b16 %v1933, %v1929
          %v2074 = vpack.c.b16 %v1934, %v1930
          %v2075 = vpack.c.b16 %v1935, %v1931
          %v2076 = vpack.c.b16 %v1940, %v1936
          %v2077 = vpack.c.b16 %v1941, %v1937
          %v2078 = vpack.c.b16 %v1942, %v1938
          %v2079 = vpack.c.b16 %v1943, %v1939
          %v2080 = vpack.c.b16 %v1948, %v1944
          %v2081 = vpack.c.b16 %v1949, %v1945
          %v2082 = vpack.c.b16 %v1950, %v1946
          %v2083 = vpack.c.b16 %v1951, %v1947
          %v2084 = vpack.c.b16 %v1956, %v1952
          %v2085 = vpack.c.b16 %v1957, %v1953
          %v2086 = vpack.c.b16 %v1958, %v1954
          %v2087 = vpack.c.b16 %v1959, %v1955
          %2216 = vmatprep.subr.bf16.mxu0 %v1961
          %2217 = vmatpush1.bf16.msra.mxu0 %v1960
          %2218 = vmatprep.subr.bf16.mxu0 %v1965
          %2219 = vmatpush1.bf16.msra.mxu0 %v1964
          %2220 = vmatprep.subr.bf16.mxu0 %v1969
          %2221 = vmatpush1.bf16.msra.mxu0 %v1968
          %2222 = vmatprep.subr.bf16.mxu0 %v1973
          %2223 = vmatpush1.bf16.msra.mxu0 %v1972
          %2224 = vmatprep.subr.bf16.mxu0 %v1977
          %2225 = vmatpush1.bf16.msra.mxu0 %v1976
          %2226 = vmatprep.subr.bf16.mxu0 %v1981
          %2227 = vmatpush1.bf16.msra.mxu0 %v1980
          %2228 = vmatprep.subr.bf16.mxu0 %v1985
          %2229 = vmatpush1.bf16.msra.mxu0 %v1984
          %2230 = vmatprep.subr.bf16.mxu0 %v1989
          %2231 = vmatpush1.bf16.msra.mxu0 %v1988
          %2232 = vmatprep.subr.bf16.mxu0 %v1993
          %2233 = vmatpush1.bf16.msra.mxu0 %v1992
          %2234 = vmatprep.subr.bf16.mxu0 %v1997
          %2235 = vmatpush1.bf16.msra.mxu0 %v1996
          %2236 = vmatprep.subr.bf16.mxu0 %v2001
          %2237 = vmatpush1.bf16.msra.mxu0 %v2000
          %2238 = vmatprep.subr.bf16.mxu0 %v2005
          %2239 = vmatpush1.bf16.msra.mxu0 %v2004
          %2240 = vmatprep.subr.bf16.mxu0 %v2009
          %2241 = vmatpush1.bf16.msra.mxu0 %v2008
          %2242 = vmatprep.subr.bf16.mxu0 %v2013
          %2243 = vmatpush1.bf16.msra.mxu0 %v2012
          %2244 = vmatprep.subr.bf16.mxu0 %v2017
          %2245 = vmatpush1.bf16.msra.mxu0 %v2016
          %2246 = vmatprep.subr.bf16.mxu0 %v2021
          %2247 = vmatpush1.bf16.msra.mxu0 %v2020
          %2248 = vmatprep.mubr.bf16.mxu0 %v1358
          %2249 = vmatmul.mubr.bf16.gmra.mrb[0].mxu0 %v1357
          %v2250 = vpop.f32.mrb[0].mxu0
          %v2251 = vadd.f32 %v1559, %v2250
          %v2252 = vpop.f32.mrb[0].mxu0
          %v2253 = vadd.f32 %v1563, %v2252
          %v2254 = vpop.f32.mrb[0].mxu0
          %v2255 = vadd.f32 %v1559, %v2254
          %v2256 = vpop.f32.mrb[0].mxu0
          %v2257 = vadd.f32 %v1563, %v2256
          %2258 = vmatprep.mubr.bf16.mxu0 %v1362
          %2259 = vmatmul.mubr.bf16.gmra.mrb[0].mxu0 %v1361
          %v2260 = vpop.f32.mrb[0].mxu0
          %v2261 = vadd.f32 %v1559, %v2260
          %v2262 = vpop.f32.mrb[0].mxu0
          %v2263 = vadd.f32 %v1563, %v2262
          %v2264 = vpop.f32.mrb[0].mxu0
          %v2265 = vadd.f32 %v1559, %v2264
          %v2266 = vpop.f32.mrb[0].mxu0
          %v2267 = vadd.f32 %v1563, %v2266
          %2268 = vmatprep.mubr.bf16.mxu0 %v1366
          %2269 = vmatmul.mubr.bf16.gmra.mrb[0].mxu0 %v1365
          %v2270 = vpop.f32.mrb[0].mxu0
          %v2271 = vadd.f32 %v1559, %v2270
          %v2272 = vpop.f32.mrb[0].mxu0
          %v2273 = vadd.f32 %v1563, %v2272
          %v2274 = vpop.f32.mrb[0].mxu0
          %v2275 = vadd.f32 %v1559, %v2274
          %v2276 = vpop.f32.mrb[0].mxu0
          %v2277 = vadd.f32 %v1563, %v2276
          %2278 = vmatprep.mubr.bf16.mxu0 %v1370
          %2279 = vmatmul.mubr.bf16.gmra.mrb[0].mxu0 %v1369
          %v2280 = vpop.f32.mrb[0].mxu0
          %v2281 = vadd.f32 %v1559, %v2280
          %v2282 = vpop.f32.mrb[0].mxu0
          %v2283 = vadd.f32 %v1563, %v2282
          %v2284 = vpop.f32.mrb[0].mxu0
          %v2285 = vadd.f32 %v1559, %v2284
          %v2286 = vpop.f32.mrb[0].mxu0
          %v2287 = vadd.f32 %v1563, %v2286
          %2288 = vmatprep.mubr.bf16.mxu0 %v1374
          %2289 = vmatmul.mubr.bf16.gmra.mrb[0].mxu0 %v1373
          %v2290 = vpop.f32.mrb[0].mxu0
          %v2291 = vadd.f32 %v1559, %v2290
          %v2292 = vpop.f32.mrb[0].mxu0
          %v2293 = vadd.f32 %v1563, %v2292
          %v2294 = vpop.f32.mrb[0].mxu0
          %v2295 = vadd.f32 %v1559, %v2294
          %v2296 = vpop.f32.mrb[0].mxu0
          %v2297 = vadd.f32 %v1563, %v2296
          %2298 = vmatprep.mubr.bf16.mxu0 %v1378
          %2299 = vmatmul.mubr.bf16.gmra.mrb[0].mxu0 %v1377
          %v2300 = vpop.f32.mrb[0].mxu0
          %v2301 = vadd.f32 %v1559, %v2300
          %v2302 = vpop.f32.mrb[0].mxu0
          %v2303 = vadd.f32 %v1563, %v2302
          %v2304 = vpop.f32.mrb[0].mxu0
          %v2305 = vadd.f32 %v1559, %v2304
          %v2306 = vpop.f32.mrb[0].mxu0
          %v2307 = vadd.f32 %v1563, %v2306
          %2308 = vmatprep.mubr.bf16.mxu0 %v1382
          %2309 = vmatmul.mubr.bf16.gmra.mrb[0].mxu0 %v1381
          %v2310 = vpop.f32.mrb[0].mxu0
          %v2311 = vadd.f32 %v1559, %v2310
          %v2312 = vpop.f32.mrb[0].mxu0
          %v2313 = vadd.f32 %v1563, %v2312
          %v2314 = vpop.f32.mrb[0].mxu0
          %v2315 = vadd.f32 %v1559, %v2314
          %v2316 = vpop.f32.mrb[0].mxu0
          %v2317 = vadd.f32 %v1563, %v2316
          %2318 = vmatprep.mubr.bf16.mxu0 %v1386
          %2319 = vmatmul.mubr.bf16.gmra.mrb[0].mxu0 %v1385
          %v2320 = vpop.f32.mrb[0].mxu0
          %v2321 = vadd.f32 %v1559, %v2320
          %v2322 = vpop.f32.mrb[0].mxu0
          %v2323 = vadd.f32 %v1563, %v2322
          %v2324 = vpop.f32.mrb[0].mxu0
          %v2325 = vadd.f32 %v1559, %v2324
          %v2326 = vpop.f32.mrb[0].mxu0
          %v2327 = vadd.f32 %v1563, %v2326
          %2328 = vmatprep.mubr.bf16.mxu0 %v1390
          %2329 = vmatmul.mubr.bf16.gmra.mrb[0].mxu0 %v1389
          %v2330 = vpop.f32.mrb[0].mxu0
          %v2331 = vadd.f32 %v1559, %v2330
          %v2332 = vpop.f32.mrb[0].mxu0
          %v2333 = vadd.f32 %v1563, %v2332
          %v2334 = vpop.f32.mrb[0].mxu0
          %v2335 = vadd.f32 %v1559, %v2334
          %v2336 = vpop.f32.mrb[0].mxu0
          %v2337 = vadd.f32 %v1563, %v2336
          %2338 = vmatprep.mubr.bf16.mxu0 %v1394
          %2339 = vmatmul.mubr.bf16.gmra.mrb[0].mxu0 %v1393
          %v2340 = vpop.f32.mrb[0].mxu0
          %v2341 = vadd.f32 %v1559, %v2340
          %v2342 = vpop.f32.mrb[0].mxu0
          %v2343 = vadd.f32 %v1563, %v2342
          %v2344 = vpop.f32.mrb[0].mxu0
          %v2345 = vadd.f32 %v1559, %v2344
          %v2346 = vpop.f32.mrb[0].mxu0
          %v2347 = vadd.f32 %v1563, %v2346
          %2348 = vmatprep.mubr.bf16.mxu0 %v1398
          %2349 = vmatmul.mubr.bf16.gmra.mrb[0].mxu0 %v1397
          %v2350 = vpop.f32.mrb[0].mxu0
          %v2351 = vadd.f32 %v1559, %v2350
          %v2352 = vpop.f32.mrb[0].mxu0
          %v2353 = vadd.f32 %v1563, %v2352
          %v2354 = vpop.f32.mrb[0].mxu0
          %v2355 = vadd.f32 %v1559, %v2354
          %v2356 = vpop.f32.mrb[0].mxu0
          %v2357 = vadd.f32 %v1563, %v2356
          %2358 = vmatprep.mubr.bf16.mxu0 %v1402
          %2359 = vmatmul.mubr.bf16.gmra.mrb[0].mxu0 %v1401
          %v2360 = vpop.f32.mrb[0].mxu0
          %v2361 = vadd.f32 %v1559, %v2360
          %v2362 = vpop.f32.mrb[0].mxu0
          %v2363 = vadd.f32 %v1563, %v2362
          %v2364 = vpop.f32.mrb[0].mxu0
          %v2365 = vadd.f32 %v1559, %v2364
          %v2366 = vpop.f32.mrb[0].mxu0
          %v2367 = vadd.f32 %v1563, %v2366
          %2368 = vmatprep.mubr.bf16.mxu0 %v1406
          %2369 = vmatmul.mubr.bf16.gmra.mrb[0].mxu0 %v1405
          %v2370 = vpop.f32.mrb[0].mxu0
          %v2371 = vadd.f32 %v1559, %v2370
          %v2372 = vpop.f32.mrb[0].mxu0
          %v2373 = vadd.f32 %v1563, %v2372
          %v2374 = vpop.f32.mrb[0].mxu0
          %v2375 = vadd.f32 %v1559, %v2374
          %v2376 = vpop.f32.mrb[0].mxu0
          %v2377 = vadd.f32 %v1563, %v2376
          %2378 = vmatprep.mubr.bf16.mxu0 %v1410
          %2379 = vmatmul.mubr.bf16.gmra.mrb[0].mxu0 %v1409
          %v2380 = vpop.f32.mrb[0].mxu0
          %v2381 = vadd.f32 %v1559, %v2380
          %v2382 = vpop.f32.mrb[0].mxu0
          %v2383 = vadd.f32 %v1563, %v2382
          %v2384 = vpop.f32.mrb[0].mxu0
          %v2385 = vadd.f32 %v1559, %v2384
          %v2386 = vpop.f32.mrb[0].mxu0
          %v2387 = vadd.f32 %v1563, %v2386
          %2388 = vmatprep.mubr.bf16.mxu0 %v1414
          %2389 = vmatmul.mubr.bf16.gmra.mrb[0].mxu0 %v1413
          %v2390 = vpop.f32.mrb[0].mxu0
          %v2391 = vadd.f32 %v1559, %v2390
          %v2392 = vpop.f32.mrb[0].mxu0
          %v2393 = vadd.f32 %v1563, %v2392
          %v2394 = vpop.f32.mrb[0].mxu0
          %v2395 = vadd.f32 %v1559, %v2394
          %v2396 = vpop.f32.mrb[0].mxu0
          %v2397 = vadd.f32 %v1563, %v2396
          %2398 = vmatprep.mubr.bf16.mxu0 %v1418
          %2399 = vmatmul.mubr.bf16.gmra.mrb[0].mxu0 %v1417
          %v2400 = vpop.f32.mrb[0].mxu0
          %v2401 = vadd.f32 %v1559, %v2400
          %v2402 = vpop.f32.mrb[0].mxu0
          %v2403 = vadd.f32 %v1563, %v2402
          %v2404 = vpop.f32.mrb[0].mxu0
          %v2405 = vadd.f32 %v1559, %v2404
          %v2406 = vpop.f32.mrb[0].mxu0
          %v2407 = vadd.f32 %v1563, %v2406
          %2408 = vdwg.mxu0
          %2409 = vmatprep.subr.bf16.mxu0 %v2025
          %2410 = vmatpush1.bf16.msra.mxu0 %v2024
          %2411 = vmatprep.subr.bf16.mxu0 %v2029
          %2412 = vmatpush1.bf16.msra.mxu0 %v2028
          %2413 = vmatprep.subr.bf16.mxu0 %v2033
          %2414 = vmatpush1.bf16.msra.mxu0 %v2032
          %2415 = vmatprep.subr.bf16.mxu0 %v2037
          %2416 = vmatpush1.bf16.msra.mxu0 %v2036
          %2417 = vmatprep.subr.bf16.mxu0 %v2041
          %2418 = vmatpush1.bf16.msra.mxu0 %v2040
          %2419 = vmatprep.subr.bf16.mxu0 %v2045
          %2420 = vmatpush1.bf16.msra.mxu0 %v2044
          %2421 = vmatprep.subr.bf16.mxu0 %v2049
          %2422 = vmatpush1.bf16.msra.mxu0 %v2048
          %2423 = vmatprep.subr.bf16.mxu0 %v2053
          %2424 = vmatpush1.bf16.msra.mxu0 %v2052
          %2425 = vmatprep.subr.bf16.mxu0 %v2057
          %2426 = vmatpush1.bf16.msra.mxu0 %v2056
          %2427 = vmatprep.subr.bf16.mxu0 %v2061
          %2428 = vmatpush1.bf16.msra.mxu0 %v2060
          %2429 = vmatprep.subr.bf16.mxu0 %v2065
          %2430 = vmatpush1.bf16.msra.mxu0 %v2064
          %2431 = vmatprep.subr.bf16.mxu0 %v2069
          %2432 = vmatpush1.bf16.msra.mxu0 %v2068
          %2433 = vmatprep.subr.bf16.mxu0 %v2073
          %2434 = vmatpush1.bf16.msra.mxu0 %v2072
          %2435 = vmatprep.subr.bf16.mxu0 %v2077
          %2436 = vmatpush1.bf16.msra.mxu0 %v2076
          %2437 = vmatprep.subr.bf16.mxu0 %v2081
          %2438 = vmatpush1.bf16.msra.mxu0 %v2080
          %2439 = vmatprep.subr.bf16.mxu0 %v2085
          %2440 = vmatpush1.bf16.msra.mxu0 %v2084
          %2441 = vmatprep.mubr.bf16.mxu0 %v1360
          %2442 = vmatmul.mubr.bf16.gmra.mrb[0].mxu0 %v1359
          %v2443 = vpop.f32.mrb[0].mxu0
          %v2444 = vadd.f32 %v2251, %v2443
          %v2445 = vpop.f32.mrb[0].mxu0
          %v2446 = vadd.f32 %v2253, %v2445
          %v2447 = vpop.f32.mrb[0].mxu0
          %v2448 = vadd.f32 %v2255, %v2447
          %v2449 = vpop.f32.mrb[0].mxu0
          %v2450 = vadd.f32 %v2257, %v2449
          %2451 = vmatprep.mubr.bf16.mxu0 %v1364
          %2452 = vmatmul.mubr.bf16.gmra.mrb[0].mxu0 %v1363
          %v2453 = vpop.f32.mrb[0].mxu0
          %v2454 = vadd.f32 %v2261, %v2453
          %v2455 = vpop.f32.mrb[0].mxu0
          %v2456 = vadd.f32 %v2263, %v2455
          %v2457 = vpop.f32.mrb[0].mxu0
          %v2458 = vadd.f32 %v2265, %v2457
          %v2459 = vpop.f32.mrb[0].mxu0
          %v2460 = vadd.f32 %v2267, %v2459
          %2461 = vmatprep.mubr.bf16.mxu0 %v1368
          %2462 = vmatmul.mubr.bf16.gmra.mrb[0].mxu0 %v1367
          %v2463 = vpop.f32.mrb[0].mxu0
          %v2464 = vadd.f32 %v2271, %v2463
          %v2465 = vpop.f32.mrb[0].mxu0
          %v2466 = vadd.f32 %v2273, %v2465
          %v2467 = vpop.f32.mrb[0].mxu0
          %v2468 = vadd.f32 %v2275, %v2467
          %v2469 = vpop.f32.mrb[0].mxu0
          %v2470 = vadd.f32 %v2277, %v2469
          %2471 = vmatprep.mubr.bf16.mxu0 %v1372
          %2472 = vmatmul.mubr.bf16.gmra.mrb[0].mxu0 %v1371
          %v2473 = vpop.f32.mrb[0].mxu0
          %v2474 = vadd.f32 %v2281, %v2473
          %v2475 = vpop.f32.mrb[0].mxu0
          %v2476 = vadd.f32 %v2283, %v2475
          %v2477 = vpop.f32.mrb[0].mxu0
          %v2478 = vadd.f32 %v2285, %v2477
          %v2479 = vpop.f32.mrb[0].mxu0
          %v2480 = vadd.f32 %v2287, %v2479
          %2481 = vmatprep.mubr.bf16.mxu0 %v1376
          %2482 = vmatmul.mubr.bf16.gmra.mrb[0].mxu0 %v1375
          %v2483 = vpop.f32.mrb[0].mxu0
          %v2484 = vadd.f32 %v2291, %v2483
          %v2485 = vpop.f32.mrb[0].mxu0
          %v2486 = vadd.f32 %v2293, %v2485
          %v2487 = vpop.f32.mrb[0].mxu0
          %v2488 = vadd.f32 %v2295, %v2487
          %v2489 = vpop.f32.mrb[0].mxu0
          %v2490 = vadd.f32 %v2297, %v2489
          %2491 = vmatprep.mubr.bf16.mxu0 %v1380
          %2492 = vmatmul.mubr.bf16.gmra.mrb[0].mxu0 %v1379
          %v2493 = vpop.f32.mrb[0].mxu0
          %v2494 = vadd.f32 %v2301, %v2493
          %v2495 = vpop.f32.mrb[0].mxu0
          %v2496 = vadd.f32 %v2303, %v2495
          %v2497 = vpop.f32.mrb[0].mxu0
          %v2498 = vadd.f32 %v2305, %v2497
          %v2499 = vpop.f32.mrb[0].mxu0
          %v2500 = vadd.f32 %v2307, %v2499
          %2501 = vmatprep.mubr.bf16.mxu0 %v1384
          %2502 = vmatmul.mubr.bf16.gmra.mrb[0].mxu0 %v1383
          %v2503 = vpop.f32.mrb[0].mxu0
          %v2504 = vadd.f32 %v2311, %v2503
          %v2505 = vpop.f32.mrb[0].mxu0
          %v2506 = vadd.f32 %v2313, %v2505
          %v2507 = vpop.f32.mrb[0].mxu0
          %v2508 = vadd.f32 %v2315, %v2507
          %v2509 = vpop.f32.mrb[0].mxu0
          %v2510 = vadd.f32 %v2317, %v2509
          %2511 = vmatprep.mubr.bf16.mxu0 %v1388
          %2512 = vmatmul.mubr.bf16.gmra.mrb[0].mxu0 %v1387
          %v2513 = vpop.f32.mrb[0].mxu0
          %v2514 = vadd.f32 %v2321, %v2513
          %v2515 = vpop.f32.mrb[0].mxu0
          %v2516 = vadd.f32 %v2323, %v2515
          %v2517 = vpop.f32.mrb[0].mxu0
          %v2518 = vadd.f32 %v2325, %v2517
          %v2519 = vpop.f32.mrb[0].mxu0
          %v2520 = vadd.f32 %v2327, %v2519
          %2521 = vmatprep.mubr.bf16.mxu0 %v1392
          %2522 = vmatmul.mubr.bf16.gmra.mrb[0].mxu0 %v1391
          %v2523 = vpop.f32.mrb[0].mxu0
          %v2524 = vadd.f32 %v2331, %v2523
          %v2525 = vpop.f32.mrb[0].mxu0
          %v2526 = vadd.f32 %v2333, %v2525
          %v2527 = vpop.f32.mrb[0].mxu0
          %v2528 = vadd.f32 %v2335, %v2527
          %v2529 = vpop.f32.mrb[0].mxu0
          %v2530 = vadd.f32 %v2337, %v2529
          %2531 = vmatprep.mubr.bf16.mxu0 %v1396
          %2532 = vmatmul.mubr.bf16.gmra.mrb[0].mxu0 %v1395
          %v2533 = vpop.f32.mrb[0].mxu0
          %v2534 = vadd.f32 %v2341, %v2533
          %v2535 = vpop.f32.mrb[0].mxu0
          %v2536 = vadd.f32 %v2343, %v2535
          %v2537 = vpop.f32.mrb[0].mxu0
          %v2538 = vadd.f32 %v2345, %v2537
          %v2539 = vpop.f32.mrb[0].mxu0
          %v2540 = vadd.f32 %v2347, %v2539
          %2541 = vmatprep.mubr.bf16.mxu0 %v1400
          %2542 = vmatmul.mubr.bf16.gmra.mrb[0].mxu0 %v1399
          %v2543 = vpop.f32.mrb[0].mxu0
          %v2544 = vadd.f32 %v2351, %v2543
          %v2545 = vpop.f32.mrb[0].mxu0
          %v2546 = vadd.f32 %v2353, %v2545
          %v2547 = vpop.f32.mrb[0].mxu0
          %v2548 = vadd.f32 %v2355, %v2547
          %v2549 = vpop.f32.mrb[0].mxu0
          %v2550 = vadd.f32 %v2357, %v2549
          %2551 = vmatprep.mubr.bf16.mxu0 %v1404
          %2552 = vmatmul.mubr.bf16.gmra.mrb[0].mxu0 %v1403
          %v2553 = vpop.f32.mrb[0].mxu0
          %v2554 = vadd.f32 %v2361, %v2553
          %v2555 = vpop.f32.mrb[0].mxu0
          %v2556 = vadd.f32 %v2363, %v2555
          %v2557 = vpop.f32.mrb[0].mxu0
          %v2558 = vadd.f32 %v2365, %v2557
          %v2559 = vpop.f32.mrb[0].mxu0
          %v2560 = vadd.f32 %v2367, %v2559
          %2561 = vmatprep.mubr.bf16.mxu0 %v1408
          %2562 = vmatmul.mubr.bf16.gmra.mrb[0].mxu0 %v1407
          %v2563 = vpop.f32.mrb[0].mxu0
          %v2564 = vadd.f32 %v2371, %v2563
          %v2565 = vpop.f32.mrb[0].mxu0
          %v2566 = vadd.f32 %v2373, %v2565
          %v2567 = vpop.f32.mrb[0].mxu0
          %v2568 = vadd.f32 %v2375, %v2567
          %v2569 = vpop.f32.mrb[0].mxu0
          %v2570 = vadd.f32 %v2377, %v2569
          %2571 = vmatprep.mubr.bf16.mxu0 %v1412
          %2572 = vmatmul.mubr.bf16.gmra.mrb[0].mxu0 %v1411
          %v2573 = vpop.f32.mrb[0].mxu0
          %v2574 = vadd.f32 %v2381, %v2573
          %v2575 = vpop.f32.mrb[0].mxu0
          %v2576 = vadd.f32 %v2383, %v2575
          %v2577 = vpop.f32.mrb[0].mxu0
          %v2578 = vadd.f32 %v2385, %v2577
          %v2579 = vpop.f32.mrb[0].mxu0
          %v2580 = vadd.f32 %v2387, %v2579
          %2581 = vmatprep.mubr.bf16.mxu0 %v1416
          %2582 = vmatmul.mubr.bf16.gmra.mrb[0].mxu0 %v1415
          %v2583 = vpop.f32.mrb[0].mxu0
          %v2584 = vadd.f32 %v2391, %v2583
          %v2585 = vpop.f32.mrb[0].mxu0
          %v2586 = vadd.f32 %v2393, %v2585
          %v2587 = vpop.f32.mrb[0].mxu0
          %v2588 = vadd.f32 %v2395, %v2587
          %v2589 = vpop.f32.mrb[0].mxu0
          %v2590 = vadd.f32 %v2397, %v2589
          %2591 = vmatprep.mubr.bf16.mxu0 %v1420
          %2592 = vmatmul.mubr.bf16.gmra.mrb[0].mxu0 %v1419
          %v2593 = vpop.f32.mrb[0].mxu0
          %v2594 = vadd.f32 %v2401, %v2593
          %v2595 = vpop.f32.mrb[0].mxu0
          %v2596 = vadd.f32 %v2403, %v2595
          %v2597 = vpop.f32.mrb[0].mxu0
          %v2598 = vadd.f32 %v2405, %v2597
          %v2599 = vpop.f32.mrb[0].mxu0
          %v2600 = vadd.f32 %v2407, %v2599
          %2601 = vdwg.mxu0
          %2602 = vmatprep.subr.bf16.mxu0 %v1963
          %2603 = vmatpush1.bf16.msra.mxu0 %v1962
          %2604 = vmatprep.subr.bf16.mxu0 %v1967
          %2605 = vmatpush1.bf16.msra.mxu0 %v1966
          %2606 = vmatprep.subr.bf16.mxu0 %v1971
          %2607 = vmatpush1.bf16.msra.mxu0 %v1970
          %2608 = vmatprep.subr.bf16.mxu0 %v1975
          %2609 = vmatpush1.bf16.msra.mxu0 %v1974
          %2610 = vmatprep.subr.bf16.mxu0 %v1979
          %2611 = vmatpush1.bf16.msra.mxu0 %v1978
          %2612 = vmatprep.subr.bf16.mxu0 %v1983
          %2613 = vmatpush1.bf16.msra.mxu0 %v1982
          %2614 = vmatprep.subr.bf16.mxu0 %v1987
          %2615 = vmatpush1.bf16.msra.mxu0 %v1986
          %2616 = vmatprep.subr.bf16.mxu0 %v1991
          %2617 = vmatpush1.bf16.msra.mxu0 %v1990
          %2618 = vmatprep.subr.bf16.mxu0 %v1995
          %2619 = vmatpush1.bf16.msra.mxu0 %v1994
          %2620 = vmatprep.subr.bf16.mxu0 %v1999
          %2621 = vmatpush1.bf16.msra.mxu0 %v1998
          %2622 = vmatprep.subr.bf16.mxu0 %v2003
          %2623 = vmatpush1.bf16.msra.mxu0 %v2002
          %2624 = vmatprep.subr.bf16.mxu0 %v2007
          %2625 = vmatpush1.bf16.msra.mxu0 %v2006
          %2626 = vmatprep.subr.bf16.mxu0 %v2011
          %2627 = vmatpush1.bf16.msra.mxu0 %v2010
          %2628 = vmatprep.subr.bf16.mxu0 %v2015
          %2629 = vmatpush1.bf16.msra.mxu0 %v2014
          %2630 = vmatprep.subr.bf16.mxu0 %v2019
          %2631 = vmatpush1.bf16.msra.mxu0 %v2018
          %2632 = vmatprep.subr.bf16.mxu0 %v2023
          %2633 = vmatpush1.bf16.msra.mxu0 %v2022
          %2634 = vmatprep.mubr.bf16.mxu0 %v1358
          %2635 = vmatmul.mubr.bf16.gmra.mrb[0].mxu0 %v1357
          %v2636 = vpop.f32.mrb[0].mxu0
          %v2637 = vadd.f32 %v1567, %v2636
          %v2638 = vpop.f32.mrb[0].mxu0
          %v2639 = vadd.f32 %v1571, %v2638
          %v2640 = vpop.f32.mrb[0].mxu0
          %v2641 = vadd.f32 %v1567, %v2640
          %v2642 = vpop.f32.mrb[0].mxu0
          %v2643 = vadd.f32 %v1571, %v2642
          %2644 = vmatprep.mubr.bf16.mxu0 %v1362
          %2645 = vmatmul.mubr.bf16.gmra.mrb[0].mxu0 %v1361
          %v2646 = vpop.f32.mrb[0].mxu0
          %v2647 = vadd.f32 %v1567, %v2646
          %v2648 = vpop.f32.mrb[0].mxu0
          %v2649 = vadd.f32 %v1571, %v2648
          %v2650 = vpop.f32.mrb[0].mxu0
          %v2651 = vadd.f32 %v1567, %v2650
          %v2652 = vpop.f32.mrb[0].mxu0
          %v2653 = vadd.f32 %v1571, %v2652
          %2654 = vmatprep.mubr.bf16.mxu0 %v1366
          %2655 = vmatmul.mubr.bf16.gmra.mrb[0].mxu0 %v1365
          %v2656 = vpop.f32.mrb[0].mxu0
          %v2657 = vadd.f32 %v1567, %v2656
          %v2658 = vpop.f32.mrb[0].mxu0
          %v2659 = vadd.f32 %v1571, %v2658
          %v2660 = vpop.f32.mrb[0].mxu0
          %v2661 = vadd.f32 %v1567, %v2660
          %v2662 = vpop.f32.mrb[0].mxu0
          %v2663 = vadd.f32 %v1571, %v2662
          %2664 = vmatprep.mubr.bf16.mxu0 %v1370
          %2665 = vmatmul.mubr.bf16.gmra.mrb[0].mxu0 %v1369
          %v2666 = vpop.f32.mrb[0].mxu0
          %v2667 = vadd.f32 %v1567, %v2666
          %v2668 = vpop.f32.mrb[0].mxu0
          %v2669 = vadd.f32 %v1571, %v2668
          %v2670 = vpop.f32.mrb[0].mxu0
          %v2671 = vadd.f32 %v1567, %v2670
          %v2672 = vpop.f32.mrb[0].mxu0
          %v2673 = vadd.f32 %v1571, %v2672
          %2674 = vmatprep.mubr.bf16.mxu0 %v1374
          %2675 = vmatmul.mubr.bf16.gmra.mrb[0].mxu0 %v1373
          %v2676 = vpop.f32.mrb[0].mxu0
          %v2677 = vadd.f32 %v1567, %v2676
          %v2678 = vpop.f32.mrb[0].mxu0
          %v2679 = vadd.f32 %v1571, %v2678
          %v2680 = vpop.f32.mrb[0].mxu0
          %v2681 = vadd.f32 %v1567, %v2680
          %v2682 = vpop.f32.mrb[0].mxu0
          %v2683 = vadd.f32 %v1571, %v2682
          %2684 = vmatprep.mubr.bf16.mxu0 %v1378
          %2685 = vmatmul.mubr.bf16.gmra.mrb[0].mxu0 %v1377
          %v2686 = vpop.f32.mrb[0].mxu0
          %v2687 = vadd.f32 %v1567, %v2686
          %v2688 = vpop.f32.mrb[0].mxu0
          %v2689 = vadd.f32 %v1571, %v2688
          %v2690 = vpop.f32.mrb[0].mxu0
          %v2691 = vadd.f32 %v1567, %v2690
          %v2692 = vpop.f32.mrb[0].mxu0
          %v2693 = vadd.f32 %v1571, %v2692
          %2694 = vmatprep.mubr.bf16.mxu0 %v1382
          %2695 = vmatmul.mubr.bf16.gmra.mrb[0].mxu0 %v1381
          %v2696 = vpop.f32.mrb[0].mxu0
          %v2697 = vadd.f32 %v1567, %v2696
          %v2698 = vpop.f32.mrb[0].mxu0
          %v2699 = vadd.f32 %v1571, %v2698
          %v2700 = vpop.f32.mrb[0].mxu0
          %v2701 = vadd.f32 %v1567, %v2700
          %v2702 = vpop.f32.mrb[0].mxu0
          %v2703 = vadd.f32 %v1571, %v2702
          %2704 = vmatprep.mubr.bf16.mxu0 %v1386
          %2705 = vmatmul.mubr.bf16.gmra.mrb[0].mxu0 %v1385
          %v2706 = vpop.f32.mrb[0].mxu0
          %v2707 = vadd.f32 %v1567, %v2706
          %v2708 = vpop.f32.mrb[0].mxu0
          %v2709 = vadd.f32 %v1571, %v2708
          %v2710 = vpop.f32.mrb[0].mxu0
          %v2711 = vadd.f32 %v1567, %v2710
          %v2712 = vpop.f32.mrb[0].mxu0
          %v2713 = vadd.f32 %v1571, %v2712
          %2714 = vmatprep.mubr.bf16.mxu0 %v1390
          %2715 = vmatmul.mubr.bf16.gmra.mrb[0].mxu0 %v1389
          %v2716 = vpop.f32.mrb[0].mxu0
          %v2717 = vadd.f32 %v1567, %v2716
          %v2718 = vpop.f32.mrb[0].mxu0
          %v2719 = vadd.f32 %v1571, %v2718
          %v2720 = vpop.f32.mrb[0].mxu0
          %v2721 = vadd.f32 %v1567, %v2720
          %v2722 = vpop.f32.mrb[0].mxu0
          %v2723 = vadd.f32 %v1571, %v2722
          %2724 = vmatprep.mubr.bf16.mxu0 %v1394
          %2725 = vmatmul.mubr.bf16.gmra.mrb[0].mxu0 %v1393
          %v2726 = vpop.f32.mrb[0].mxu0
          %v2727 = vadd.f32 %v1567, %v2726
          %v2728 = vpop.f32.mrb[0].mxu0
          %v2729 = vadd.f32 %v1571, %v2728
          %v2730 = vpop.f32.mrb[0].mxu0
          %v2731 = vadd.f32 %v1567, %v2730
          %v2732 = vpop.f32.mrb[0].mxu0
          %v2733 = vadd.f32 %v1571, %v2732
          %2734 = vmatprep.mubr.bf16.mxu0 %v1398
          %2735 = vmatmul.mubr.bf16.gmra.mrb[0].mxu0 %v1397
          %v2736 = vpop.f32.mrb[0].mxu0
          %v2737 = vadd.f32 %v1567, %v2736
          %v2738 = vpop.f32.mrb[0].mxu0
          %v2739 = vadd.f32 %v1571, %v2738
          %v2740 = vpop.f32.mrb[0].mxu0
          %v2741 = vadd.f32 %v1567, %v2740
          %v2742 = vpop.f32.mrb[0].mxu0
          %v2743 = vadd.f32 %v1571, %v2742
          %2744 = vmatprep.mubr.bf16.mxu0 %v1402
          %2745 = vmatmul.mubr.bf16.gmra.mrb[0].mxu0 %v1401
          %v2746 = vpop.f32.mrb[0].mxu0
          %v2747 = vadd.f32 %v1567, %v2746
          %v2748 = vpop.f32.mrb[0].mxu0
          %v2749 = vadd.f32 %v1571, %v2748
          %v2750 = vpop.f32.mrb[0].mxu0
          %v2751 = vadd.f32 %v1567, %v2750
          %v2752 = vpop.f32.mrb[0].mxu0
          %v2753 = vadd.f32 %v1571, %v2752
          %2754 = vmatprep.mubr.bf16.mxu0 %v1406
          %2755 = vmatmul.mubr.bf16.gmra.mrb[0].mxu0 %v1405
          %v2756 = vpop.f32.mrb[0].mxu0
          %v2757 = vadd.f32 %v1567, %v2756
          %v2758 = vpop.f32.mrb[0].mxu0
          %v2759 = vadd.f32 %v1571, %v2758
          %v2760 = vpop.f32.mrb[0].mxu0
          %v2761 = vadd.f32 %v1567, %v2760
          %v2762 = vpop.f32.mrb[0].mxu0
          %v2763 = vadd.f32 %v1571, %v2762
          %2764 = vmatprep.mubr.bf16.mxu0 %v1410
          %2765 = vmatmul.mubr.bf16.gmra.mrb[0].mxu0 %v1409
          %v2766 = vpop.f32.mrb[0].mxu0
          %v2767 = vadd.f32 %v1567, %v2766
          %v2768 = vpop.f32.mrb[0].mxu0
          %v2769 = vadd.f32 %v1571, %v2768
          %v2770 = vpop.f32.mrb[0].mxu0
          %v2771 = vadd.f32 %v1567, %v2770
          %v2772 = vpop.f32.mrb[0].mxu0
          %v2773 = vadd.f32 %v1571, %v2772
          %2774 = vmatprep.mubr.bf16.mxu0 %v1414
          %2775 = vmatmul.mubr.bf16.gmra.mrb[0].mxu0 %v1413
          %v2776 = vpop.f32.mrb[0].mxu0
          %v2777 = vadd.f32 %v1567, %v2776
          %v2778 = vpop.f32.mrb[0].mxu0
          %v2779 = vadd.f32 %v1571, %v2778
          %v2780 = vpop.f32.mrb[0].mxu0
          %v2781 = vadd.f32 %v1567, %v2780
          %v2782 = vpop.f32.mrb[0].mxu0
          %v2783 = vadd.f32 %v1571, %v2782
          %2784 = vmatprep.mubr.bf16.mxu0 %v1418
          %2785 = vmatmul.mubr.bf16.gmra.mrb[0].mxu0 %v1417
          %v2786 = vpop.f32.mrb[0].mxu0
          %v2787 = vadd.f32 %v1567, %v2786
          %v2788 = vpop.f32.mrb[0].mxu0
          %v2789 = vadd.f32 %v1571, %v2788
          %v2790 = vpop.f32.mrb[0].mxu0
          %v2791 = vadd.f32 %v1567, %v2790
          %v2792 = vpop.f32.mrb[0].mxu0
          %v2793 = vadd.f32 %v1571, %v2792
          %2794 = vdwg.mxu0
          %2795 = vmatprep.subr.bf16.mxu0 %v2027
          %2796 = vmatpush1.bf16.msra.mxu0 %v2026
          %2797 = vmatprep.subr.bf16.mxu0 %v2031
          %2798 = vmatpush1.bf16.msra.mxu0 %v2030
          %2799 = vmatprep.subr.bf16.mxu0 %v2035
          %2800 = vmatpush1.bf16.msra.mxu0 %v2034
          %2801 = vmatprep.subr.bf16.mxu0 %v2039
          %2802 = vmatpush1.bf16.msra.mxu0 %v2038
          %2803 = vmatprep.subr.bf16.mxu0 %v2043
          %2804 = vmatpush1.bf16.msra.mxu0 %v2042
          %2805 = vmatprep.subr.bf16.mxu0 %v2047
          %2806 = vmatpush1.bf16.msra.mxu0 %v2046
          %2807 = vmatprep.subr.bf16.mxu0 %v2051
          %2808 = vmatpush1.bf16.msra.mxu0 %v2050
          %2809 = vmatprep.subr.bf16.mxu0 %v2055
          %2810 = vmatpush1.bf16.msra.mxu0 %v2054
          %2811 = vmatprep.subr.bf16.mxu0 %v2059
          %2812 = vmatpush1.bf16.msra.mxu0 %v2058
          %2813 = vmatprep.subr.bf16.mxu0 %v2063
          %2814 = vmatpush1.bf16.msra.mxu0 %v2062
          %2815 = vmatprep.subr.bf16.mxu0 %v2067
          %2816 = vmatpush1.bf16.msra.mxu0 %v2066
          %2817 = vmatprep.subr.bf16.mxu0 %v2071
          %2818 = vmatpush1.bf16.msra.mxu0 %v2070
          %2819 = vmatprep.subr.bf16.mxu0 %v2075
          %2820 = vmatpush1.bf16.msra.mxu0 %v2074
          %2821 = vmatprep.subr.bf16.mxu0 %v2079
          %2822 = vmatpush1.bf16.msra.mxu0 %v2078
          %2823 = vmatprep.subr.bf16.mxu0 %v2083
          %2824 = vmatpush1.bf16.msra.mxu0 %v2082
          %2825 = vmatprep.subr.bf16.mxu0 %v2087
          %2826 = vmatpush1.bf16.msra.mxu0 %v2086
          %2827 = vmatprep.mubr.bf16.mxu0 %v1360
          %2828 = vmatmul.mubr.bf16.gmra.mrb[0].mxu0 %v1359
          %v2829 = vpop.f32.mrb[0].mxu0
          %v2830 = vadd.f32 %v2637, %v2829
          %v2831 = vpop.f32.mrb[0].mxu0
          %v2832 = vadd.f32 %v2639, %v2831
          %v2833 = vpop.f32.mrb[0].mxu0
          %v2834 = vadd.f32 %v2641, %v2833
          %v2835 = vpop.f32.mrb[0].mxu0
          %v2836 = vadd.f32 %v2643, %v2835
          %2837 = vmatprep.mubr.bf16.mxu0 %v1364
          %2838 = vmatmul.mubr.bf16.gmra.mrb[0].mxu0 %v1363
          %v2839 = vpop.f32.mrb[0].mxu0
          %v2840 = vadd.f32 %v2647, %v2839
          %v2841 = vpop.f32.mrb[0].mxu0
          %v2842 = vadd.f32 %v2649, %v2841
          %v2843 = vpop.f32.mrb[0].mxu0
          %v2844 = vadd.f32 %v2651, %v2843
          %v2845 = vpop.f32.mrb[0].mxu0
          %v2846 = vadd.f32 %v2653, %v2845
          %2847 = vmatprep.mubr.bf16.mxu0 %v1368
          %2848 = vmatmul.mubr.bf16.gmra.mrb[0].mxu0 %v1367
          %v2849 = vpop.f32.mrb[0].mxu0
          %v2850 = vadd.f32 %v2657, %v2849
          %v2851 = vpop.f32.mrb[0].mxu0
          %v2852 = vadd.f32 %v2659, %v2851
          %v2853 = vpop.f32.mrb[0].mxu0
          %v2854 = vadd.f32 %v2661, %v2853
          %v2855 = vpop.f32.mrb[0].mxu0
          %v2856 = vadd.f32 %v2663, %v2855
          %2857 = vmatprep.mubr.bf16.mxu0 %v1372
          %2858 = vmatmul.mubr.bf16.gmra.mrb[0].mxu0 %v1371
          %v2859 = vpop.f32.mrb[0].mxu0
          %v2860 = vadd.f32 %v2667, %v2859
          %v2861 = vpop.f32.mrb[0].mxu0
          %v2862 = vadd.f32 %v2669, %v2861
          %v2863 = vpop.f32.mrb[0].mxu0
          %v2864 = vadd.f32 %v2671, %v2863
          %v2865 = vpop.f32.mrb[0].mxu0
          %v2866 = vadd.f32 %v2673, %v2865
          %2867 = vmatprep.mubr.bf16.mxu0 %v1376
          %2868 = vmatmul.mubr.bf16.gmra.mrb[0].mxu0 %v1375
          %v2869 = vpop.f32.mrb[0].mxu0
          %v2870 = vadd.f32 %v2677, %v2869
          %v2871 = vpop.f32.mrb[0].mxu0
          %v2872 = vadd.f32 %v2679, %v2871
          %v2873 = vpop.f32.mrb[0].mxu0
          %v2874 = vadd.f32 %v2681, %v2873
          %v2875 = vpop.f32.mrb[0].mxu0
          %v2876 = vadd.f32 %v2683, %v2875
          %2877 = vmatprep.mubr.bf16.mxu0 %v1380
          %2878 = vmatmul.mubr.bf16.gmra.mrb[0].mxu0 %v1379
          %v2879 = vpop.f32.mrb[0].mxu0
          %v2880 = vadd.f32 %v2687, %v2879
          %v2881 = vpop.f32.mrb[0].mxu0
          %v2882 = vadd.f32 %v2689, %v2881
          %v2883 = vpop.f32.mrb[0].mxu0
          %v2884 = vadd.f32 %v2691, %v2883
          %v2885 = vpop.f32.mrb[0].mxu0
          %v2886 = vadd.f32 %v2693, %v2885
          %2887 = vmatprep.mubr.bf16.mxu0 %v1384
          %2888 = vmatmul.mubr.bf16.gmra.mrb[0].mxu0 %v1383
          %v2889 = vpop.f32.mrb[0].mxu0
          %v2890 = vadd.f32 %v2697, %v2889
          %v2891 = vpop.f32.mrb[0].mxu0
          %v2892 = vadd.f32 %v2699, %v2891
          %v2893 = vpop.f32.mrb[0].mxu0
          %v2894 = vadd.f32 %v2701, %v2893
          %v2895 = vpop.f32.mrb[0].mxu0
          %v2896 = vadd.f32 %v2703, %v2895
          %2897 = vmatprep.mubr.bf16.mxu0 %v1388
          %2898 = vmatmul.mubr.bf16.gmra.mrb[0].mxu0 %v1387
          %v2899 = vpop.f32.mrb[0].mxu0
          %v2900 = vadd.f32 %v2707, %v2899
          %v2901 = vpop.f32.mrb[0].mxu0
          %v2902 = vadd.f32 %v2709, %v2901
          %v2903 = vpop.f32.mrb[0].mxu0
          %v2904 = vadd.f32 %v2711, %v2903
          %v2905 = vpop.f32.mrb[0].mxu0
          %v2906 = vadd.f32 %v2713, %v2905
          %2907 = vmatprep.mubr.bf16.mxu0 %v1392
          %2908 = vmatmul.mubr.bf16.gmra.mrb[0].mxu0 %v1391
          %v2909 = vpop.f32.mrb[0].mxu0
          %v2910 = vadd.f32 %v2717, %v2909
          %v2911 = vpop.f32.mrb[0].mxu0
          %v2912 = vadd.f32 %v2719, %v2911
          %v2913 = vpop.f32.mrb[0].mxu0
          %v2914 = vadd.f32 %v2721, %v2913
          %v2915 = vpop.f32.mrb[0].mxu0
          %v2916 = vadd.f32 %v2723, %v2915
          %2917 = vmatprep.mubr.bf16.mxu0 %v1396
          %2918 = vmatmul.mubr.bf16.gmra.mrb[0].mxu0 %v1395
          %v2919 = vpop.f32.mrb[0].mxu0
          %v2920 = vadd.f32 %v2727, %v2919
          %v2921 = vpop.f32.mrb[0].mxu0
          %v2922 = vadd.f32 %v2729, %v2921
          %v2923 = vpop.f32.mrb[0].mxu0
          %v2924 = vadd.f32 %v2731, %v2923
          %v2925 = vpop.f32.mrb[0].mxu0
          %v2926 = vadd.f32 %v2733, %v2925
          %2927 = vmatprep.mubr.bf16.mxu0 %v1400
          %2928 = vmatmul.mubr.bf16.gmra.mrb[0].mxu0 %v1399
          %v2929 = vpop.f32.mrb[0].mxu0
          %v2930 = vadd.f32 %v2737, %v2929
          %v2931 = vpop.f32.mrb[0].mxu0
          %v2932 = vadd.f32 %v2739, %v2931
          %v2933 = vpop.f32.mrb[0].mxu0
          %v2934 = vadd.f32 %v2741, %v2933
          %v2935 = vpop.f32.mrb[0].mxu0
          %v2936 = vadd.f32 %v2743, %v2935
          %2937 = vmatprep.mubr.bf16.mxu0 %v1404
          %2938 = vmatmul.mubr.bf16.gmra.mrb[0].mxu0 %v1403
          %v2939 = vpop.f32.mrb[0].mxu0
          %v2940 = vadd.f32 %v2747, %v2939
          %v2941 = vpop.f32.mrb[0].mxu0
          %v2942 = vadd.f32 %v2749, %v2941
          %v2943 = vpop.f32.mrb[0].mxu0
          %v2944 = vadd.f32 %v2751, %v2943
          %v2945 = vpop.f32.mrb[0].mxu0
          %v2946 = vadd.f32 %v2753, %v2945
          %2947 = vmatprep.mubr.bf16.mxu0 %v1408
          %2948 = vmatmul.mubr.bf16.gmra.mrb[0].mxu0 %v1407
          %v2949 = vpop.f32.mrb[0].mxu0
          %v2950 = vadd.f32 %v2757, %v2949
          %v2951 = vpop.f32.mrb[0].mxu0
          %v2952 = vadd.f32 %v2759, %v2951
          %v2953 = vpop.f32.mrb[0].mxu0
          %v2954 = vadd.f32 %v2761, %v2953
          %v2955 = vpop.f32.mrb[0].mxu0
          %v2956 = vadd.f32 %v2763, %v2955
          %2957 = vmatprep.mubr.bf16.mxu0 %v1412
          %2958 = vmatmul.mubr.bf16.gmra.mrb[0].mxu0 %v1411
          %v2959 = vpop.f32.mrb[0].mxu0
          %v2960 = vadd.f32 %v2767, %v2959
          %v2961 = vpop.f32.mrb[0].mxu0
          %v2962 = vadd.f32 %v2769, %v2961
          %v2963 = vpop.f32.mrb[0].mxu0
          %v2964 = vadd.f32 %v2771, %v2963
          %v2965 = vpop.f32.mrb[0].mxu0
          %v2966 = vadd.f32 %v2773, %v2965
          %2967 = vmatprep.mubr.bf16.mxu0 %v1416
          %2968 = vmatmul.mubr.bf16.gmra.mrb[0].mxu0 %v1415
          %v2969 = vpop.f32.mrb[0].mxu0
          %v2970 = vadd.f32 %v2777, %v2969
          %v2971 = vpop.f32.mrb[0].mxu0
          %v2972 = vadd.f32 %v2779, %v2971
          %v2973 = vpop.f32.mrb[0].mxu0
          %v2974 = vadd.f32 %v2781, %v2973
          %v2975 = vpop.f32.mrb[0].mxu0
          %v2976 = vadd.f32 %v2783, %v2975
          %2977 = vmatprep.mubr.bf16.mxu0 %v1420
          %2978 = vmatmul.mubr.bf16.gmra.mrb[0].mxu0 %v1419
          %v2979 = vpop.f32.mrb[0].mxu0
          %v2980 = vadd.f32 %v2787, %v2979
          %v2981 = vpop.f32.mrb[0].mxu0
          %v2982 = vadd.f32 %v2789, %v2981
          %v2983 = vpop.f32.mrb[0].mxu0
          %v2984 = vadd.f32 %v2791, %v2983
          %v2985 = vpop.f32.mrb[0].mxu0
          %v2986 = vadd.f32 %v2793, %v2985
          %2987 = vdwg.mxu0
          %v2988 = vmax.f32 %v2444, 0.0
          %v2989 = vmax.f32 %v2446, 0.0
          %v2990 = vmax.f32 %v2830, 0.0
          %v2991 = vmax.f32 %v2832, 0.0
          %v2992 = vmax.f32 %v2448, 0.0
          %v2993 = vmax.f32 %v2450, 0.0
          %v2994 = vmax.f32 %v2834, 0.0
          %v2995 = vmax.f32 %v2836, 0.0
          %v2996 = vmax.f32 %v2454, 0.0
          %v2997 = vmax.f32 %v2456, 0.0
          %v2998 = vmax.f32 %v2840, 0.0
          %v2999 = vmax.f32 %v2842, 0.0
          %v3000 = vmax.f32 %v2458, 0.0
          %v3001 = vmax.f32 %v2460, 0.0
          %v3002 = vmax.f32 %v2844, 0.0
          %v3003 = vmax.f32 %v2846, 0.0
          %v3004 = vmax.f32 %v2464, 0.0
          %v3005 = vmax.f32 %v2466, 0.0
          %v3006 = vmax.f32 %v2850, 0.0
          %v3007 = vmax.f32 %v2852, 0.0
          %v3008 = vmax.f32 %v2468, 0.0
          %v3009 = vmax.f32 %v2470, 0.0
          %v3010 = vmax.f32 %v2854, 0.0
          %v3011 = vmax.f32 %v2856, 0.0
          %v3012 = vmax.f32 %v2474, 0.0
          %v3013 = vmax.f32 %v2476, 0.0
          %v3014 = vmax.f32 %v2860, 0.0
          %v3015 = vmax.f32 %v2862, 0.0
          %v3016 = vmax.f32 %v2478, 0.0
          %v3017 = vmax.f32 %v2480, 0.0
          %v3018 = vmax.f32 %v2864, 0.0
          %v3019 = vmax.f32 %v2866, 0.0
          %v3020 = vmax.f32 %v2484, 0.0
          %v3021 = vmax.f32 %v2486, 0.0
          %v3022 = vmax.f32 %v2870, 0.0
          %v3023 = vmax.f32 %v2872, 0.0
          %v3024 = vmax.f32 %v2488, 0.0
          %v3025 = vmax.f32 %v2490, 0.0
          %v3026 = vmax.f32 %v2874, 0.0
          %v3027 = vmax.f32 %v2876, 0.0
          %v3028 = vmax.f32 %v2494, 0.0
          %v3029 = vmax.f32 %v2496, 0.0
          %v3030 = vmax.f32 %v2880, 0.0
          %v3031 = vmax.f32 %v2882, 0.0
          %v3032 = vmax.f32 %v2498, 0.0
          %v3033 = vmax.f32 %v2500, 0.0
          %v3034 = vmax.f32 %v2884, 0.0
          %v3035 = vmax.f32 %v2886, 0.0
          %v3036 = vmax.f32 %v2504, 0.0
          %v3037 = vmax.f32 %v2506, 0.0
          %v3038 = vmax.f32 %v2890, 0.0
          %v3039 = vmax.f32 %v2892, 0.0
          %v3040 = vmax.f32 %v2508, 0.0
          %v3041 = vmax.f32 %v2510, 0.0
          %v3042 = vmax.f32 %v2894, 0.0
          %v3043 = vmax.f32 %v2896, 0.0
          %v3044 = vmax.f32 %v2514, 0.0
          %v3045 = vmax.f32 %v2516, 0.0
          %v3046 = vmax.f32 %v2900, 0.0
          %v3047 = vmax.f32 %v2902, 0.0
          %v3048 = vmax.f32 %v2518, 0.0
          %v3049 = vmax.f32 %v2520, 0.0
          %v3050 = vmax.f32 %v2904, 0.0
          %v3051 = vmax.f32 %v2906, 0.0
          %v3052 = vmax.f32 %v2524, 0.0
          %v3053 = vmax.f32 %v2526, 0.0
          %v3054 = vmax.f32 %v2910, 0.0
          %v3055 = vmax.f32 %v2912, 0.0
          %v3056 = vmax.f32 %v2528, 0.0
          %v3057 = vmax.f32 %v2530, 0.0
          %v3058 = vmax.f32 %v2914, 0.0
          %v3059 = vmax.f32 %v2916, 0.0
          %v3060 = vmax.f32 %v2534, 0.0
          %v3061 = vmax.f32 %v2536, 0.0
          %v3062 = vmax.f32 %v2920, 0.0
          %v3063 = vmax.f32 %v2922, 0.0
          %v3064 = vmax.f32 %v2538, 0.0
          %v3065 = vmax.f32 %v2540, 0.0
          %v3066 = vmax.f32 %v2924, 0.0
          %v3067 = vmax.f32 %v2926, 0.0
          %v3068 = vmax.f32 %v2544, 0.0
          %v3069 = vmax.f32 %v2546, 0.0
          %v3070 = vmax.f32 %v2930, 0.0
          %v3071 = vmax.f32 %v2932, 0.0
          %v3072 = vmax.f32 %v2548, 0.0
          %v3073 = vmax.f32 %v2550, 0.0
          %v3074 = vmax.f32 %v2934, 0.0
          %v3075 = vmax.f32 %v2936, 0.0
          %v3076 = vmax.f32 %v2554, 0.0
          %v3077 = vmax.f32 %v2556, 0.0
          %v3078 = vmax.f32 %v2940, 0.0
          %v3079 = vmax.f32 %v2942, 0.0
          %v3080 = vmax.f32 %v2558, 0.0
          %v3081 = vmax.f32 %v2560, 0.0
          %v3082 = vmax.f32 %v2944, 0.0
          %v3083 = vmax.f32 %v2946, 0.0
          %v3084 = vmax.f32 %v2564, 0.0
          %v3085 = vmax.f32 %v2566, 0.0
          %v3086 = vmax.f32 %v2950, 0.0
          %v3087 = vmax.f32 %v2952, 0.0
          %v3088 = vmax.f32 %v2568, 0.0
          %v3089 = vmax.f32 %v2570, 0.0
          %v3090 = vmax.f32 %v2954, 0.0
          %v3091 = vmax.f32 %v2956, 0.0
          %v3092 = vmax.f32 %v2574, 0.0
          %v3093 = vmax.f32 %v2576, 0.0
          %v3094 = vmax.f32 %v2960, 0.0
          %v3095 = vmax.f32 %v2962, 0.0
          %v3096 = vmax.f32 %v2578, 0.0
          %v3097 = vmax.f32 %v2580, 0.0
          %v3098 = vmax.f32 %v2964, 0.0
          %v3099 = vmax.f32 %v2966, 0.0
          %v3100 = vmax.f32 %v2584, 0.0
          %v3101 = vmax.f32 %v2586, 0.0
          %v3102 = vmax.f32 %v2970, 0.0
          %v3103 = vmax.f32 %v2972, 0.0
          %v3104 = vmax.f32 %v2588, 0.0
          %v3105 = vmax.f32 %v2590, 0.0
          %v3106 = vmax.f32 %v2974, 0.0
          %v3107 = vmax.f32 %v2976, 0.0
          %v3108 = vmax.f32 %v2594, 0.0
          %v3109 = vmax.f32 %v2596, 0.0
          %v3110 = vmax.f32 %v2980, 0.0
          %v3111 = vmax.f32 %v2982, 0.0
          %v3112 = vmax.f32 %v2598, 0.0
          %v3113 = vmax.f32 %v2600, 0.0
          %v3114 = vmax.f32 %v2984, 0.0
          %v3115 = vmax.f32 %v2986, 0.0
          %v3116 = vpack.c.bf16 %v2992, %v2988
          %v3117 = vpack.c.bf16 %v2993, %v2989
          %v3118 = vpack.c.bf16 %v2994, %v2990
          %v3119 = vpack.c.bf16 %v2995, %v2991
          %v3120 = vpack.c.bf16 %v3000, %v2996
          %v3121 = vpack.c.bf16 %v3001, %v2997
          %v3122 = vpack.c.bf16 %v3002, %v2998
          %v3123 = vpack.c.bf16 %v3003, %v2999
          %v3124 = vpack.c.bf16 %v3008, %v3004
          %v3125 = vpack.c.bf16 %v3009, %v3005
          %v3126 = vpack.c.bf16 %v3010, %v3006
          %v3127 = vpack.c.bf16 %v3011, %v3007
          %v3128 = vpack.c.bf16 %v3016, %v3012
          %v3129 = vpack.c.bf16 %v3017, %v3013
          %v3130 = vpack.c.bf16 %v3018, %v3014
          %v3131 = vpack.c.bf16 %v3019, %v3015
          %v3132 = vpack.c.bf16 %v3024, %v3020
          %v3133 = vpack.c.bf16 %v3025, %v3021
          %v3134 = vpack.c.bf16 %v3026, %v3022
          %v3135 = vpack.c.bf16 %v3027, %v3023
          %v3136 = vpack.c.bf16 %v3032, %v3028
          %v3137 = vpack.c.bf16 %v3033, %v3029
          %v3138 = vpack.c.bf16 %v3034, %v3030
          %v3139 = vpack.c.bf16 %v3035, %v3031
          %v3140 = vpack.c.bf16 %v3040, %v3036
          %v3141 = vpack.c.bf16 %v3041, %v3037
          %v3142 = vpack.c.bf16 %v3042, %v3038
          %v3143 = vpack.c.bf16 %v3043, %v3039
          %v3144 = vpack.c.bf16 %v3048, %v3044
          %v3145 = vpack.c.bf16 %v3049, %v3045
          %v3146 = vpack.c.bf16 %v3050, %v3046
          %v3147 = vpack.c.bf16 %v3051, %v3047
          %v3148 = vpack.c.bf16 %v3056, %v3052
          %v3149 = vpack.c.bf16 %v3057, %v3053
          %v3150 = vpack.c.bf16 %v3058, %v3054
          %v3151 = vpack.c.bf16 %v3059, %v3055
          %v3152 = vpack.c.bf16 %v3064, %v3060
          %v3153 = vpack.c.bf16 %v3065, %v3061
          %v3154 = vpack.c.bf16 %v3066, %v3062
          %v3155 = vpack.c.bf16 %v3067, %v3063
          %v3156 = vpack.c.bf16 %v3072, %v3068
          %v3157 = vpack.c.bf16 %v3073, %v3069
          %v3158 = vpack.c.bf16 %v3074, %v3070
          %v3159 = vpack.c.bf16 %v3075, %v3071
          %v3160 = vpack.c.bf16 %v3080, %v3076
          %v3161 = vpack.c.bf16 %v3081, %v3077
          %v3162 = vpack.c.bf16 %v3082, %v3078
          %v3163 = vpack.c.bf16 %v3083, %v3079
          %v3164 = vpack.c.bf16 %v3088, %v3084
          %v3165 = vpack.c.bf16 %v3089, %v3085
          %v3166 = vpack.c.bf16 %v3090, %v3086
          %v3167 = vpack.c.bf16 %v3091, %v3087
          %v3168 = vpack.c.bf16 %v3096, %v3092
          %v3169 = vpack.c.bf16 %v3097, %v3093
          %v3170 = vpack.c.bf16 %v3098, %v3094
          %v3171 = vpack.c.bf16 %v3099, %v3095
          %v3172 = vpack.c.bf16 %v3104, %v3100
          %v3173 = vpack.c.bf16 %v3105, %v3101
          %v3174 = vpack.c.bf16 %v3106, %v3102
          %v3175 = vpack.c.bf16 %v3107, %v3103
          %v3176 = vpack.c.bf16 %v3112, %v3108
          %v3177 = vpack.c.bf16 %v3113, %v3109
          %v3178 = vpack.c.bf16 %v3114, %v3110
          %v3179 = vpack.c.bf16 %v3115, %v3111
          %3180 = vst [vmem:[#allocation2] sm:$0xff] %v3116
          %3181 = vst [vmem:[#allocation2 + $0x8] sm:$0xff] %v3117
          %3182 = vst [vmem:[#allocation2 + $0x10] sm:$0xff] %v3118
          %3183 = vst [vmem:[#allocation2 + $0x18] sm:$0xff] %v3119
          %3184 = vst [vmem:[#allocation2 + $0x20] sm:$0xff] %v3120
          %3185 = vst [vmem:[#allocation2 + $0x28] sm:$0xff] %v3121
          %3186 = vst [vmem:[#allocation2 + $0x30] sm:$0xff] %v3122
          %3187 = vst [vmem:[#allocation2 + $0x38] sm:$0xff] %v3123
          %3188 = vst [vmem:[#allocation2 + $0x40] sm:$0xff] %v3124
          %3189 = vst [vmem:[#allocation2 + $0x48] sm:$0xff] %v3125
          %3190 = vst [vmem:[#allocation2 + $0x50] sm:$0xff] %v3126
          %3191 = vst [vmem:[#allocation2 + $0x58] sm:$0xff] %v3127
          %3192 = vst [vmem:[#allocation2 + $0x60] sm:$0xff] %v3128
          %3193 = vst [vmem:[#allocation2 + $0x68] sm:$0xff] %v3129
          %3194 = vst [vmem:[#allocation2 + $0x70] sm:$0xff] %v3130
          %3195 = vst [vmem:[#allocation2 + $0x78] sm:$0xff] %v3131
          %3196 = vst [vmem:[#allocation2 + $0x80] sm:$0xff] %v3132
          %3197 = vst [vmem:[#allocation2 + $0x88] sm:$0xff] %v3133
          %3198 = vst [vmem:[#allocation2 + $0x90] sm:$0xff] %v3134
          %3199 = vst [vmem:[#allocation2 + $0x98] sm:$0xff] %v3135
          %3200 = vst [vmem:[#allocation2 + $0xa0] sm:$0xff] %v3136
          %3201 = vst [vmem:[#allocation2 + $0xa8] sm:$0xff] %v3137
          %3202 = vst [vmem:[#allocation2 + $0xb0] sm:$0xff] %v3138
          %3203 = vst [vmem:[#allocation2 + $0xb8] sm:$0xff] %v3139
          %3204 = vst [vmem:[#allocation2 + $0xc0] sm:$0xff] %v3140
          %3205 = vst [vmem:[#allocation2 + $0xc8] sm:$0xff] %v3141
          %3206 = vst [vmem:[#allocation2 + $0xd0] sm:$0xff] %v3142
          %3207 = vst [vmem:[#allocation2 + $0xd8] sm:$0xff] %v3143
          %3208 = vst [vmem:[#allocation2 + $0xe0] sm:$0xff] %v3144
          %3209 = vst [vmem:[#allocation2 + $0xe8] sm:$0xff] %v3145
          %3210 = vst [vmem:[#allocation2 + $0xf0] sm:$0xff] %v3146
          %3211 = vst [vmem:[#allocation2 + $0xf8] sm:$0xff] %v3147
          %3212 = vst [vmem:[#allocation2 + $0x100] sm:$0xff] %v3148
          %3213 = vst [vmem:[#allocation2 + $0x108] sm:$0xff] %v3149
          %3214 = vst [vmem:[#allocation2 + $0x110] sm:$0xff] %v3150
          %3215 = vst [vmem:[#allocation2 + $0x118] sm:$0xff] %v3151
          %3216 = vst [vmem:[#allocation2 + $0x120] sm:$0xff] %v3152
          %3217 = vst [vmem:[#allocation2 + $0x128] sm:$0xff] %v3153
          %3218 = vst [vmem:[#allocation2 + $0x130] sm:$0xff] %v3154
          %3219 = vst [vmem:[#allocation2 + $0x138] sm:$0xff] %v3155
          %3220 = vst [vmem:[#allocation2 + $0x140] sm:$0xff] %v3156
          %3221 = vst [vmem:[#allocation2 + $0x148] sm:$0xff] %v3157
          %3222 = vst [vmem:[#allocation2 + $0x150] sm:$0xff] %v3158
          %3223 = vst [vmem:[#allocation2 + $0x158] sm:$0xff] %v3159
          %3224 = vst [vmem:[#allocation2 + $0x160] sm:$0xff] %v3160
          %3225 = vst [vmem:[#allocation2 + $0x168] sm:$0xff] %v3161
          %3226 = vst [vmem:[#allocation2 + $0x170] sm:$0xff] %v3162
          %3227 = vst [vmem:[#allocation2 + $0x178] sm:$0xff] %v3163
          %3228 = vst [vmem:[#allocation2 + $0x180] sm:$0xff] %v3164
          %3229 = vst [vmem:[#allocation2 + $0x188] sm:$0xff] %v3165
          %3230 = vst [vmem:[#allocation2 + $0x190] sm:$0xff] %v3166
          %3231 = vst [vmem:[#allocation2 + $0x198] sm:$0xff] %v3167
          %3232 = vst [vmem:[#allocation2 + $0x1a0] sm:$0xff] %v3168
          %3233 = vst [vmem:[#allocation2 + $0x1a8] sm:$0xff] %v3169
          %3234 = vst [vmem:[#allocation2 + $0x1b0] sm:$0xff] %v3170
          %3235 = vst [vmem:[#allocation2 + $0x1b8] sm:$0xff] %v3171
          %3236 = vst [vmem:[#allocation2 + $0x1c0] sm:$0xff] %v3172
          %3237 = vst [vmem:[#allocation2 + $0x1c8] sm:$0xff] %v3173
          %3238 = vst [vmem:[#allocation2 + $0x1d0] sm:$0xff] %v3174
          %3239 = vst [vmem:[#allocation2 + $0x1d8] sm:$0xff] %v3175
          %3240 = vst [vmem:[#allocation2 + $0x1e0] sm:$0xff] %v3176
          %3241 = vst [vmem:[#allocation2 + $0x1e8] sm:$0xff] %v3177
          %3242 = vst [vmem:[#allocation2 + $0x1f0] sm:$0xff] %v3178
          %3243 = vst [vmem:[#allocation2 + $0x1f8] sm:$0xff] %v3179
        $region77: #{fully_connected7_forward.1} parent=47 // loop_footer
          %s1356 = sadd.s32 1, %s1352
        $region78: #{fully_connected7_forward.1} parent=47 // loop_footer_branch
          %1351 = sbr.rel target = $region74
        $region79: #{fully_connected7_forward.1} parent=47 // loop_exit
          _
        %v3244 = vld [vmem:[#allocation2] sm:$0xff]
        %v3245 = vld [vmem:[#allocation2 + $0x8] sm:$0xff]
        %v3246 = vld [vmem:[#allocation2 + $0x10] sm:$0xff]
        %v3247 = vld [vmem:[#allocation2 + $0x18] sm:$0xff]
        %v3248 = vld [vmem:[#allocation2 + $0x20] sm:$0xff]
        %v3249 = vld [vmem:[#allocation2 + $0x28] sm:$0xff]
        %v3250 = vld [vmem:[#allocation2 + $0x30] sm:$0xff]
        %v3251 = vld [vmem:[#allocation2 + $0x38] sm:$0xff]
        %v3252 = vld [vmem:[#allocation2 + $0x40] sm:$0xff]
        %v3253 = vld [vmem:[#allocation2 + $0x48] sm:$0xff]
        %v3254 = vld [vmem:[#allocation2 + $0x50] sm:$0xff]
        %v3255 = vld [vmem:[#allocation2 + $0x58] sm:$0xff]
        %v3256 = vld [vmem:[#allocation2 + $0x60] sm:$0xff]
        %v3257 = vld [vmem:[#allocation2 + $0x68] sm:$0xff]
        %v3258 = vld [vmem:[#allocation2 + $0x70] sm:$0xff]
        %v3259 = vld [vmem:[#allocation2 + $0x78] sm:$0xff]
        %v3260 = vld [vmem:[#allocation2 + $0x80] sm:$0xff]
        %v3261 = vld [vmem:[#allocation2 + $0x88] sm:$0xff]
        %v3262 = vld [vmem:[#allocation2 + $0x90] sm:$0xff]
        %v3263 = vld [vmem:[#allocation2 + $0x98] sm:$0xff]
        %v3264 = vld [vmem:[#allocation2 + $0xa0] sm:$0xff]
        %v3265 = vld [vmem:[#allocation2 + $0xa8] sm:$0xff]
        %v3266 = vld [vmem:[#allocation2 + $0xb0] sm:$0xff]
        %v3267 = vld [vmem:[#allocation2 + $0xb8] sm:$0xff]
        %v3268 = vld [vmem:[#allocation2 + $0xc0] sm:$0xff]
        %v3269 = vld [vmem:[#allocation2 + $0xc8] sm:$0xff]
        %v3270 = vld [vmem:[#allocation2 + $0xd0] sm:$0xff]
        %v3271 = vld [vmem:[#allocation2 + $0xd8] sm:$0xff]
        %v3272 = vld [vmem:[#allocation2 + $0xe0] sm:$0xff]
        %v3273 = vld [vmem:[#allocation2 + $0xe8] sm:$0xff]
        %v3274 = vld [vmem:[#allocation2 + $0xf0] sm:$0xff]
        %v3275 = vld [vmem:[#allocation2 + $0xf8] sm:$0xff]
        %v3276 = vld [vmem:[#allocation2 + $0x100] sm:$0xff]
        %v3277 = vld [vmem:[#allocation2 + $0x108] sm:$0xff]
        %v3278 = vld [vmem:[#allocation2 + $0x110] sm:$0xff]
        %v3279 = vld [vmem:[#allocation2 + $0x118] sm:$0xff]
        %v3280 = vld [vmem:[#allocation2 + $0x120] sm:$0xff]
        %v3281 = vld [vmem:[#allocation2 + $0x128] sm:$0xff]
        %v3282 = vld [vmem:[#allocation2 + $0x130] sm:$0xff]
        %v3283 = vld [vmem:[#allocation2 + $0x138] sm:$0xff]
        %v3284 = vld [vmem:[#allocation2 + $0x140] sm:$0xff]
        %v3285 = vld [vmem:[#allocation2 + $0x148] sm:$0xff]
        %v3286 = vld [vmem:[#allocation2 + $0x150] sm:$0xff]
        %v3287 = vld [vmem:[#allocation2 + $0x158] sm:$0xff]
        %v3288 = vld [vmem:[#allocation2 + $0x160] sm:$0xff]
        %v3289 = vld [vmem:[#allocation2 + $0x168] sm:$0xff]
        %v3290 = vld [vmem:[#allocation2 + $0x170] sm:$0xff]
        %v3291 = vld [vmem:[#allocation2 + $0x178] sm:$0xff]
        %v3292 = vld [vmem:[#allocation2 + $0x180] sm:$0xff]
        %v3293 = vld [vmem:[#allocation2 + $0x188] sm:$0xff]
        %v3294 = vld [vmem:[#allocation2 + $0x190] sm:$0xff]
        %v3295 = vld [vmem:[#allocation2 + $0x198] sm:$0xff]
        %v3296 = vld [vmem:[#allocation2 + $0x1a0] sm:$0xff]
        %v3297 = vld [vmem:[#allocation2 + $0x1a8] sm:$0xff]
        %v3298 = vld [vmem:[#allocation2 + $0x1b0] sm:$0xff]
        %v3299 = vld [vmem:[#allocation2 + $0x1b8] sm:$0xff]
        %v3300 = vld [vmem:[#allocation2 + $0x1c0] sm:$0xff]
        %v3301 = vld [vmem:[#allocation2 + $0x1c8] sm:$0xff]
        %v3302 = vld [vmem:[#allocation2 + $0x1d0] sm:$0xff]
        %v3303 = vld [vmem:[#allocation2 + $0x1d8] sm:$0xff]
        %v3304 = vld [vmem:[#allocation2 + $0x1e0] sm:$0xff]
        %v3305 = vld [vmem:[#allocation2 + $0x1e8] sm:$0xff]
        %v3306 = vld [vmem:[#allocation2 + $0x1f0] sm:$0xff]
        %v3307 = vld [vmem:[#allocation2 + $0x1f8] sm:$0xff]
        %v3308 = vld [vmem:[#allocation7] sm:$0xf]
        %v3309 = vld [vmem:[#allocation7 + $0x4] sm:$0xf]
        %v3310 = vld [vmem:[#allocation7 + $0x8] sm:$0xf]
        %v3311 = vld [vmem:[#allocation7 + $0xc] sm:$0xf]
        %v3312 = vld [vmem:[#allocation7 + $0x10] sm:$0xf]
        %v3313 = vld [vmem:[#allocation7 + $0x14] sm:$0xf]
        %v3314 = vld [vmem:[#allocation7 + $0x18] sm:$0xf]
        %v3315 = vld [vmem:[#allocation7 + $0x1c] sm:$0xf]
        %v3316 = vld [vmem:[#allocation7 + $0x20] sm:$0xf]
        %v3317 = vld [vmem:[#allocation7 + $0x24] sm:$0xf]
        %v3318 = vld [vmem:[#allocation7 + $0x28] sm:$0xf]
        %v3319 = vld [vmem:[#allocation7 + $0x2c] sm:$0xf]
        %v3320 = vld [vmem:[#allocation7 + $0x30] sm:$0xf]
        %v3321 = vld [vmem:[#allocation7 + $0x34] sm:$0xf]
        %v3322 = vld [vmem:[#allocation7 + $0x38] sm:$0xf]
        %v3323 = vld [vmem:[#allocation7 + $0x3c] sm:$0xf]
        %v3324 = vld [vmem:[#allocation7 + $0x40] sm:$0xf]
        %v3325 = vld [vmem:[#allocation7 + $0x44] sm:$0xf]
        %v3326 = vld [vmem:[#allocation7 + $0x48] sm:$0xf]
        %v3327 = vld [vmem:[#allocation7 + $0x4c] sm:$0xf]
        %v3328 = vld [vmem:[#allocation7 + $0x50] sm:$0xf]
        %v3329 = vld [vmem:[#allocation7 + $0x54] sm:$0xf]
        %v3330 = vld [vmem:[#allocation7 + $0x58] sm:$0xf]
        %v3331 = vld [vmem:[#allocation7 + $0x5c] sm:$0xf]
        %v3332 = vld [vmem:[#allocation7 + $0x60] sm:$0xf]
        %v3333 = vld [vmem:[#allocation7 + $0x64] sm:$0xf]
        %v3334 = vld [vmem:[#allocation7 + $0x68] sm:$0xf]
        %v3335 = vld [vmem:[#allocation7 + $0x6c] sm:$0xf]
        %v3336 = vld [vmem:[#allocation7 + $0x70] sm:$0xf]
        %v3337 = vld [vmem:[#allocation7 + $0x74] sm:$0xf]
        %v3338 = vld [vmem:[#allocation7 + $0x78] sm:$0xf]
        %v3339 = vld [vmem:[#allocation7 + $0x7c] sm:$0xf]
        %v3340 = vld [vmem:[#allocation7 + $0x80] sm:$0xf]
        %v3341 = vld [vmem:[#allocation7 + $0x84] sm:$0xf]
        %v3342 = vld [vmem:[#allocation7 + $0x88] sm:$0xf]
        %v3343 = vld [vmem:[#allocation7 + $0x8c] sm:$0xf]
        %v3344 = vld [vmem:[#allocation7 + $0x90] sm:$0xf]
        %v3345 = vld [vmem:[#allocation7 + $0x94] sm:$0xf]
        %v3346 = vld [vmem:[#allocation7 + $0x98] sm:$0xf]
        %v3347 = vld [vmem:[#allocation7 + $0x9c] sm:$0xf]
        %v3348 = vld [vmem:[#allocation7 + $0xa0] sm:$0xf]
        %v3349 = vld [vmem:[#allocation7 + $0xa4] sm:$0xf]
        %v3350 = vld [vmem:[#allocation7 + $0xa8] sm:$0xf]
        %v3351 = vld [vmem:[#allocation7 + $0xac] sm:$0xf]
        %v3352 = vld [vmem:[#allocation7 + $0xb0] sm:$0xf]
        %v3353 = vld [vmem:[#allocation7 + $0xb4] sm:$0xf]
        %v3354 = vld [vmem:[#allocation7 + $0xb8] sm:$0xf]
        %v3355 = vld [vmem:[#allocation7 + $0xbc] sm:$0xf]
        %v3356 = vld [vmem:[#allocation7 + $0xc0] sm:$0xf]
        %v3357 = vld [vmem:[#allocation7 + $0xc4] sm:$0xf]
        %v3358 = vld [vmem:[#allocation7 + $0xc8] sm:$0xf]
        %v3359 = vld [vmem:[#allocation7 + $0xcc] sm:$0xf]
        %v3360 = vld [vmem:[#allocation7 + $0xd0] sm:$0xf]
        %v3361 = vld [vmem:[#allocation7 + $0xd4] sm:$0xf]
        %v3362 = vld [vmem:[#allocation7 + $0xd8] sm:$0xf]
        %v3363 = vld [vmem:[#allocation7 + $0xdc] sm:$0xf]
        %v3364 = vld [vmem:[#allocation7 + $0xe0] sm:$0xf]
        %v3365 = vld [vmem:[#allocation7 + $0xe4] sm:$0xf]
        %v3366 = vld [vmem:[#allocation7 + $0xe8] sm:$0xf]
        %v3367 = vld [vmem:[#allocation7 + $0xec] sm:$0xf]
        %v3368 = vld [vmem:[#allocation7 + $0xf0] sm:$0xf]
        %v3369 = vld [vmem:[#allocation7 + $0xf4] sm:$0xf]
        %v3370 = vld [vmem:[#allocation7 + $0xf8] sm:$0xf]
        %v3371 = vld [vmem:[#allocation7 + $0xfc] sm:$0xf]
        %v3372 = vld [vmem:[#allocation11] sm:$0x1]
        %v3374 = vlaneseq
        %v3375 = vshrl.u32 %v3374, 7
        %v3376 = vsub.s32 0, %v3375
        %v3377 = vrot.slane %v3372, %v3376
        %v3443 = vunpack.c.l.b16 %v3308
        %v3444 = vunpack.c.l.b16 %v3309
        %v3445 = vunpack.c.l.b16 %v3310
        %v3446 = vunpack.c.l.b16 %v3311
        %v3447 = vunpack.c.l.b16 %v3312
        %v3448 = vunpack.c.l.b16 %v3313
        %v3449 = vunpack.c.l.b16 %v3314
        %v3450 = vunpack.c.l.b16 %v3315
        %v3451 = vunpack.c.l.b16 %v3316
        %v3452 = vunpack.c.l.b16 %v3317
        %v3453 = vunpack.c.l.b16 %v3318
        %v3454 = vunpack.c.l.b16 %v3319
        %v3455 = vunpack.c.l.b16 %v3320
        %v3456 = vunpack.c.l.b16 %v3321
        %v3457 = vunpack.c.l.b16 %v3322
        %v3458 = vunpack.c.l.b16 %v3323
        %v3459 = vunpack.c.l.b16 %v3324
        %v3460 = vunpack.c.l.b16 %v3325
        %v3461 = vunpack.c.l.b16 %v3326
        %v3462 = vunpack.c.l.b16 %v3327
        %v3463 = vunpack.c.l.b16 %v3328
        %v3464 = vunpack.c.l.b16 %v3329
        %v3465 = vunpack.c.l.b16 %v3330
        %v3466 = vunpack.c.l.b16 %v3331
        %v3467 = vunpack.c.l.b16 %v3332
        %v3468 = vunpack.c.l.b16 %v3333
        %v3469 = vunpack.c.l.b16 %v3334
        %v3470 = vunpack.c.l.b16 %v3335
        %v3471 = vunpack.c.l.b16 %v3336
        %v3472 = vunpack.c.l.b16 %v3337
        %v3473 = vunpack.c.l.b16 %v3338
        %v3474 = vunpack.c.l.b16 %v3339
        %v3475 = vunpack.c.l.b16 %v3340
        %v3476 = vunpack.c.l.b16 %v3341
        %v3477 = vunpack.c.l.b16 %v3342
        %v3478 = vunpack.c.l.b16 %v3343
        %v3479 = vunpack.c.l.b16 %v3344
        %v3480 = vunpack.c.l.b16 %v3345
        %v3481 = vunpack.c.l.b16 %v3346
        %v3482 = vunpack.c.l.b16 %v3347
        %v3483 = vunpack.c.l.b16 %v3348
        %v3484 = vunpack.c.l.b16 %v3349
        %v3485 = vunpack.c.l.b16 %v3350
        %v3486 = vunpack.c.l.b16 %v3351
        %v3487 = vunpack.c.l.b16 %v3352
        %v3488 = vunpack.c.l.b16 %v3353
        %v3489 = vunpack.c.l.b16 %v3354
        %v3490 = vunpack.c.l.b16 %v3355
        %v3491 = vunpack.c.l.b16 %v3356
        %v3492 = vunpack.c.l.b16 %v3357
        %v3493 = vunpack.c.l.b16 %v3358
        %v3494 = vunpack.c.l.b16 %v3359
        %v3495 = vunpack.c.l.b16 %v3360
        %v3496 = vunpack.c.l.b16 %v3361
        %v3497 = vunpack.c.l.b16 %v3362
        %v3498 = vunpack.c.l.b16 %v3363
        %v3499 = vunpack.c.l.b16 %v3364
        %v3500 = vunpack.c.l.b16 %v3365
        %v3501 = vunpack.c.l.b16 %v3366
        %v3502 = vunpack.c.l.b16 %v3367
        %v3503 = vunpack.c.l.b16 %v3368
        %v3504 = vunpack.c.l.b16 %v3369
        %v3505 = vunpack.c.l.b16 %v3370
        %v3506 = vunpack.c.l.b16 %v3371
        %v3507 = vpack.c.b16 %v3444, %v3443
        %v3508 = vpack.c.b16 %v3446, %v3445
        %v3509 = vpack.c.b16 %v3448, %v3447
        %v3510 = vpack.c.b16 %v3450, %v3449
        %v3511 = vpack.c.b16 %v3452, %v3451
        %v3512 = vpack.c.b16 %v3454, %v3453
        %v3513 = vpack.c.b16 %v3456, %v3455
        %v3514 = vpack.c.b16 %v3458, %v3457
        %v3515 = vpack.c.b16 %v3460, %v3459
        %v3516 = vpack.c.b16 %v3462, %v3461
        %v3517 = vpack.c.b16 %v3464, %v3463
        %v3518 = vpack.c.b16 %v3466, %v3465
        %v3519 = vpack.c.b16 %v3468, %v3467
        %v3520 = vpack.c.b16 %v3470, %v3469
        %v3521 = vpack.c.b16 %v3472, %v3471
        %v3522 = vpack.c.b16 %v3474, %v3473
        %v3523 = vpack.c.b16 %v3476, %v3475
        %v3524 = vpack.c.b16 %v3478, %v3477
        %v3525 = vpack.c.b16 %v3480, %v3479
        %v3526 = vpack.c.b16 %v3482, %v3481
        %v3527 = vpack.c.b16 %v3484, %v3483
        %v3528 = vpack.c.b16 %v3486, %v3485
        %v3529 = vpack.c.b16 %v3488, %v3487
        %v3530 = vpack.c.b16 %v3490, %v3489
        %v3531 = vpack.c.b16 %v3492, %v3491
        %v3532 = vpack.c.b16 %v3494, %v3493
        %v3533 = vpack.c.b16 %v3496, %v3495
        %v3534 = vpack.c.b16 %v3498, %v3497
        %v3535 = vpack.c.b16 %v3500, %v3499
        %v3536 = vpack.c.b16 %v3502, %v3501
        %v3537 = vpack.c.b16 %v3504, %v3503
        %v3538 = vpack.c.b16 %v3506, %v3505
        %3571 = vmatprep.subr.bf16.mxu0 0
        %3572 = vmatpush1.bf16.msra.mxu0 %v3507
        %3573 = vmatprep.subr.bf16.mxu0 0
        %3574 = vmatpush1.bf16.msra.mxu0 %v3508
        %3575 = vmatprep.subr.bf16.mxu0 0
        %3576 = vmatpush1.bf16.msra.mxu0 %v3509
        %3577 = vmatprep.subr.bf16.mxu0 0
        %3578 = vmatpush1.bf16.msra.mxu0 %v3510
        %3579 = vmatprep.subr.bf16.mxu0 0
        %3580 = vmatpush1.bf16.msra.mxu0 %v3511
        %3581 = vmatprep.subr.bf16.mxu0 0
        %3582 = vmatpush1.bf16.msra.mxu0 %v3512
        %3583 = vmatprep.subr.bf16.mxu0 0
        %3584 = vmatpush1.bf16.msra.mxu0 %v3513
        %3585 = vmatprep.subr.bf16.mxu0 0
        %3586 = vmatpush1.bf16.msra.mxu0 %v3514
        %3587 = vmatprep.subr.bf16.mxu0 0
        %3588 = vmatpush1.bf16.msra.mxu0 %v3515
        %3589 = vmatprep.subr.bf16.mxu0 0
        %3590 = vmatpush1.bf16.msra.mxu0 %v3516
        %3591 = vmatprep.subr.bf16.mxu0 0
        %3592 = vmatpush1.bf16.msra.mxu0 %v3517
        %3593 = vmatprep.subr.bf16.mxu0 0
        %3594 = vmatpush1.bf16.msra.mxu0 %v3518
        %3595 = vmatprep.subr.bf16.mxu0 0
        %3596 = vmatpush1.bf16.msra.mxu0 %v3519
        %3597 = vmatprep.subr.bf16.mxu0 0
        %3598 = vmatpush1.bf16.msra.mxu0 %v3520
        %3599 = vmatprep.subr.bf16.mxu0 0
        %3600 = vmatpush1.bf16.msra.mxu0 %v3521
        %3601 = vmatprep.subr.bf16.mxu0 0
        %3602 = vmatpush1.bf16.msra.mxu0 %v3522
        %3603 = vmatprep.mubr.bf16.mxu0 %v3245
        %3604 = vmatmul.mubr.bf16.gmra.mrb[0].mxu0 %v3244
        %v3605 = vpop.f32.mrb[0].mxu0
        %v3606 = vadd.f32 %v3377, %v3605
        %v3607 = vpop.f32.mrb[0].mxu0
        %v3608 = vpop.f32.mrb[0].mxu0
        %v3609 = vadd.f32 %v3377, %v3608
        %v3610 = vpop.f32.mrb[0].mxu0
        %3611 = vmatprep.mubr.bf16.mxu0 %v3249
        %3612 = vmatmul.mubr.bf16.gmra.mrb[0].mxu0 %v3248
        %v3613 = vpop.f32.mrb[0].mxu0
        %v3614 = vadd.f32 %v3377, %v3613
        %v3615 = vpop.f32.mrb[0].mxu0
        %v3616 = vpop.f32.mrb[0].mxu0
        %v3617 = vadd.f32 %v3377, %v3616
        %v3618 = vpop.f32.mrb[0].mxu0
        %3619 = vmatprep.mubr.bf16.mxu0 %v3253
        %3620 = vmatmul.mubr.bf16.gmra.mrb[0].mxu0 %v3252
        %v3621 = vpop.f32.mrb[0].mxu0
        %v3622 = vadd.f32 %v3377, %v3621
        %v3623 = vpop.f32.mrb[0].mxu0
        %v3624 = vpop.f32.mrb[0].mxu0
        %v3625 = vadd.f32 %v3377, %v3624
        %v3626 = vpop.f32.mrb[0].mxu0
        %3627 = vmatprep.mubr.bf16.mxu0 %v3257
        %3628 = vmatmul.mubr.bf16.gmra.mrb[0].mxu0 %v3256
        %v3629 = vpop.f32.mrb[0].mxu0
        %v3630 = vadd.f32 %v3377, %v3629
        %v3631 = vpop.f32.mrb[0].mxu0
        %v3632 = vpop.f32.mrb[0].mxu0
        %v3633 = vadd.f32 %v3377, %v3632
        %v3634 = vpop.f32.mrb[0].mxu0
        %3635 = vmatprep.mubr.bf16.mxu0 %v3261
        %3636 = vmatmul.mubr.bf16.gmra.mrb[0].mxu0 %v3260
        %v3637 = vpop.f32.mrb[0].mxu0
        %v3638 = vadd.f32 %v3377, %v3637
        %v3639 = vpop.f32.mrb[0].mxu0
        %v3640 = vpop.f32.mrb[0].mxu0
        %v3641 = vadd.f32 %v3377, %v3640
        %v3642 = vpop.f32.mrb[0].mxu0
        %3643 = vmatprep.mubr.bf16.mxu0 %v3265
        %3644 = vmatmul.mubr.bf16.gmra.mrb[0].mxu0 %v3264
        %v3645 = vpop.f32.mrb[0].mxu0
        %v3646 = vadd.f32 %v3377, %v3645
        %v3647 = vpop.f32.mrb[0].mxu0
        %v3648 = vpop.f32.mrb[0].mxu0
        %v3649 = vadd.f32 %v3377, %v3648
        %v3650 = vpop.f32.mrb[0].mxu0
        %3651 = vmatprep.mubr.bf16.mxu0 %v3269
        %3652 = vmatmul.mubr.bf16.gmra.mrb[0].mxu0 %v3268
        %v3653 = vpop.f32.mrb[0].mxu0
        %v3654 = vadd.f32 %v3377, %v3653
        %v3655 = vpop.f32.mrb[0].mxu0
        %v3656 = vpop.f32.mrb[0].mxu0
        %v3657 = vadd.f32 %v3377, %v3656
        %v3658 = vpop.f32.mrb[0].mxu0
        %3659 = vmatprep.mubr.bf16.mxu0 %v3273
        %3660 = vmatmul.mubr.bf16.gmra.mrb[0].mxu0 %v3272
        %v3661 = vpop.f32.mrb[0].mxu0
        %v3662 = vadd.f32 %v3377, %v3661
        %v3663 = vpop.f32.mrb[0].mxu0
        %v3664 = vpop.f32.mrb[0].mxu0
        %v3665 = vadd.f32 %v3377, %v3664
        %v3666 = vpop.f32.mrb[0].mxu0
        %3667 = vmatprep.mubr.bf16.mxu0 %v3277
        %3668 = vmatmul.mubr.bf16.gmra.mrb[0].mxu0 %v3276
        %v3669 = vpop.f32.mrb[0].mxu0
        %v3670 = vadd.f32 %v3377, %v3669
        %v3671 = vpop.f32.mrb[0].mxu0
        %v3672 = vpop.f32.mrb[0].mxu0
        %v3673 = vadd.f32 %v3377, %v3672
        %v3674 = vpop.f32.mrb[0].mxu0
        %3675 = vmatprep.mubr.bf16.mxu0 %v3281
        %3676 = vmatmul.mubr.bf16.gmra.mrb[0].mxu0 %v3280
        %v3677 = vpop.f32.mrb[0].mxu0
        %v3678 = vadd.f32 %v3377, %v3677
        %v3679 = vpop.f32.mrb[0].mxu0
        %v3680 = vpop.f32.mrb[0].mxu0
        %v3681 = vadd.f32 %v3377, %v3680
        %v3682 = vpop.f32.mrb[0].mxu0
        %3683 = vmatprep.mubr.bf16.mxu0 %v3285
        %3684 = vmatmul.mubr.bf16.gmra.mrb[0].mxu0 %v3284
        %v3685 = vpop.f32.mrb[0].mxu0
        %v3686 = vadd.f32 %v3377, %v3685
        %v3687 = vpop.f32.mrb[0].mxu0
        %v3688 = vpop.f32.mrb[0].mxu0
        %v3689 = vadd.f32 %v3377, %v3688
        %v3690 = vpop.f32.mrb[0].mxu0
        %3691 = vmatprep.mubr.bf16.mxu0 %v3289
        %3692 = vmatmul.mubr.bf16.gmra.mrb[0].mxu0 %v3288
        %v3693 = vpop.f32.mrb[0].mxu0
        %v3694 = vadd.f32 %v3377, %v3693
        %v3695 = vpop.f32.mrb[0].mxu0
        %v3696 = vpop.f32.mrb[0].mxu0
        %v3697 = vadd.f32 %v3377, %v3696
        %v3698 = vpop.f32.mrb[0].mxu0
        %3699 = vmatprep.mubr.bf16.mxu0 %v3293
        %3700 = vmatmul.mubr.bf16.gmra.mrb[0].mxu0 %v3292
        %v3701 = vpop.f32.mrb[0].mxu0
        %v3702 = vadd.f32 %v3377, %v3701
        %v3703 = vpop.f32.mrb[0].mxu0
        %v3704 = vpop.f32.mrb[0].mxu0
        %v3705 = vadd.f32 %v3377, %v3704
        %v3706 = vpop.f32.mrb[0].mxu0
        %3707 = vmatprep.mubr.bf16.mxu0 %v3297
        %3708 = vmatmul.mubr.bf16.gmra.mrb[0].mxu0 %v3296
        %v3709 = vpop.f32.mrb[0].mxu0
        %v3710 = vadd.f32 %v3377, %v3709
        %v3711 = vpop.f32.mrb[0].mxu0
        %v3712 = vpop.f32.mrb[0].mxu0
        %v3713 = vadd.f32 %v3377, %v3712
        %v3714 = vpop.f32.mrb[0].mxu0
        %3715 = vmatprep.mubr.bf16.mxu0 %v3301
        %3716 = vmatmul.mubr.bf16.gmra.mrb[0].mxu0 %v3300
        %v3717 = vpop.f32.mrb[0].mxu0
        %v3718 = vadd.f32 %v3377, %v3717
        %v3719 = vpop.f32.mrb[0].mxu0
        %v3720 = vpop.f32.mrb[0].mxu0
        %v3721 = vadd.f32 %v3377, %v3720
        %v3722 = vpop.f32.mrb[0].mxu0
        %3723 = vmatprep.mubr.bf16.mxu0 %v3305
        %3724 = vmatmul.mubr.bf16.gmra.mrb[0].mxu0 %v3304
        %v3725 = vpop.f32.mrb[0].mxu0
        %v3726 = vadd.f32 %v3377, %v3725
        %v3727 = vpop.f32.mrb[0].mxu0
        %v3728 = vpop.f32.mrb[0].mxu0
        %v3729 = vadd.f32 %v3377, %v3728
        %v3730 = vpop.f32.mrb[0].mxu0
        %3731 = vdwg.mxu0
        %3732 = vmatprep.subr.bf16.mxu0 0
        %3733 = vmatpush1.bf16.msra.mxu0 %v3523
        %3734 = vmatprep.subr.bf16.mxu0 0
        %3735 = vmatpush1.bf16.msra.mxu0 %v3524
        %3736 = vmatprep.subr.bf16.mxu0 0
        %3737 = vmatpush1.bf16.msra.mxu0 %v3525
        %3738 = vmatprep.subr.bf16.mxu0 0
        %3739 = vmatpush1.bf16.msra.mxu0 %v3526
        %3740 = vmatprep.subr.bf16.mxu0 0
        %3741 = vmatpush1.bf16.msra.mxu0 %v3527
        %3742 = vmatprep.subr.bf16.mxu0 0
        %3743 = vmatpush1.bf16.msra.mxu0 %v3528
        %3744 = vmatprep.subr.bf16.mxu0 0
        %3745 = vmatpush1.bf16.msra.mxu0 %v3529
        %3746 = vmatprep.subr.bf16.mxu0 0
        %3747 = vmatpush1.bf16.msra.mxu0 %v3530
        %3748 = vmatprep.subr.bf16.mxu0 0
        %3749 = vmatpush1.bf16.msra.mxu0 %v3531
        %3750 = vmatprep.subr.bf16.mxu0 0
        %3751 = vmatpush1.bf16.msra.mxu0 %v3532
        %3752 = vmatprep.subr.bf16.mxu0 0
        %3753 = vmatpush1.bf16.msra.mxu0 %v3533
        %3754 = vmatprep.subr.bf16.mxu0 0
        %3755 = vmatpush1.bf16.msra.mxu0 %v3534
        %3756 = vmatprep.subr.bf16.mxu0 0
        %3757 = vmatpush1.bf16.msra.mxu0 %v3535
        %3758 = vmatprep.subr.bf16.mxu0 0
        %3759 = vmatpush1.bf16.msra.mxu0 %v3536
        %3760 = vmatprep.subr.bf16.mxu0 0
        %3761 = vmatpush1.bf16.msra.mxu0 %v3537
        %3762 = vmatprep.subr.bf16.mxu0 0
        %3763 = vmatpush1.bf16.msra.mxu0 %v3538
        %3764 = vmatprep.mubr.bf16.mxu0 %v3247
        %3765 = vmatmul.mubr.bf16.gmra.mrb[0].mxu0 %v3246
        %v3766 = vpop.f32.mrb[0].mxu0
        %v3767 = vadd.f32 %v3606, %v3766
        %v3768 = vpop.f32.mrb[0].mxu0
        %v3769 = vpop.f32.mrb[0].mxu0
        %v3770 = vadd.f32 %v3609, %v3769
        %v3771 = vpop.f32.mrb[0].mxu0
        %3772 = vmatprep.mubr.bf16.mxu0 %v3251
        %3773 = vmatmul.mubr.bf16.gmra.mrb[0].mxu0 %v3250
        %v3774 = vpop.f32.mrb[0].mxu0
        %v3775 = vadd.f32 %v3614, %v3774
        %v3776 = vpop.f32.mrb[0].mxu0
        %v3777 = vpop.f32.mrb[0].mxu0
        %v3778 = vadd.f32 %v3617, %v3777
        %v3779 = vpop.f32.mrb[0].mxu0
        %3780 = vmatprep.mubr.bf16.mxu0 %v3255
        %3781 = vmatmul.mubr.bf16.gmra.mrb[0].mxu0 %v3254
        %v3782 = vpop.f32.mrb[0].mxu0
        %v3783 = vadd.f32 %v3622, %v3782
        %v3784 = vpop.f32.mrb[0].mxu0
        %v3785 = vpop.f32.mrb[0].mxu0
        %v3786 = vadd.f32 %v3625, %v3785
        %v3787 = vpop.f32.mrb[0].mxu0
        %3788 = vmatprep.mubr.bf16.mxu0 %v3259
        %3789 = vmatmul.mubr.bf16.gmra.mrb[0].mxu0 %v3258
        %v3790 = vpop.f32.mrb[0].mxu0
        %v3791 = vadd.f32 %v3630, %v3790
        %v3792 = vpop.f32.mrb[0].mxu0
        %v3793 = vpop.f32.mrb[0].mxu0
        %v3794 = vadd.f32 %v3633, %v3793
        %v3795 = vpop.f32.mrb[0].mxu0
        %3796 = vmatprep.mubr.bf16.mxu0 %v3263
        %3797 = vmatmul.mubr.bf16.gmra.mrb[0].mxu0 %v3262
        %v3798 = vpop.f32.mrb[0].mxu0
        %v3799 = vadd.f32 %v3638, %v3798
        %v3800 = vpop.f32.mrb[0].mxu0
        %v3801 = vpop.f32.mrb[0].mxu0
        %v3802 = vadd.f32 %v3641, %v3801
        %v3803 = vpop.f32.mrb[0].mxu0
        %3804 = vmatprep.mubr.bf16.mxu0 %v3267
        %3805 = vmatmul.mubr.bf16.gmra.mrb[0].mxu0 %v3266
        %v3806 = vpop.f32.mrb[0].mxu0
        %v3807 = vadd.f32 %v3646, %v3806
        %v3808 = vpop.f32.mrb[0].mxu0
        %v3809 = vpop.f32.mrb[0].mxu0
        %v3810 = vadd.f32 %v3649, %v3809
        %v3811 = vpop.f32.mrb[0].mxu0
        %3812 = vmatprep.mubr.bf16.mxu0 %v3271
        %3813 = vmatmul.mubr.bf16.gmra.mrb[0].mxu0 %v3270
        %v3814 = vpop.f32.mrb[0].mxu0
        %v3815 = vadd.f32 %v3654, %v3814
        %v3816 = vpop.f32.mrb[0].mxu0
        %v3817 = vpop.f32.mrb[0].mxu0
        %v3818 = vadd.f32 %v3657, %v3817
        %v3819 = vpop.f32.mrb[0].mxu0
        %3820 = vmatprep.mubr.bf16.mxu0 %v3275
        %3821 = vmatmul.mubr.bf16.gmra.mrb[0].mxu0 %v3274
        %v3822 = vpop.f32.mrb[0].mxu0
        %v3823 = vadd.f32 %v3662, %v3822
        %v3824 = vpop.f32.mrb[0].mxu0
        %v3825 = vpop.f32.mrb[0].mxu0
        %v3826 = vadd.f32 %v3665, %v3825
        %v3827 = vpop.f32.mrb[0].mxu0
        %3828 = vmatprep.mubr.bf16.mxu0 %v3279
        %3829 = vmatmul.mubr.bf16.gmra.mrb[0].mxu0 %v3278
        %v3830 = vpop.f32.mrb[0].mxu0
        %v3831 = vadd.f32 %v3670, %v3830
        %v3832 = vpop.f32.mrb[0].mxu0
        %v3833 = vpop.f32.mrb[0].mxu0
        %v3834 = vadd.f32 %v3673, %v3833
        %v3835 = vpop.f32.mrb[0].mxu0
        %3836 = vmatprep.mubr.bf16.mxu0 %v3283
        %3837 = vmatmul.mubr.bf16.gmra.mrb[0].mxu0 %v3282
        %v3838 = vpop.f32.mrb[0].mxu0
        %v3839 = vadd.f32 %v3678, %v3838
        %v3840 = vpop.f32.mrb[0].mxu0
        %v3841 = vpop.f32.mrb[0].mxu0
        %v3842 = vadd.f32 %v3681, %v3841
        %v3843 = vpop.f32.mrb[0].mxu0
        %3844 = vmatprep.mubr.bf16.mxu0 %v3287
        %3845 = vmatmul.mubr.bf16.gmra.mrb[0].mxu0 %v3286
        %v3846 = vpop.f32.mrb[0].mxu0
        %v3847 = vadd.f32 %v3686, %v3846
        %v3848 = vpop.f32.mrb[0].mxu0
        %v3849 = vpop.f32.mrb[0].mxu0
        %v3850 = vadd.f32 %v3689, %v3849
        %v3851 = vpop.f32.mrb[0].mxu0
        %3852 = vmatprep.mubr.bf16.mxu0 %v3291
        %3853 = vmatmul.mubr.bf16.gmra.mrb[0].mxu0 %v3290
        %v3854 = vpop.f32.mrb[0].mxu0
        %v3855 = vadd.f32 %v3694, %v3854
        %v3856 = vpop.f32.mrb[0].mxu0
        %v3857 = vpop.f32.mrb[0].mxu0
        %v3858 = vadd.f32 %v3697, %v3857
        %v3859 = vpop.f32.mrb[0].mxu0
        %3860 = vmatprep.mubr.bf16.mxu0 %v3295
        %3861 = vmatmul.mubr.bf16.gmra.mrb[0].mxu0 %v3294
        %v3862 = vpop.f32.mrb[0].mxu0
        %v3863 = vadd.f32 %v3702, %v3862
        %v3864 = vpop.f32.mrb[0].mxu0
        %v3865 = vpop.f32.mrb[0].mxu0
        %v3866 = vadd.f32 %v3705, %v3865
        %v3867 = vpop.f32.mrb[0].mxu0
        %3868 = vmatprep.mubr.bf16.mxu0 %v3299
        %3869 = vmatmul.mubr.bf16.gmra.mrb[0].mxu0 %v3298
        %v3870 = vpop.f32.mrb[0].mxu0
        %v3871 = vadd.f32 %v3710, %v3870
        %v3872 = vpop.f32.mrb[0].mxu0
        %v3873 = vpop.f32.mrb[0].mxu0
        %v3874 = vadd.f32 %v3713, %v3873
        %v3875 = vpop.f32.mrb[0].mxu0
        %3876 = vmatprep.mubr.bf16.mxu0 %v3303
        %3877 = vmatmul.mubr.bf16.gmra.mrb[0].mxu0 %v3302
        %v3878 = vpop.f32.mrb[0].mxu0
        %v3879 = vadd.f32 %v3718, %v3878
        %v3880 = vpop.f32.mrb[0].mxu0
        %v3881 = vpop.f32.mrb[0].mxu0
        %v3882 = vadd.f32 %v3721, %v3881
        %v3883 = vpop.f32.mrb[0].mxu0
        %3884 = vmatprep.mubr.bf16.mxu0 %v3307
        %3885 = vmatmul.mubr.bf16.gmra.mrb[0].mxu0 %v3306
        %v3886 = vpop.f32.mrb[0].mxu0
        %v3887 = vadd.f32 %v3726, %v3886
        %v3888 = vpop.f32.mrb[0].mxu0
        %v3889 = vpop.f32.mrb[0].mxu0
        %v3890 = vadd.f32 %v3729, %v3889
        %v3891 = vpop.f32.mrb[0].mxu0
        %3892 = vdwg.mxu0
        %3893 = vst [vmem:[%s364] sm:$0xff] %v3767
        %3894 = vst [vmem:[%s364 + $0x8] sm:$0xff] %v3770
        %3895 = vst [vmem:[%s364 + $0x10] sm:$0xff] %v3775
        %3896 = vst [vmem:[%s364 + $0x18] sm:$0xff] %v3778
        %3897 = vst [vmem:[%s364 + $0x20] sm:$0xff] %v3783
        %3898 = vst [vmem:[%s364 + $0x28] sm:$0xff] %v3786
        %3899 = vst [vmem:[%s364 + $0x30] sm:$0xff] %v3791
        %3900 = vst [vmem:[%s364 + $0x38] sm:$0xff] %v3794
        %3901 = vst [vmem:[%s364 + $0x40] sm:$0xff] %v3799
        %3902 = vst [vmem:[%s364 + $0x48] sm:$0xff] %v3802
        %3903 = vst [vmem:[%s364 + $0x50] sm:$0xff] %v3807
        %3904 = vst [vmem:[%s364 + $0x58] sm:$0xff] %v3810
        %3905 = vst [vmem:[%s364 + $0x60] sm:$0xff] %v3815
        %3906 = vst [vmem:[%s364 + $0x68] sm:$0xff] %v3818
        %3907 = vst [vmem:[%s364 + $0x70] sm:$0xff] %v3823
        %3908 = vst [vmem:[%s364 + $0x78] sm:$0xff] %v3826
        %3909 = vst [vmem:[%s364 + $0x80] sm:$0xff] %v3831
        %3910 = vst [vmem:[%s364 + $0x88] sm:$0xff] %v3834
        %3911 = vst [vmem:[%s364 + $0x90] sm:$0xff] %v3839
        %3912 = vst [vmem:[%s364 + $0x98] sm:$0xff] %v3842
        %3913 = vst [vmem:[%s364 + $0xa0] sm:$0xff] %v3847
        %3914 = vst [vmem:[%s364 + $0xa8] sm:$0xff] %v3850
        %3915 = vst [vmem:[%s364 + $0xb0] sm:$0xff] %v3855
        %3916 = vst [vmem:[%s364 + $0xb8] sm:$0xff] %v3858
        %3917 = vst [vmem:[%s364 + $0xc0] sm:$0xff] %v3863
        %3918 = vst [vmem:[%s364 + $0xc8] sm:$0xff] %v3866
        %3919 = vst [vmem:[%s364 + $0xd0] sm:$0xff] %v3871
        %3920 = vst [vmem:[%s364 + $0xd8] sm:$0xff] %v3874
        %3921 = vst [vmem:[%s364 + $0xe0] sm:$0xff] %v3879
        %3922 = vst [vmem:[%s364 + $0xe8] sm:$0xff] %v3882
        %3923 = vst [vmem:[%s364 + $0xf0] sm:$0xff] %v3887
        %3924 = vst [vmem:[%s364 + $0xf8] sm:$0xff] %v3890
        %s3925 = smul.u32 32, %s22
        %p3926 = scmp.lt.s32.totalorder %s3925, 63
        %s3927 = scalar_select %p3926, %s3925, 63
        %s3928 = smul.addr %s3927, 8
        %s3929 = scalar_lea.vmem %s7, %s3928
        // Predicated region
        $region80: #{fully_connected7_forward.1} parent=47 // pred_check
          %p3930 = pneg %p192
        $region81: #{fully_connected7_forward.1} parent=47 // pred_check_branch
          %3932 = sbr.rel (%p3930) target = $region83
        $region82: #{fully_connected7_forward.1} parent=47 // pred_region
          %s3933 = smul.u32 32, %s22
        $region83: #{fully_connected7_forward.1} parent=47 // pred_fallthru
          _
      $region48: #{fully_connected7_forward.1} parent=5 // pred_fallthru
        _
      %p3934 = scmp.le.s32.totalorder 2, %s17
      // Predicated region
      $region84: #{fully_connected7_forward.1} parent=5 // pred_check
        %p3935 = pneg %p3934
      $region85: #{fully_connected7_forward.1} parent=5 // pred_check_branch
        %3937 = sbr.rel (%p3935) target = $region87
      $region86: #{fully_connected7_forward.1} parent=5 // pred_region
        %s3938 = ssub.s32 %s17, 2
        // Predicated region
        $region88: #{fully_connected7_forward.1} parent=86 // pred_check
          %p3939 = pneg %p198
        $region89: #{fully_connected7_forward.1} parent=86 // pred_check_branch
          %3941 = sbr.rel (%p3939) target = $region91
        $region90: #{fully_connected7_forward.1} parent=86 // pred_region
          %s3942 = smul.u32 32, %s23
          %p3943 = scmp.lt.s32.totalorder %s3942, 63
          %s3944 = scalar_select %p3943, %s3942, 63
          %s3945 = smul.addr %s3944, 8
          %s3946 = scalar_lea.vmem %s7, %s3945
        $region91: #{fully_connected7_forward.1} parent=86 // pred_fallthru
          _
      $region87: #{fully_connected7_forward.1} parent=5 // pred_fallthru
        _
    $region6: #{fully_connected7_forward.1} parent=1 // loop_footer
      %s21 = sadd.s32 1, %s17
    $region7: #{fully_connected7_forward.1} parent=1 // loop_footer_branch
      %16 = sbr.rel target = $region3
    $region8: #{fully_connected7_forward.1} parent=1 // loop_exit
      _
    %3947 = vsyncpa [#allocation4], 1
    %s3948 = scalar_lea.sflag [#allocation4], 1
    %3949 = vsyncpa %s3948, 1
    %3950 = vsyncpa [#allocation6], 1
    %3951 = vsyncpa [#allocation9], 1
    %3952 = vsyncpa [#allocation12], 1

</llo_original>
